<compile_context>
chip_gen: v7x
topology: tpu7x:2x2x1
jax: 0.10.0
libtpu: 0.0.40
codegen_flags: <defaults>
</compile_context>

<pallas_src>
import jax
import jax.numpy as jnp
from jax.experimental import pallas as pl
from jax.experimental.pallas import tpu as pltpu

NUM_CHARS = 93
VPAD = 128          # vocab padded to a full lane width
EMB = 128
HID = 100
HPAD = 128          # hidden padded to a full lane width (4*HPAD = 512)
LABELS = 2


# --------------------------------------------------------------------------
# Kernel 1: fused front end, grid over batch ("parallel").
#   embedding -> conv1+pool+BN -> conv2+pool+BN -> x @ Wih + b  (gate pre-acts)
#   activations are (L, E) with E=128 on lanes.
# --------------------------------------------------------------------------
def frontend_kernel(idx_ref, tab_ref,
                    w1_ref, b1_ref, sc1_ref, sh1_ref,
                    w2_ref, b2_ref, sc2_ref, sh2_ref,
                    wih_ref, bih_ref, out_ref):
    L = idx_ref.shape[1]
    Vp, E = tab_ref.shape

    # ---- embedding as one-hot @ table (MXU gather), vocab padded to 128 lanes
    ids = idx_ref[0]                                            # (L, 1) int32
    iota = jax.lax.broadcasted_iota(jnp.int32, (L, Vp), 1)
    onehot = (iota == ids).astype(jnp.bfloat16)                 # (L, Vp)
    x = jnp.dot(onehot, tab_ref[...],
                preferred_element_type=jnp.float32)             # (L, E) f32

    # ---- Conv1d(k=3, pad=1) + MaxPool1d(3) + BatchNorm1d(eval), lane-dense
    def conv_pool_bn(x, w_ref, b_ref, sc_ref, sh_ref):
        Lc, E = x.shape
        xb = x.astype(jnp.bfloat16)
        zero = jnp.zeros((1, E), jnp.bfloat16)
        xpad = jnp.concatenate([zero, xb, zero], axis=0)        # same-pad, in-kernel
        y = b_ref[...]                                          # (1, E) -> broadcast
        for k in range(3):                                      # conv = 3 shifted matmuls
            y = y + jnp.dot(xpad[k:k + Lc], w_ref[k],
                            preferred_element_type=jnp.float32)  # (Lc, E)
        Lp = Lc // 3
        # MaxPool1d(3): window over sublanes, every piece is full 128-lane wide.
        rows = [jnp.max(y[3 * j:3 * j + 3], axis=0, keepdims=True) for j in range(Lp)]
        pooled = jnp.concatenate(rows, axis=0)                  # (Lp, E)
        return pooled * sc_ref[...] + sh_ref[...]               # BN(eval); Dropout = id

    x = conv_pool_bn(x, w1_ref, b1_ref, sc1_ref, sh1_ref)       # (L//3, E)
    x = conv_pool_bn(x, w2_ref, b2_ref, sc2_ref, sh2_ref)       # (L//9, E) == (T, E)

    # ---- hoisted LSTM input projection (removes x@Wih from the serial recurrence)
    g = jnp.dot(x.astype(jnp.bfloat16), wih_ref[...],
                preferred_element_type=jnp.float32) + bih_ref[...]   # (T, 4*HPAD)
    out_ref[0] = g


def frontend(x_idx3, p, B, L, T):
    return pl.pallas_call(
        frontend_kernel,
        out_shape=jax.ShapeDtypeStruct((B, T, 4 * HPAD), jnp.float32),
        grid=(B,),
        in_specs=[
            pl.BlockSpec((1, L, 1), lambda b: (b, 0, 0)),
            pl.BlockSpec((VPAD, EMB), lambda b: (0, 0)),
            pl.BlockSpec((3, EMB, EMB), lambda b: (0, 0, 0)),
            pl.BlockSpec((1, EMB), lambda b: (0, 0)),
            pl.BlockSpec((1, EMB), lambda b: (0, 0)),
            pl.BlockSpec((1, EMB), lambda b: (0, 0)),
            pl.BlockSpec((3, EMB, EMB), lambda b: (0, 0, 0)),
            pl.BlockSpec((1, EMB), lambda b: (0, 0)),
            pl.BlockSpec((1, EMB), lambda b: (0, 0)),
            pl.BlockSpec((1, EMB), lambda b: (0, 0)),
            pl.BlockSpec((EMB, 4 * HPAD), lambda b: (0, 0)),
            pl.BlockSpec((1, 4 * HPAD), lambda b: (0, 0)),
        ],
        out_specs=pl.BlockSpec((1, T, 4 * HPAD), lambda b: (b, 0, 0)),
        compiler_params=pltpu.CompilerParams(dimension_semantics=("parallel",)),
    )(x_idx3, p["emb"], p["w1"], p["b1"], p["sc1"], p["sh1"],
      p["w2"], p["b2"], p["sc2"], p["sh2"], p["wih"], p["bg"])


# --------------------------------------------------------------------------
# Kernel 2: LSTM recurrence (h@Whh only, T unrolled in-kernel) + dot-product
# attention with the final hidden state + label head.  Single grid step; the
# whole batch and all weights live in VMEM once; output written in one shot.
# --------------------------------------------------------------------------
def lstm_attn_kernel(g_ref, whh_ref, wl_ref, bl_ref, out_ref):
    T, B, G4 = g_ref.shape
    Hp = G4 // 4
    whh = whh_ref[...]                                          # (Hp, 4Hp) bf16

    h = jnp.zeros((B, Hp), jnp.float32)
    c = jnp.zeros((B, Hp), jnp.float32)
    hs = []
    for t in range(T):                                          # unrolled: T is tiny
        g = g_ref[t] + jnp.dot(h.astype(jnp.bfloat16), whh,
                               preferred_element_type=jnp.float32)   # (B, 4Hp)
        i_g = jax.nn.sigmoid(g[:, 0 * Hp:1 * Hp])               # 128-aligned gate slices
        f_g = jax.nn.sigmoid(g[:, 1 * Hp:2 * Hp])
        g_g = jnp.tanh(g[:, 2 * Hp:3 * Hp])
        o_g = jax.nn.sigmoid(g[:, 3 * Hp:4 * Hp])
        c = f_g * c + i_g * g_g
        h = o_g * jnp.tanh(c)
        hs.append(h)
    # h is now the final hidden state (padded lanes are exactly zero).

    # attention_net: scores[b,t] = <output[t,b,:], h_final[b,:]>, softmax over T,
    # new_hidden[b,:] = sum_t p[b,t] * output[t,b,:]
    scores = jnp.concatenate(
        [jnp.sum(ht * h, axis=1, keepdims=True) for ht in hs], axis=1)   # (B, T)
    m = jnp.max(scores, axis=1, keepdims=True)
    e = jnp.exp(scores - m)
    p = e / jnp.sum(e, axis=1, keepdims=True)                   # (B, T)
    attn = jnp.zeros((B, Hp), jnp.float32)
    for t in range(T):
        attn = attn + p[:, t:t + 1] * hs[t]                     # (B, Hp)

    logits = jnp.dot(attn.astype(jnp.bfloat16), wl_ref[...],
                     preferred_element_type=jnp.float32) + bl_ref[...]   # (B, labels)
    out_ref[...] = logits


def lstm_attn_label(gates_tb, p, B, T):
    return pl.pallas_call(
        lstm_attn_kernel,
        out_shape=jax.ShapeDtypeStruct((B, LABELS), jnp.float32),
        grid=(1,),
        in_specs=[
            pl.BlockSpec((T, B, 4 * HPAD), lambda i: (0, 0, 0)),
            pl.BlockSpec((HPAD, 4 * HPAD), lambda i: (0, 0)),
            pl.BlockSpec((HPAD, LABELS), lambda i: (0, 0)),
            pl.BlockSpec((1, LABELS), lambda i: (0, 0)),
        ],
        out_specs=pl.BlockSpec((B, LABELS), lambda i: (0, 0)),
        compiler_params=pltpu.CompilerParams(dimension_semantics=("arbitrary",)),
    )(gates_tb, p["whh"], p["wl"], p["bl"])


# --------------------------------------------------------------------------
# Parameter init (deterministic, synthetic, PyTorch shapes -> TPU layouts)
# --------------------------------------------------------------------------
def init_params(key):
    ks = jax.random.split(key, 24)
    nrm = lambda k, shape, s: jax.random.normal(k, shape, jnp.float32) * s
    p = {}

    emb = nrm(ks[0], (NUM_CHARS, EMB), 0.5)
    p["emb"] = jnp.zeros((VPAD, EMB), jnp.float32).at[:NUM_CHARS].set(emb) \
                  .astype(jnp.bfloat16)

    def conv_block(k6):
        kw, kb, kg, kbe, krm, krv = k6
        w = nrm(kw, (EMB, EMB, 3), 0.05)                        # torch (Cout, Cin, K)
        bias = nrm(kb, (EMB,), 0.05)
        gamma = 1.0 + nrm(kg, (EMB,), 0.1)
        beta = nrm(kbe, (EMB,), 0.1)
        rmean = nrm(krm, (EMB,), 0.1)
        rvar = 1.0 + jnp.abs(nrm(krv, (EMB,), 0.1))
        scale = gamma / jnp.sqrt(rvar + 1e-5)
        shift = beta - rmean * scale
        w_kio = jnp.transpose(w, (2, 1, 0)).astype(jnp.bfloat16)   # (K, Cin, Cout)
        return (w_kio, bias.reshape(1, EMB),
                scale.reshape(1, EMB), shift.reshape(1, EMB))

    p["w1"], p["b1"], p["sc1"], p["sh1"] = conv_block(ks[1:7])
    p["w2"], p["b2"], p["sc2"], p["sh2"] = conv_block(ks[7:13])

    # LSTM (PyTorch gate order i, f, g, o), hidden padded 100 -> 128 per gate block
    wih = nrm(ks[13], (4 * HID, EMB), 0.08)
    whh = nrm(ks[14], (4 * HID, HID), 0.08)
    bih = nrm(ks[15], (4 * HID,), 0.05)
    bhh = nrm(ks[16], (4 * HID,), 0.05)
    wih_p = jnp.zeros((EMB, 4 * HPAD), jnp.float32)
    whh_p = jnp.zeros((HPAD, 4 * HPAD), jnp.float32)
    bg_p = jnp.zeros((1, 4 * HPAD), jnp.float32)
    for g in range(4):
        wih_p = wih_p.at[:, g * HPAD:g * HPAD + HID].set(wih[g * HID:(g + 1) * HID, :].T)
        whh_p = whh_p.at[:HID, g * HPAD:g * HPAD + HID].set(whh[g * HID:(g + 1) * HID, :].T)
        bg_p = bg_p.at[0, g * HPAD:g * HPAD + HID].set(
            bih[g * HID:(g + 1) * HID] + bhh[g * HID:(g + 1) * HID])
    p["wih"] = wih_p.astype(jnp.bfloat16)
    p["whh"] = whh_p.astype(jnp.bfloat16)
    p["bg"] = bg_p

    wl = nrm(ks[17], (LABELS, HID), 0.1)
    bl = nrm(ks[18], (LABELS,), 0.05)
    p["wl"] = jnp.zeros((HPAD, LABELS), jnp.float32).at[:HID].set(wl.T) \
                 .astype(jnp.bfloat16)
    p["bl"] = bl.reshape(1, LABELS)
    return p


# --------------------------------------------------------------------------
# Forward glue: exactly two pallas_calls
# --------------------------------------------------------------------------
def forward(x_idx, p):
    B, L = x_idx.shape
    assert L % 9 == 0, "two MaxPool1d(3) stages need L divisible by 9"
    T = L // 9
    gates = frontend(x_idx.reshape(B, L, 1).astype(jnp.int32), p, B, L, T)  # (B,T,4Hp)
    # tiny (16 KB) layout change so the recurrent kernel indexes time on the
    # leading axis; keeps every in-kernel access a plain leading-axis ref read.
    gates_tb = jnp.transpose(gates, (1, 0, 2))                              # (T,B,4Hp)
    return lstm_attn_label(gates_tb, p, B, T)                               # (B,labels)


if __name__ == "__main__":
    key = jax.random.PRNGKey(0)
    k_param, k_x = jax.random.split(key)
    params = init_params(k_param)

    B, L = 2, 36                         # L: 36 -> 12 -> 4 after the two conv/pool blocks
    x_idx = jax.random.randint(k_x, (B, L), 0, NUM_CHARS, dtype=jnp.int32)

    fwd = jax.jit(forward)
    logits = fwd(x_idx, params)
    logits = jax.block_until_ready(logits)
    assert logits.shape == (B, LABELS), logits.shape
    assert bool(jnp.all(jnp.isfinite(logits)))
    print("KERNEL_OK")
</pallas_src>

<mosaic_0001>
module attributes {stable_mosaic.version = 11 : i64} {
  func.func @frontend_kernel(%arg0: i32, %arg1: memref<1x36x1xi32, #tpu.memory_space<vmem>>, %arg2: memref<128x128xbf16, #tpu.memory_space<vmem>>, %arg3: memref<3x128x128xbf16, #tpu.memory_space<vmem>>, %arg4: memref<1x128xf32, #tpu.memory_space<vmem>>, %arg5: memref<1x128xf32, #tpu.memory_space<vmem>>, %arg6: memref<1x128xf32, #tpu.memory_space<vmem>>, %arg7: memref<3x128x128xbf16, #tpu.memory_space<vmem>>, %arg8: memref<1x128xf32, #tpu.memory_space<vmem>>, %arg9: memref<1x128xf32, #tpu.memory_space<vmem>>, %arg10: memref<1x128xf32, #tpu.memory_space<vmem>>, %arg11: memref<128x512xbf16, #tpu.memory_space<vmem>>, %arg12: memref<1x512xf32, #tpu.memory_space<vmem>>, %arg13: memref<1x4x512xf32, #tpu.memory_space<vmem>>) attributes {dimension_semantics = [#tpu.dimension_semantics<parallel>], iteration_bounds = array<i64: 2>, scalar_prefetch = 0 : i64, scratch_operands = 0 : i64, tpu.core_type = #tpu.core_type<tc>, window_params = [{transform_indices = @transform_0, window_bounds = array<i64: 1, 36, 1>}, {pipeline_mode = #tpu.pipeline_mode<synchronous>, transform_indices = @transform_1, window_bounds = array<i64: 128, 128>}, {pipeline_mode = #tpu.pipeline_mode<synchronous>, transform_indices = @transform_2, window_bounds = array<i64: 3, 128, 128>}, {pipeline_mode = #tpu.pipeline_mode<synchronous>, transform_indices = @transform_3, window_bounds = array<i64: 1, 128>}, {pipeline_mode = #tpu.pipeline_mode<synchronous>, transform_indices = @transform_4, window_bounds = array<i64: 1, 128>}, {pipeline_mode = #tpu.pipeline_mode<synchronous>, transform_indices = @transform_5, window_bounds = array<i64: 1, 128>}, {pipeline_mode = #tpu.pipeline_mode<synchronous>, transform_indices = @transform_6, window_bounds = array<i64: 3, 128, 128>}, {pipeline_mode = #tpu.pipeline_mode<synchronous>, transform_indices = @transform_7, window_bounds = array<i64: 1, 128>}, {pipeline_mode = #tpu.pipeline_mode<synchronous>, transform_indices = @transform_8, window_bounds = array<i64: 1, 128>}, {pipeline_mode = #tpu.pipeline_mode<synchronous>, transform_indices = @transform_9, window_bounds = array<i64: 1, 128>}, {pipeline_mode = #tpu.pipeline_mode<synchronous>, transform_indices = @transform_10, window_bounds = array<i64: 128, 512>}, {pipeline_mode = #tpu.pipeline_mode<synchronous>, transform_indices = @transform_11, window_bounds = array<i64: 1, 512>}, {transform_indices = @transform_12, window_bounds = array<i64: 1, 4, 512>}]} {
    %c0 = arith.constant 0 : index
    %c0_0 = arith.constant 0 : index
    %c0_1 = arith.constant 0 : index
    %0 = vector.load %arg1[%c0, %c0_0, %c0_1] : memref<1x36x1xi32, #tpu.memory_space<vmem>>, vector<1x36x1xi32>
    %1 = vector.shape_cast %0 : vector<1x36x1xi32> to vector<36x1xi32>
    %2 = tpu.iota {dimensions = array<i32: 1>} : vector<36x128xi32>
    %3 = vector.broadcast %1 : vector<36x1xi32> to vector<36x128xi32>
    %4 = arith.cmpi eq, %2, %3 : vector<36x128xi32>
    %5 = arith.extui %4 : vector<36x128xi1> to vector<36x128xi32>
    %6 = arith.sitofp %5 : vector<36x128xi32> to vector<36x128xf32>
    %7 = arith.truncf %6 : vector<36x128xf32> to vector<36x128xbf16>
    %c0_2 = arith.constant 0 : index
    %c0_3 = arith.constant 0 : index
    %8 = vector.load %arg2[%c0_2, %c0_3] : memref<128x128xbf16, #tpu.memory_space<vmem>>, vector<128x128xbf16>
    %cst = arith.constant dense<0.000000e+00> : vector<36x128xf32>
    %9 = tpu.matmul %7, %8, %cst {dimension_numbers = #tpu.dot_dimension_numbers<[1], [0], [0], [1], [0, 0, 1, 1], [], []>} : vector<36x128xbf16>, vector<128x128xbf16>, vector<36x128xf32> -> vector<36x128xf32>
    %10 = arith.truncf %9 : vector<36x128xf32> to vector<36x128xbf16>
    %cst_4 = arith.constant 0.000000e+00 : bf16
    %11 = vector.broadcast %cst_4 : bf16 to vector<1x128xbf16>
    %12 = tpu.concatenate %11, %10, %11 in 0 : vector<1x128xbf16>, vector<36x128xbf16>, vector<1x128xbf16> -> vector<38x128xbf16>
    %c0_5 = arith.constant 0 : index
    %c0_6 = arith.constant 0 : index
    %13 = vector.load %arg4[%c0_5, %c0_6] : memref<1x128xf32, #tpu.memory_space<vmem>>, vector<1x128xf32>
    %14 = vector.extract_strided_slice %12 {offsets = [0, 0], sizes = [36, 128], strides = [1, 1]} : vector<38x128xbf16> to vector<36x128xbf16>
    %c0_7 = arith.constant 0 : index
    %c0_8 = arith.constant 0 : index
    %c0_9 = arith.constant 0 : index
    %15 = vector.load %arg3[%c0_7, %c0_8, %c0_9] : memref<3x128x128xbf16, #tpu.memory_space<vmem>>, vector<1x128x128xbf16>
    %16 = vector.shape_cast %15 : vector<1x128x128xbf16> to vector<128x128xbf16>
    %cst_10 = arith.constant dense<0.000000e+00> : vector<36x128xf32>
    %17 = tpu.matmul %14, %16, %cst_10 {dimension_numbers = #tpu.dot_dimension_numbers<[1], [0], [0], [1], [0, 0, 1, 1], [], []>} : vector<36x128xbf16>, vector<128x128xbf16>, vector<36x128xf32> -> vector<36x128xf32>
    %18 = vector.broadcast %13 : vector<1x128xf32> to vector<36x128xf32>
    %19 = arith.addf %18, %17 : vector<36x128xf32>
    %20 = vector.extract_strided_slice %12 {offsets = [1, 0], sizes = [36, 128], strides = [1, 1]} : vector<38x128xbf16> to vector<36x128xbf16>
    %c1 = arith.constant 1 : index
    %c0_11 = arith.constant 0 : index
    %c0_12 = arith.constant 0 : index
    %21 = vector.load %arg3[%c1, %c0_11, %c0_12] : memref<3x128x128xbf16, #tpu.memory_space<vmem>>, vector<1x128x128xbf16>
    %22 = vector.shape_cast %21 : vector<1x128x128xbf16> to vector<128x128xbf16>
    %cst_13 = arith.constant dense<0.000000e+00> : vector<36x128xf32>
    %23 = tpu.matmul %20, %22, %cst_13 {dimension_numbers = #tpu.dot_dimension_numbers<[1], [0], [0], [1], [0, 0, 1, 1], [], []>} : vector<36x128xbf16>, vector<128x128xbf16>, vector<36x128xf32> -> vector<36x128xf32>
    %24 = arith.addf %19, %23 : vector<36x128xf32>
    %25 = vector.extract_strided_slice %12 {offsets = [2, 0], sizes = [36, 128], strides = [1, 1]} : vector<38x128xbf16> to vector<36x128xbf16>
    %c2 = arith.constant 2 : index
    %c0_14 = arith.constant 0 : index
    %c0_15 = arith.constant 0 : index
    %26 = vector.load %arg3[%c2, %c0_14, %c0_15] : memref<3x128x128xbf16, #tpu.memory_space<vmem>>, vector<1x128x128xbf16>
    %27 = vector.shape_cast %26 : vector<1x128x128xbf16> to vector<128x128xbf16>
    %cst_16 = arith.constant dense<0.000000e+00> : vector<36x128xf32>
    %28 = tpu.matmul %25, %27, %cst_16 {dimension_numbers = #tpu.dot_dimension_numbers<[1], [0], [0], [1], [0, 0, 1, 1], [], []>} : vector<36x128xbf16>, vector<128x128xbf16>, vector<36x128xf32> -> vector<36x128xf32>
    %29 = arith.addf %24, %28 : vector<36x128xf32>
    %30 = vector.extract_strided_slice %29 {offsets = [0, 0], sizes = [3, 128], strides = [1, 1]} : vector<36x128xf32> to vector<3x128xf32>
    %cst_17 = arith.constant dense<0xFF800000> : vector<128xf32>
    %31 = vector.multi_reduction <maximumf>, %30, %cst_17 [0] : vector<3x128xf32> to vector<128xf32>
    %32 = vector.shape_cast %31 : vector<128xf32> to vector<1x128xf32>
    %33 = vector.extract_strided_slice %29 {offsets = [3, 0], sizes = [3, 128], strides = [1, 1]} : vector<36x128xf32> to vector<3x128xf32>
    %cst_18 = arith.constant dense<0xFF800000> : vector<128xf32>
    %34 = vector.multi_reduction <maximumf>, %33, %cst_18 [0] : vector<3x128xf32> to vector<128xf32>
    %35 = vector.shape_cast %34 : vector<128xf32> to vector<1x128xf32>
    %36 = vector.extract_strided_slice %29 {offsets = [6, 0], sizes = [3, 128], strides = [1, 1]} : vector<36x128xf32> to vector<3x128xf32>
    %cst_19 = arith.constant dense<0xFF800000> : vector<128xf32>
    %37 = vector.multi_reduction <maximumf>, %36, %cst_19 [0] : vector<3x128xf32> to vector<128xf32>
    %38 = vector.shape_cast %37 : vector<128xf32> to vector<1x128xf32>
    %39 = vector.extract_strided_slice %29 {offsets = [9, 0], sizes = [3, 128], strides = [1, 1]} : vector<36x128xf32> to vector<3x128xf32>
    %cst_20 = arith.constant dense<0xFF800000> : vector<128xf32>
    %40 = vector.multi_reduction <maximumf>, %39, %cst_20 [0] : vector<3x128xf32> to vector<128xf32>
    %41 = vector.shape_cast %40 : vector<128xf32> to vector<1x128xf32>
    %42 = vector.extract_strided_slice %29 {offsets = [12, 0], sizes = [3, 128], strides = [1, 1]} : vector<36x128xf32> to vector<3x128xf32>
    %cst_21 = arith.constant dense<0xFF800000> : vector<128xf32>
    %43 = vector.multi_reduction <maximumf>, %42, %cst_21 [0] : vector<3x128xf32> to vector<128xf32>
    %44 = vector.shape_cast %43 : vector<128xf32> to vector<1x128xf32>
    %45 = vector.extract_strided_slice %29 {offsets = [15, 0], sizes = [3, 128], strides = [1, 1]} : vector<36x128xf32> to vector<3x128xf32>
    %cst_22 = arith.constant dense<0xFF800000> : vector<128xf32>
    %46 = vector.multi_reduction <maximumf>, %45, %cst_22 [0] : vector<3x128xf32> to vector<128xf32>
    %47 = vector.shape_cast %46 : vector<128xf32> to vector<1x128xf32>
    %48 = vector.extract_strided_slice %29 {offsets = [18, 0], sizes = [3, 128], strides = [1, 1]} : vector<36x128xf32> to vector<3x128xf32>
    %cst_23 = arith.constant dense<0xFF800000> : vector<128xf32>
    %49 = vector.multi_reduction <maximumf>, %48, %cst_23 [0] : vector<3x128xf32> to vector<128xf32>
    %50 = vector.shape_cast %49 : vector<128xf32> to vector<1x128xf32>
    %51 = vector.extract_strided_slice %29 {offsets = [21, 0], sizes = [3, 128], strides = [1, 1]} : vector<36x128xf32> to vector<3x128xf32>
    %cst_24 = arith.constant dense<0xFF800000> : vector<128xf32>
    %52 = vector.multi_reduction <maximumf>, %51, %cst_24 [0] : vector<3x128xf32> to vector<128xf32>
    %53 = vector.shape_cast %52 : vector<128xf32> to vector<1x128xf32>
    %54 = vector.extract_strided_slice %29 {offsets = [24, 0], sizes = [3, 128], strides = [1, 1]} : vector<36x128xf32> to vector<3x128xf32>
    %cst_25 = arith.constant dense<0xFF800000> : vector<128xf32>
    %55 = vector.multi_reduction <maximumf>, %54, %cst_25 [0] : vector<3x128xf32> to vector<128xf32>
    %56 = vector.shape_cast %55 : vector<128xf32> to vector<1x128xf32>
    %57 = vector.extract_strided_slice %29 {offsets = [27, 0], sizes = [3, 128], strides = [1, 1]} : vector<36x128xf32> to vector<3x128xf32>
    %cst_26 = arith.constant dense<0xFF800000> : vector<128xf32>
    %58 = vector.multi_reduction <maximumf>, %57, %cst_26 [0] : vector<3x128xf32> to vector<128xf32>
    %59 = vector.shape_cast %58 : vector<128xf32> to vector<1x128xf32>
    %60 = vector.extract_strided_slice %29 {offsets = [30, 0], sizes = [3, 128], strides = [1, 1]} : vector<36x128xf32> to vector<3x128xf32>
    %cst_27 = arith.constant dense<0xFF800000> : vector<128xf32>
    %61 = vector.multi_reduction <maximumf>, %60, %cst_27 [0] : vector<3x128xf32> to vector<128xf32>
    %62 = vector.shape_cast %61 : vector<128xf32> to vector<1x128xf32>
    %63 = vector.extract_strided_slice %29 {offsets = [33, 0], sizes = [3, 128], strides = [1, 1]} : vector<36x128xf32> to vector<3x128xf32>
    %cst_28 = arith.constant dense<0xFF800000> : vector<128xf32>
    %64 = vector.multi_reduction <maximumf>, %63, %cst_28 [0] : vector<3x128xf32> to vector<128xf32>
    %65 = vector.shape_cast %64 : vector<128xf32> to vector<1x128xf32>
    %66 = tpu.concatenate %32, %35, %38, %41, %44, %47, %50, %53, %56, %59, %62, %65 in 0 : vector<1x128xf32>, vector<1x128xf32>, vector<1x128xf32>, vector<1x128xf32>, vector<1x128xf32>, vector<1x128xf32>, vector<1x128xf32>, vector<1x128xf32>, vector<1x128xf32>, vector<1x128xf32>, vector<1x128xf32>, vector<1x128xf32> -> vector<12x128xf32>
    %c0_29 = arith.constant 0 : index
    %c0_30 = arith.constant 0 : index
    %67 = vector.load %arg5[%c0_29, %c0_30] : memref<1x128xf32, #tpu.memory_space<vmem>>, vector<1x128xf32>
    %68 = vector.broadcast %67 : vector<1x128xf32> to vector<12x128xf32>
    %69 = arith.mulf %66, %68 : vector<12x128xf32>
    %c0_31 = arith.constant 0 : index
    %c0_32 = arith.constant 0 : index
    %70 = vector.load %arg6[%c0_31, %c0_32] : memref<1x128xf32, #tpu.memory_space<vmem>>, vector<1x128xf32>
    %71 = vector.broadcast %70 : vector<1x128xf32> to vector<12x128xf32>
    %72 = arith.addf %69, %71 : vector<12x128xf32>
    %73 = arith.truncf %72 : vector<12x128xf32> to vector<12x128xbf16>
    %cst_33 = arith.constant 0.000000e+00 : bf16
    %74 = vector.broadcast %cst_33 : bf16 to vector<1x128xbf16>
    %75 = tpu.concatenate %74, %73, %74 in 0 : vector<1x128xbf16>, vector<12x128xbf16>, vector<1x128xbf16> -> vector<14x128xbf16>
    %c0_34 = arith.constant 0 : index
    %c0_35 = arith.constant 0 : index
    %76 = vector.load %arg8[%c0_34, %c0_35] : memref<1x128xf32, #tpu.memory_space<vmem>>, vector<1x128xf32>
    %77 = vector.extract_strided_slice %75 {offsets = [0, 0], sizes = [12, 128], strides = [1, 1]} : vector<14x128xbf16> to vector<12x128xbf16>
    %c0_36 = arith.constant 0 : index
    %c0_37 = arith.constant 0 : index
    %c0_38 = arith.constant 0 : index
    %78 = vector.load %arg7[%c0_36, %c0_37, %c0_38] : memref<3x128x128xbf16, #tpu.memory_space<vmem>>, vector<1x128x128xbf16>
    %79 = vector.shape_cast %78 : vector<1x128x128xbf16> to vector<128x128xbf16>
    %cst_39 = arith.constant dense<0.000000e+00> : vector<12x128xf32>
    %80 = tpu.matmul %77, %79, %cst_39 {dimension_numbers = #tpu.dot_dimension_numbers<[1], [0], [0], [1], [0, 0, 1, 1], [], []>} : vector<12x128xbf16>, vector<128x128xbf16>, vector<12x128xf32> -> vector<12x128xf32>
    %81 = vector.broadcast %76 : vector<1x128xf32> to vector<12x128xf32>
    %82 = arith.addf %81, %80 : vector<12x128xf32>
    %83 = vector.extract_strided_slice %75 {offsets = [1, 0], sizes = [12, 128], strides = [1, 1]} : vector<14x128xbf16> to vector<12x128xbf16>
    %c1_40 = arith.constant 1 : index
    %c0_41 = arith.constant 0 : index
    %c0_42 = arith.constant 0 : index
    %84 = vector.load %arg7[%c1_40, %c0_41, %c0_42] : memref<3x128x128xbf16, #tpu.memory_space<vmem>>, vector<1x128x128xbf16>
    %85 = vector.shape_cast %84 : vector<1x128x128xbf16> to vector<128x128xbf16>
    %cst_43 = arith.constant dense<0.000000e+00> : vector<12x128xf32>
    %86 = tpu.matmul %83, %85, %cst_43 {dimension_numbers = #tpu.dot_dimension_numbers<[1], [0], [0], [1], [0, 0, 1, 1], [], []>} : vector<12x128xbf16>, vector<128x128xbf16>, vector<12x128xf32> -> vector<12x128xf32>
    %87 = arith.addf %82, %86 : vector<12x128xf32>
    %88 = vector.extract_strided_slice %75 {offsets = [2, 0], sizes = [12, 128], strides = [1, 1]} : vector<14x128xbf16> to vector<12x128xbf16>
    %c2_44 = arith.constant 2 : index
    %c0_45 = arith.constant 0 : index
    %c0_46 = arith.constant 0 : index
    %89 = vector.load %arg7[%c2_44, %c0_45, %c0_46] : memref<3x128x128xbf16, #tpu.memory_space<vmem>>, vector<1x128x128xbf16>
    %90 = vector.shape_cast %89 : vector<1x128x128xbf16> to vector<128x128xbf16>
    %cst_47 = arith.constant dense<0.000000e+00> : vector<12x128xf32>
    %91 = tpu.matmul %88, %90, %cst_47 {dimension_numbers = #tpu.dot_dimension_numbers<[1], [0], [0], [1], [0, 0, 1, 1], [], []>} : vector<12x128xbf16>, vector<128x128xbf16>, vector<12x128xf32> -> vector<12x128xf32>
    %92 = arith.addf %87, %91 : vector<12x128xf32>
    %93 = vector.extract_strided_slice %92 {offsets = [0, 0], sizes = [3, 128], strides = [1, 1]} : vector<12x128xf32> to vector<3x128xf32>
    %cst_48 = arith.constant dense<0xFF800000> : vector<128xf32>
    %94 = vector.multi_reduction <maximumf>, %93, %cst_48 [0] : vector<3x128xf32> to vector<128xf32>
    %95 = vector.shape_cast %94 : vector<128xf32> to vector<1x128xf32>
    %96 = vector.extract_strided_slice %92 {offsets = [3, 0], sizes = [3, 128], strides = [1, 1]} : vector<12x128xf32> to vector<3x128xf32>
    %cst_49 = arith.constant dense<0xFF800000> : vector<128xf32>
    %97 = vector.multi_reduction <maximumf>, %96, %cst_49 [0] : vector<3x128xf32> to vector<128xf32>
    %98 = vector.shape_cast %97 : vector<128xf32> to vector<1x128xf32>
    %99 = vector.extract_strided_slice %92 {offsets = [6, 0], sizes = [3, 128], strides = [1, 1]} : vector<12x128xf32> to vector<3x128xf32>
    %cst_50 = arith.constant dense<0xFF800000> : vector<128xf32>
    %100 = vector.multi_reduction <maximumf>, %99, %cst_50 [0] : vector<3x128xf32> to vector<128xf32>
    %101 = vector.shape_cast %100 : vector<128xf32> to vector<1x128xf32>
    %102 = vector.extract_strided_slice %92 {offsets = [9, 0], sizes = [3, 128], strides = [1, 1]} : vector<12x128xf32> to vector<3x128xf32>
    %cst_51 = arith.constant dense<0xFF800000> : vector<128xf32>
    %103 = vector.multi_reduction <maximumf>, %102, %cst_51 [0] : vector<3x128xf32> to vector<128xf32>
    %104 = vector.shape_cast %103 : vector<128xf32> to vector<1x128xf32>
    %105 = tpu.concatenate %95, %98, %101, %104 in 0 : vector<1x128xf32>, vector<1x128xf32>, vector<1x128xf32>, vector<1x128xf32> -> vector<4x128xf32>
    %c0_52 = arith.constant 0 : index
    %c0_53 = arith.constant 0 : index
    %106 = vector.load %arg9[%c0_52, %c0_53] : memref<1x128xf32, #tpu.memory_space<vmem>>, vector<1x128xf32>
    %107 = vector.broadcast %106 : vector<1x128xf32> to vector<4x128xf32>
    %108 = arith.mulf %105, %107 : vector<4x128xf32>
    %c0_54 = arith.constant 0 : index
    %c0_55 = arith.constant 0 : index
    %109 = vector.load %arg10[%c0_54, %c0_55] : memref<1x128xf32, #tpu.memory_space<vmem>>, vector<1x128xf32>
    %110 = vector.broadcast %109 : vector<1x128xf32> to vector<4x128xf32>
    %111 = arith.addf %108, %110 : vector<4x128xf32>
    %112 = arith.truncf %111 : vector<4x128xf32> to vector<4x128xbf16>
    %c0_56 = arith.constant 0 : index
    %c0_57 = arith.constant 0 : index
    %113 = vector.load %arg11[%c0_56, %c0_57] : memref<128x512xbf16, #tpu.memory_space<vmem>>, vector<128x512xbf16>
    %cst_58 = arith.constant dense<0.000000e+00> : vector<4x512xf32>
    %114 = tpu.matmul %112, %113, %cst_58 {dimension_numbers = #tpu.dot_dimension_numbers<[1], [0], [0], [1], [0, 0, 1, 1], [], []>} : vector<4x128xbf16>, vector<128x512xbf16>, vector<4x512xf32> -> vector<4x512xf32>
    %c0_59 = arith.constant 0 : index
    %c0_60 = arith.constant 0 : index
    %115 = vector.load %arg12[%c0_59, %c0_60] : memref<1x512xf32, #tpu.memory_space<vmem>>, vector<1x512xf32>
    %116 = vector.broadcast %115 : vector<1x512xf32> to vector<4x512xf32>
    %117 = arith.addf %114, %116 : vector<4x512xf32>
    %c0_61 = arith.constant 0 : index
    %c0_62 = arith.constant 0 : index
    %c0_63 = arith.constant 0 : index
    %118 = vector.load %arg13[%c0_61, %c0_62, %c0_63] : memref<1x4x512xf32, #tpu.memory_space<vmem>>, vector<1x4x512xf32>
    %119 = vector.shape_cast %118 : vector<1x4x512xf32> to vector<4x512xf32>
    %120 = vector.shape_cast %117 : vector<4x512xf32> to vector<1x4x512xf32>
    tpu.vector_store %arg13[%c0_61, %c0_62, %c0_63], %120 {strides = array<i32>} : memref<1x4x512xf32, #tpu.memory_space<vmem>>, vector<1x4x512xf32>,
    return
  }
  func.func @transform_0(%arg0: i32) -> (i32, i32, i32) {
    %c0_i32 = arith.constant 0 : i32
    %c0_i32_0 = arith.constant 0 : i32
    %c0_i32_1 = arith.constant 0 : i32
    return %arg0, %c0_i32, %c0_i32_0 : i32, i32, i32
  }
  func.func @transform_1(%arg0: i32) -> (i32, i32) {
    %c0_i32 = arith.constant 0 : i32
    %c0_i32_0 = arith.constant 0 : i32
    %c0_i32_1 = arith.constant 0 : i32
    return %c0_i32, %c0_i32_0 : i32, i32
  }
  func.func @transform_2(%arg0: i32) -> (i32, i32, i32) {
    %c0_i32 = arith.constant 0 : i32
    %c0_i32_0 = arith.constant 0 : i32
    %c0_i32_1 = arith.constant 0 : i32
    %c0_i32_2 = arith.constant 0 : i32
    return %c0_i32, %c0_i32_0, %c0_i32_1 : i32, i32, i32
  }
  func.func @transform_3(%arg0: i32) -> (i32, i32) {
    %c0_i32 = arith.constant 0 : i32
    %c0_i32_0 = arith.constant 0 : i32
    %c0_i32_1 = arith.constant 0 : i32
    return %c0_i32, %c0_i32_0 : i32, i32
  }
  func.func @transform_4(%arg0: i32) -> (i32, i32) {
    %c0_i32 = arith.constant 0 : i32
    %c0_i32_0 = arith.constant 0 : i32
    %c0_i32_1 = arith.constant 0 : i32
    return %c0_i32, %c0_i32_0 : i32, i32
  }
  func.func @transform_5(%arg0: i32) -> (i32, i32) {
    %c0_i32 = arith.constant 0 : i32
    %c0_i32_0 = arith.constant 0 : i32
    %c0_i32_1 = arith.constant 0 : i32
    return %c0_i32, %c0_i32_0 : i32, i32
  }
  func.func @transform_6(%arg0: i32) -> (i32, i32, i32) {
    %c0_i32 = arith.constant 0 : i32
    %c0_i32_0 = arith.constant 0 : i32
    %c0_i32_1 = arith.constant 0 : i32
    %c0_i32_2 = arith.constant 0 : i32
    return %c0_i32, %c0_i32_0, %c0_i32_1 : i32, i32, i32
  }
  func.func @transform_7(%arg0: i32) -> (i32, i32) {
    %c0_i32 = arith.constant 0 : i32
    %c0_i32_0 = arith.constant 0 : i32
    %c0_i32_1 = arith.constant 0 : i32
    return %c0_i32, %c0_i32_0 : i32, i32
  }
  func.func @transform_8(%arg0: i32) -> (i32, i32) {
    %c0_i32 = arith.constant 0 : i32
    %c0_i32_0 = arith.constant 0 : i32
    %c0_i32_1 = arith.constant 0 : i32
    return %c0_i32, %c0_i32_0 : i32, i32
  }
  func.func @transform_9(%arg0: i32) -> (i32, i32) {
    %c0_i32 = arith.constant 0 : i32
    %c0_i32_0 = arith.constant 0 : i32
    %c0_i32_1 = arith.constant 0 : i32
    return %c0_i32, %c0_i32_0 : i32, i32
  }
  func.func @transform_10(%arg0: i32) -> (i32, i32) {
    %c0_i32 = arith.constant 0 : i32
    %c0_i32_0 = arith.constant 0 : i32
    %c0_i32_1 = arith.constant 0 : i32
    return %c0_i32, %c0_i32_0 : i32, i32
  }
  func.func @transform_11(%arg0: i32) -> (i32, i32) {
    %c0_i32 = arith.constant 0 : i32
    %c0_i32_0 = arith.constant 0 : i32
    %c0_i32_1 = arith.constant 0 : i32
    return %c0_i32, %c0_i32_0 : i32, i32
  }
  func.func @transform_12(%arg0: i32) -> (i32, i32, i32) {
    %c0_i32 = arith.constant 0 : i32
    %c0_i32_0 = arith.constant 0 : i32
    %c0_i32_1 = arith.constant 0 : i32
    return %arg0, %c0_i32, %c0_i32_0 : i32, i32, i32
  }
}

module attributes {stable_mosaic.version = 11 : i64} {
  func.func @lstm_attn_kernel(%arg0: i32, %arg1: memref<4x2x512xf32, #tpu.memory_space<vmem>>, %arg2: memref<128x512xbf16, #tpu.memory_space<vmem>>, %arg3: memref<128x2xbf16, #tpu.memory_space<vmem>>, %arg4: memref<1x2xf32, #tpu.memory_space<vmem>>, %arg5: memref<2x2xf32, #tpu.memory_space<vmem>>) attributes {dimension_semantics = [#tpu.dimension_semantics<arbitrary>], iteration_bounds = array<i64: 1>, scalar_prefetch = 0 : i64, scratch_operands = 0 : i64, tpu.core_type = #tpu.core_type<tc>, window_params = [{pipeline_mode = #tpu.pipeline_mode<synchronous>, transform_indices = @transform_0, window_bounds = array<i64: 4, 2, 512>}, {pipeline_mode = #tpu.pipeline_mode<synchronous>, transform_indices = @transform_1, window_bounds = array<i64: 128, 512>}, {pipeline_mode = #tpu.pipeline_mode<synchronous>, transform_indices = @transform_2, window_bounds = array<i64: 128, 2>}, {pipeline_mode = #tpu.pipeline_mode<synchronous>, transform_indices = @transform_3, window_bounds = array<i64: 1, 2>}, {pipeline_mode = #tpu.pipeline_mode<synchronous>, transform_indices = @transform_4, window_bounds = array<i64: 2, 2>}]} {
    %c0 = arith.constant 0 : index
    %c0_0 = arith.constant 0 : index
    %0 = vector.load %arg2[%c0, %c0_0] : memref<128x512xbf16, #tpu.memory_space<vmem>>, vector<128x512xbf16>
    %cst = arith.constant 0.000000e+00 : f32
    %1 = vector.broadcast %cst : f32 to vector<2x128xf32>
    %cst_1 = arith.constant 0.000000e+00 : f32
    %2 = vector.broadcast %cst_1 : f32 to vector<2x128xf32>
    %c0_2 = arith.constant 0 : index
    %c0_3 = arith.constant 0 : index
    %c0_4 = arith.constant 0 : index
    %3 = vector.load %arg1[%c0_2, %c0_3, %c0_4] : memref<4x2x512xf32, #tpu.memory_space<vmem>>, vector<1x2x512xf32>
    %4 = vector.shape_cast %3 : vector<1x2x512xf32> to vector<2x512xf32>
    %5 = arith.truncf %1 : vector<2x128xf32> to vector<2x128xbf16>
    %cst_5 = arith.constant dense<0.000000e+00> : vector<2x512xf32>
    %6 = tpu.matmul %5, %0, %cst_5 {dimension_numbers = #tpu.dot_dimension_numbers<[1], [0], [0], [1], [0, 0, 1, 1], [], []>} : vector<2x128xbf16>, vector<128x512xbf16>, vector<2x512xf32> -> vector<2x512xf32>
    %7 = arith.addf %4, %6 : vector<2x512xf32>
    %8 = vector.extract_strided_slice %7 {offsets = [0, 0], sizes = [2, 128], strides = [1, 1]} : vector<2x512xf32> to vector<2x128xf32>
    %9 = arith.negf %8 : vector<2x128xf32>
    %10 = math.exp %9 : vector<2x128xf32>
    %cst_6 = arith.constant 1.000000e+00 : f32
    %11 = vector.broadcast %cst_6 : f32 to vector<2x128xf32>
    %12 = arith.addf %11, %10 : vector<2x128xf32>
    %13 = arith.divf %11, %12 : vector<2x128xf32>
    %14 = vector.extract_strided_slice %7 {offsets = [0, 128], sizes = [2, 128], strides = [1, 1]} : vector<2x512xf32> to vector<2x128xf32>
    %15 = arith.negf %14 : vector<2x128xf32>
    %16 = math.exp %15 : vector<2x128xf32>
    %cst_7 = arith.constant 1.000000e+00 : f32
    %17 = vector.broadcast %cst_7 : f32 to vector<2x128xf32>
    %18 = arith.addf %17, %16 : vector<2x128xf32>
    %19 = arith.divf %17, %18 : vector<2x128xf32>
    %20 = vector.extract_strided_slice %7 {offsets = [0, 256], sizes = [2, 128], strides = [1, 1]} : vector<2x512xf32> to vector<2x128xf32>
    %21 = math.tanh %20 : vector<2x128xf32>
    %22 = vector.extract_strided_slice %7 {offsets = [0, 384], sizes = [2, 128], strides = [1, 1]} : vector<2x512xf32> to vector<2x128xf32>
    %23 = arith.negf %22 : vector<2x128xf32>
    %24 = math.exp %23 : vector<2x128xf32>
    %cst_8 = arith.constant 1.000000e+00 : f32
    %25 = vector.broadcast %cst_8 : f32 to vector<2x128xf32>
    %26 = arith.addf %25, %24 : vector<2x128xf32>
    %27 = arith.divf %25, %26 : vector<2x128xf32>
    %28 = arith.mulf %19, %2 : vector<2x128xf32>
    %29 = arith.mulf %13, %21 : vector<2x128xf32>
    %30 = arith.addf %28, %29 : vector<2x128xf32>
    %31 = math.tanh %30 : vector<2x128xf32>
    %32 = arith.mulf %27, %31 : vector<2x128xf32>
    %c1 = arith.constant 1 : index
    %c0_9 = arith.constant 0 : index
    %c0_10 = arith.constant 0 : index
    %33 = vector.load %arg1[%c1, %c0_9, %c0_10] : memref<4x2x512xf32, #tpu.memory_space<vmem>>, vector<1x2x512xf32>
    %34 = vector.shape_cast %33 : vector<1x2x512xf32> to vector<2x512xf32>
    %35 = arith.truncf %32 : vector<2x128xf32> to vector<2x128xbf16>
    %cst_11 = arith.constant dense<0.000000e+00> : vector<2x512xf32>
    %36 = tpu.matmul %35, %0, %cst_11 {dimension_numbers = #tpu.dot_dimension_numbers<[1], [0], [0], [1], [0, 0, 1, 1], [], []>} : vector<2x128xbf16>, vector<128x512xbf16>, vector<2x512xf32> -> vector<2x512xf32>
    %37 = arith.addf %34, %36 : vector<2x512xf32>
    %38 = vector.extract_strided_slice %37 {offsets = [0, 0], sizes = [2, 128], strides = [1, 1]} : vector<2x512xf32> to vector<2x128xf32>
    %39 = arith.negf %38 : vector<2x128xf32>
    %40 = math.exp %39 : vector<2x128xf32>
    %cst_12 = arith.constant 1.000000e+00 : f32
    %41 = vector.broadcast %cst_12 : f32 to vector<2x128xf32>
    %42 = arith.addf %41, %40 : vector<2x128xf32>
    %43 = arith.divf %41, %42 : vector<2x128xf32>
    %44 = vector.extract_strided_slice %37 {offsets = [0, 128], sizes = [2, 128], strides = [1, 1]} : vector<2x512xf32> to vector<2x128xf32>
    %45 = arith.negf %44 : vector<2x128xf32>
    %46 = math.exp %45 : vector<2x128xf32>
    %cst_13 = arith.constant 1.000000e+00 : f32
    %47 = vector.broadcast %cst_13 : f32 to vector<2x128xf32>
    %48 = arith.addf %47, %46 : vector<2x128xf32>
    %49 = arith.divf %47, %48 : vector<2x128xf32>
    %50 = vector.extract_strided_slice %37 {offsets = [0, 256], sizes = [2, 128], strides = [1, 1]} : vector<2x512xf32> to vector<2x128xf32>
    %51 = math.tanh %50 : vector<2x128xf32>
    %52 = vector.extract_strided_slice %37 {offsets = [0, 384], sizes = [2, 128], strides = [1, 1]} : vector<2x512xf32> to vector<2x128xf32>
    %53 = arith.negf %52 : vector<2x128xf32>
    %54 = math.exp %53 : vector<2x128xf32>
    %cst_14 = arith.constant 1.000000e+00 : f32
    %55 = vector.broadcast %cst_14 : f32 to vector<2x128xf32>
    %56 = arith.addf %55, %54 : vector<2x128xf32>
    %57 = arith.divf %55, %56 : vector<2x128xf32>
    %58 = arith.mulf %49, %30 : vector<2x128xf32>
    %59 = arith.mulf %43, %51 : vector<2x128xf32>
    %60 = arith.addf %58, %59 : vector<2x128xf32>
    %61 = math.tanh %60 : vector<2x128xf32>
    %62 = arith.mulf %57, %61 : vector<2x128xf32>
    %c2 = arith.constant 2 : index
    %c0_15 = arith.constant 0 : index
    %c0_16 = arith.constant 0 : index
    %63 = vector.load %arg1[%c2, %c0_15, %c0_16] : memref<4x2x512xf32, #tpu.memory_space<vmem>>, vector<1x2x512xf32>
    %64 = vector.shape_cast %63 : vector<1x2x512xf32> to vector<2x512xf32>
    %65 = arith.truncf %62 : vector<2x128xf32> to vector<2x128xbf16>
    %cst_17 = arith.constant dense<0.000000e+00> : vector<2x512xf32>
    %66 = tpu.matmul %65, %0, %cst_17 {dimension_numbers = #tpu.dot_dimension_numbers<[1], [0], [0], [1], [0, 0, 1, 1], [], []>} : vector<2x128xbf16>, vector<128x512xbf16>, vector<2x512xf32> -> vector<2x512xf32>
    %67 = arith.addf %64, %66 : vector<2x512xf32>
    %68 = vector.extract_strided_slice %67 {offsets = [0, 0], sizes = [2, 128], strides = [1, 1]} : vector<2x512xf32> to vector<2x128xf32>
    %69 = arith.negf %68 : vector<2x128xf32>
    %70 = math.exp %69 : vector<2x128xf32>
    %cst_18 = arith.constant 1.000000e+00 : f32
    %71 = vector.broadcast %cst_18 : f32 to vector<2x128xf32>
    %72 = arith.addf %71, %70 : vector<2x128xf32>
    %73 = arith.divf %71, %72 : vector<2x128xf32>
    %74 = vector.extract_strided_slice %67 {offsets = [0, 128], sizes = [2, 128], strides = [1, 1]} : vector<2x512xf32> to vector<2x128xf32>
    %75 = arith.negf %74 : vector<2x128xf32>
    %76 = math.exp %75 : vector<2x128xf32>
    %cst_19 = arith.constant 1.000000e+00 : f32
    %77 = vector.broadcast %cst_19 : f32 to vector<2x128xf32>
    %78 = arith.addf %77, %76 : vector<2x128xf32>
    %79 = arith.divf %77, %78 : vector<2x128xf32>
    %80 = vector.extract_strided_slice %67 {offsets = [0, 256], sizes = [2, 128], strides = [1, 1]} : vector<2x512xf32> to vector<2x128xf32>
    %81 = math.tanh %80 : vector<2x128xf32>
    %82 = vector.extract_strided_slice %67 {offsets = [0, 384], sizes = [2, 128], strides = [1, 1]} : vector<2x512xf32> to vector<2x128xf32>
    %83 = arith.negf %82 : vector<2x128xf32>
    %84 = math.exp %83 : vector<2x128xf32>
    %cst_20 = arith.constant 1.000000e+00 : f32
    %85 = vector.broadcast %cst_20 : f32 to vector<2x128xf32>
    %86 = arith.addf %85, %84 : vector<2x128xf32>
    %87 = arith.divf %85, %86 : vector<2x128xf32>
    %88 = arith.mulf %79, %60 : vector<2x128xf32>
    %89 = arith.mulf %73, %81 : vector<2x128xf32>
    %90 = arith.addf %88, %89 : vector<2x128xf32>
    %91 = math.tanh %90 : vector<2x128xf32>
    %92 = arith.mulf %87, %91 : vector<2x128xf32>
    %c3 = arith.constant 3 : index
    %c0_21 = arith.constant 0 : index
    %c0_22 = arith.constant 0 : index
    %93 = vector.load %arg1[%c3, %c0_21, %c0_22] : memref<4x2x512xf32, #tpu.memory_space<vmem>>, vector<1x2x512xf32>
    %94 = vector.shape_cast %93 : vector<1x2x512xf32> to vector<2x512xf32>
    %95 = arith.truncf %92 : vector<2x128xf32> to vector<2x128xbf16>
    %cst_23 = arith.constant dense<0.000000e+00> : vector<2x512xf32>
    %96 = tpu.matmul %95, %0, %cst_23 {dimension_numbers = #tpu.dot_dimension_numbers<[1], [0], [0], [1], [0, 0, 1, 1], [], []>} : vector<2x128xbf16>, vector<128x512xbf16>, vector<2x512xf32> -> vector<2x512xf32>
    %97 = arith.addf %94, %96 : vector<2x512xf32>
    %98 = vector.extract_strided_slice %97 {offsets = [0, 0], sizes = [2, 128], strides = [1, 1]} : vector<2x512xf32> to vector<2x128xf32>
    %99 = arith.negf %98 : vector<2x128xf32>
    %100 = math.exp %99 : vector<2x128xf32>
    %cst_24 = arith.constant 1.000000e+00 : f32
    %101 = vector.broadcast %cst_24 : f32 to vector<2x128xf32>
    %102 = arith.addf %101, %100 : vector<2x128xf32>
    %103 = arith.divf %101, %102 : vector<2x128xf32>
    %104 = vector.extract_strided_slice %97 {offsets = [0, 128], sizes = [2, 128], strides = [1, 1]} : vector<2x512xf32> to vector<2x128xf32>
    %105 = arith.negf %104 : vector<2x128xf32>
    %106 = math.exp %105 : vector<2x128xf32>
    %cst_25 = arith.constant 1.000000e+00 : f32
    %107 = vector.broadcast %cst_25 : f32 to vector<2x128xf32>
    %108 = arith.addf %107, %106 : vector<2x128xf32>
    %109 = arith.divf %107, %108 : vector<2x128xf32>
    %110 = vector.extract_strided_slice %97 {offsets = [0, 256], sizes = [2, 128], strides = [1, 1]} : vector<2x512xf32> to vector<2x128xf32>
    %111 = math.tanh %110 : vector<2x128xf32>
    %112 = vector.extract_strided_slice %97 {offsets = [0, 384], sizes = [2, 128], strides = [1, 1]} : vector<2x512xf32> to vector<2x128xf32>
    %113 = arith.negf %112 : vector<2x128xf32>
    %114 = math.exp %113 : vector<2x128xf32>
    %cst_26 = arith.constant 1.000000e+00 : f32
    %115 = vector.broadcast %cst_26 : f32 to vector<2x128xf32>
    %116 = arith.addf %115, %114 : vector<2x128xf32>
    %117 = arith.divf %115, %116 : vector<2x128xf32>
    %118 = arith.mulf %109, %90 : vector<2x128xf32>
    %119 = arith.mulf %103, %111 : vector<2x128xf32>
    %120 = arith.addf %118, %119 : vector<2x128xf32>
    %121 = math.tanh %120 : vector<2x128xf32>
    %122 = arith.mulf %117, %121 : vector<2x128xf32>
    %123 = arith.mulf %32, %122 : vector<2x128xf32>
    %cst_27 = arith.constant dense<0.000000e+00> : vector<2xf32>
    %124 = vector.multi_reduction <add>, %123, %cst_27 [1] : vector<2x128xf32> to vector<2xf32>
    %125 = vector.shape_cast %124 : vector<2xf32> to vector<2x1xf32>
    %126 = arith.mulf %62, %122 : vector<2x128xf32>
    %cst_28 = arith.constant dense<0.000000e+00> : vector<2xf32>
    %127 = vector.multi_reduction <add>, %126, %cst_28 [1] : vector<2x128xf32> to vector<2xf32>
    %128 = vector.shape_cast %127 : vector<2xf32> to vector<2x1xf32>
    %129 = arith.mulf %92, %122 : vector<2x128xf32>
    %cst_29 = arith.constant dense<0.000000e+00> : vector<2xf32>
    %130 = vector.multi_reduction <add>, %129, %cst_29 [1] : vector<2x128xf32> to vector<2xf32>
    %131 = vector.shape_cast %130 : vector<2xf32> to vector<2x1xf32>
    %132 = arith.mulf %122, %122 : vector<2x128xf32>
    %cst_30 = arith.constant dense<0.000000e+00> : vector<2xf32>
    %133 = vector.multi_reduction <add>, %132, %cst_30 [1] : vector<2x128xf32> to vector<2xf32>
    %134 = vector.shape_cast %133 : vector<2xf32> to vector<2x1xf32>
    %135 = tpu.concatenate %125, %128, %131, %134 in 1 : vector<2x1xf32>, vector<2x1xf32>, vector<2x1xf32>, vector<2x1xf32> -> vector<2x4xf32>
    %cst_31 = arith.constant dense<0xFF800000> : vector<2xf32>
    %136 = vector.multi_reduction <maximumf>, %135, %cst_31 [1] : vector<2x4xf32> to vector<2xf32>
    %137 = vector.shape_cast %136 : vector<2xf32> to vector<2x1xf32>
    %138 = vector.broadcast %137 : vector<2x1xf32> to vector<2x4xf32>
    %139 = arith.subf %135, %138 : vector<2x4xf32>
    %140 = math.exp %139 : vector<2x4xf32>
    %cst_32 = arith.constant dense<0.000000e+00> : vector<2xf32>
    %141 = vector.multi_reduction <add>, %140, %cst_32 [1] : vector<2x4xf32> to vector<2xf32>
    %142 = vector.shape_cast %141 : vector<2xf32> to vector<2x1xf32>
    %143 = vector.broadcast %142 : vector<2x1xf32> to vector<2x4xf32>
    %144 = arith.divf %140, %143 : vector<2x4xf32>
    %cst_33 = arith.constant 0.000000e+00 : f32
    %145 = vector.broadcast %cst_33 : f32 to vector<2x128xf32>
    %146 = vector.extract_strided_slice %144 {offsets = [0, 0], sizes = [2, 1], strides = [1, 1]} : vector<2x4xf32> to vector<2x1xf32>
    %147 = vector.broadcast %146 : vector<2x1xf32> to vector<2x128xf32>
    %148 = arith.mulf %147, %32 : vector<2x128xf32>
    %149 = arith.addf %145, %148 : vector<2x128xf32>
    %150 = vector.extract_strided_slice %144 {offsets = [0, 1], sizes = [2, 1], strides = [1, 1]} : vector<2x4xf32> to vector<2x1xf32>
    %151 = vector.broadcast %150 : vector<2x1xf32> to vector<2x128xf32>
    %152 = arith.mulf %151, %62 : vector<2x128xf32>
    %153 = arith.addf %149, %152 : vector<2x128xf32>
    %154 = vector.extract_strided_slice %144 {offsets = [0, 2], sizes = [2, 1], strides = [1, 1]} : vector<2x4xf32> to vector<2x1xf32>
    %155 = vector.broadcast %154 : vector<2x1xf32> to vector<2x128xf32>
    %156 = arith.mulf %155, %92 : vector<2x128xf32>
    %157 = arith.addf %153, %156 : vector<2x128xf32>
    %158 = vector.extract_strided_slice %144 {offsets = [0, 3], sizes = [2, 1], strides = [1, 1]} : vector<2x4xf32> to vector<2x1xf32>
    %159 = vector.broadcast %158 : vector<2x1xf32> to vector<2x128xf32>
    %160 = arith.mulf %159, %122 : vector<2x128xf32>
    %161 = arith.addf %157, %160 : vector<2x128xf32>
    %162 = arith.truncf %161 : vector<2x128xf32> to vector<2x128xbf16>
    %c0_34 = arith.constant 0 : index
    %c0_35 = arith.constant 0 : index
    %163 = vector.load %arg3[%c0_34, %c0_35] : memref<128x2xbf16, #tpu.memory_space<vmem>>, vector<128x2xbf16>
    %cst_36 = arith.constant dense<0.000000e+00> : vector<2x2xf32>
    %164 = tpu.matmul %162, %163, %cst_36 {dimension_numbers = #tpu.dot_dimension_numbers<[1], [0], [0], [1], [0, 0, 1, 1], [], []>} : vector<2x128xbf16>, vector<128x2xbf16>, vector<2x2xf32> -> vector<2x2xf32>
    %c0_37 = arith.constant 0 : index
    %c0_38 = arith.constant 0 : index
    %165 = vector.load %arg4[%c0_37, %c0_38] : memref<1x2xf32, #tpu.memory_space<vmem>>, vector<1x2xf32>
    %166 = vector.broadcast %165 : vector<1x2xf32> to vector<2x2xf32>
    %167 = arith.addf %164, %166 : vector<2x2xf32>
    %c0_39 = arith.constant 0 : index
    %c0_40 = arith.constant 0 : index
    %168 = vector.load %arg5[%c0_39, %c0_40] : memref<2x2xf32, #tpu.memory_space<vmem>>, vector<2x2xf32>
    tpu.vector_store %arg5[%c0_39, %c0_40], %167 {strides = array<i32>} : memref<2x2xf32, #tpu.memory_space<vmem>>, vector<2x2xf32>,
    return
  }
  func.func @transform_0(%arg0: i32) -> (i32, i32, i32) {
    %c0_i32 = arith.constant 0 : i32
    %c0_i32_0 = arith.constant 0 : i32
    %c0_i32_1 = arith.constant 0 : i32
    %c0_i32_2 = arith.constant 0 : i32
    return %c0_i32, %c0_i32_0, %c0_i32_1 : i32, i32, i32
  }
  func.func @transform_1(%arg0: i32) -> (i32, i32) {
    %c0_i32 = arith.constant 0 : i32
    %c0_i32_0 = arith.constant 0 : i32
    %c0_i32_1 = arith.constant 0 : i32
    return %c0_i32, %c0_i32_0 : i32, i32
  }
  func.func @transform_2(%arg0: i32) -> (i32, i32) {
    %c0_i32 = arith.constant 0 : i32
    %c0_i32_0 = arith.constant 0 : i32
    %c0_i32_1 = arith.constant 0 : i32
    return %c0_i32, %c0_i32_0 : i32, i32
  }
  func.func @transform_3(%arg0: i32) -> (i32, i32) {
    %c0_i32 = arith.constant 0 : i32
    %c0_i32_0 = arith.constant 0 : i32
    %c0_i32_1 = arith.constant 0 : i32
    return %c0_i32, %c0_i32_0 : i32, i32
  }
  func.func @transform_4(%arg0: i32) -> (i32, i32) {
    %c0_i32 = arith.constant 0 : i32
    %c0_i32_0 = arith.constant 0 : i32
    %c0_i32_1 = arith.constant 0 : i32
    return %c0_i32, %c0_i32_0 : i32, i32
  }
}

</mosaic_0001>

<llo_original>
// kernel: forward.3
$region0: #{forward.3}
  #allocation0 [shape = 'u32[]', space=smem, size = 0x4, offset = 0x4, fixed_abs, tag = 'smem constant byte address 0x4 - core index']
  #allocation1 [shape = 'u32[144,128]{1,0:T(1,128)}', space=vmem, size = 0x12000, scoped, tag = 'internal scratch']
  %s0 = inlined_call_operand.vmem [shape: f32[4,2,512], index: 0, kind: input, shape index: {}]
  %s1 = inlined_call_operand.vmem [shape: bf16[128,512], index: 1, kind: input, shape index: {}]
  %s2 = inlined_call_operand.vmem [shape: bf16[128,2], index: 2, kind: input, shape index: {}]
  %s3 = inlined_call_operand.vmem [shape: f32[1,2], index: 3, kind: input, shape index: {}]
  %s4 = inlined_call_operand.hbm [shape: f32[2,2], index: 4, kind: output, shape index: {}]
  %s5 = sld [smem:[#allocation0]]
  $region26: #{forward.3} parent=0
    _
  %s7 = ssub.s32 1, %s5
  %s8 = scalar_select 0, %s7, %s5
  $region1: #{forward.3} parent=0
    #allocation2 [shape = 'u8[1024]{0}', space=vmem, size = 0x400, scoped, tag = 'output window, operand 0, single buffered']
    #allocation3 [shape = 's32[1]{0}', space=sflag, size = 0x4, scoped, tag = 'scoped memory for forward.3']
    %9 = vsyncpa [#allocation3], 0
    // Predicated region
    $region2: #{forward.3} parent=1 // pred_check
      _
    $region3: #{forward.3} parent=1 // pred_check_branch
      %11 = sbr.rel (0) target = $region5
    $region4: #{forward.3} parent=1 // pred_region
      _
    $region5: #{forward.3} parent=1 // pred_fallthru
      _
    // Predicated region
    $region6: #{forward.3} parent=1 // pred_check
      _
    $region7: #{forward.3} parent=1 // pred_check_branch
      %13 = sbr.rel (0) target = $region9
    $region8: #{forward.3} parent=1 // pred_region
      _
    $region9: #{forward.3} parent=1 // pred_fallthru
      _
    // Predicated region
    $region10: #{forward.3} parent=1 // pred_check
      _
    $region11: #{forward.3} parent=1 // pred_check_branch
      %15 = sbr.rel (0) target = $region13
    $region12: #{forward.3} parent=1 // pred_region
      _
    $region13: #{forward.3} parent=1 // pred_fallthru
      _
    // Predicated region
    $region14: #{forward.3} parent=1 // pred_check
      _
    $region15: #{forward.3} parent=1 // pred_check_branch
      %17 = sbr.rel (0) target = $region17
    $region16: #{forward.3} parent=1 // pred_region
      _
    $region17: #{forward.3} parent=1 // pred_fallthru
      _
    %v19 = vld [vmem:[%s1] sm:$0xff]
    %v20 = vld [vmem:[%s1 + $0x8] sm:$0xff]
    %v21 = vld [vmem:[%s1 + $0x10] sm:$0xff]
    %v22 = vld [vmem:[%s1 + $0x18] sm:$0xff]
    %v23 = vld [vmem:[%s1 + $0x20] sm:$0xff]
    %v24 = vld [vmem:[%s1 + $0x28] sm:$0xff]
    %v25 = vld [vmem:[%s1 + $0x30] sm:$0xff]
    %v26 = vld [vmem:[%s1 + $0x38] sm:$0xff]
    %v27 = vld [vmem:[%s1 + $0x40] sm:$0xff]
    %v28 = vld [vmem:[%s1 + $0x48] sm:$0xff]
    %v29 = vld [vmem:[%s1 + $0x50] sm:$0xff]
    %v30 = vld [vmem:[%s1 + $0x58] sm:$0xff]
    %v31 = vld [vmem:[%s1 + $0x60] sm:$0xff]
    %v32 = vld [vmem:[%s1 + $0x68] sm:$0xff]
    %v33 = vld [vmem:[%s1 + $0x70] sm:$0xff]
    %v34 = vld [vmem:[%s1 + $0x78] sm:$0xff]
    %v35 = vld [vmem:[%s1 + $0x80] sm:$0xff]
    %v36 = vld [vmem:[%s1 + $0x88] sm:$0xff]
    %v37 = vld [vmem:[%s1 + $0x90] sm:$0xff]
    %v38 = vld [vmem:[%s1 + $0x98] sm:$0xff]
    %v39 = vld [vmem:[%s1 + $0xa0] sm:$0xff]
    %v40 = vld [vmem:[%s1 + $0xa8] sm:$0xff]
    %v41 = vld [vmem:[%s1 + $0xb0] sm:$0xff]
    %v42 = vld [vmem:[%s1 + $0xb8] sm:$0xff]
    %v43 = vld [vmem:[%s1 + $0xc0] sm:$0xff]
    %v44 = vld [vmem:[%s1 + $0xc8] sm:$0xff]
    %v45 = vld [vmem:[%s1 + $0xd0] sm:$0xff]
    %v46 = vld [vmem:[%s1 + $0xd8] sm:$0xff]
    %v47 = vld [vmem:[%s1 + $0xe0] sm:$0xff]
    %v48 = vld [vmem:[%s1 + $0xe8] sm:$0xff]
    %v49 = vld [vmem:[%s1 + $0xf0] sm:$0xff]
    %v50 = vld [vmem:[%s1 + $0xf8] sm:$0xff]
    %v51 = vld [vmem:[%s0] sm:$0xff]
    %v84 = vunpack.c.l.b16 %v19
    %v85 = vunpack.c.h.b16 %v19
    %v86 = vunpack.c.l.b16 %v20
    %v87 = vunpack.c.h.b16 %v20
    %v88 = vunpack.c.l.b16 %v21
    %v89 = vunpack.c.h.b16 %v21
    %v90 = vunpack.c.l.b16 %v22
    %v91 = vunpack.c.h.b16 %v22
    %v92 = vunpack.c.l.b16 %v23
    %v93 = vunpack.c.h.b16 %v23
    %v94 = vunpack.c.l.b16 %v24
    %v95 = vunpack.c.h.b16 %v24
    %v96 = vunpack.c.l.b16 %v25
    %v97 = vunpack.c.h.b16 %v25
    %v98 = vunpack.c.l.b16 %v26
    %v99 = vunpack.c.h.b16 %v26
    %v100 = vunpack.c.l.b16 %v27
    %v101 = vunpack.c.h.b16 %v27
    %v102 = vunpack.c.l.b16 %v28
    %v103 = vunpack.c.h.b16 %v28
    %v104 = vunpack.c.l.b16 %v29
    %v105 = vunpack.c.h.b16 %v29
    %v106 = vunpack.c.l.b16 %v30
    %v107 = vunpack.c.h.b16 %v30
    %v108 = vunpack.c.l.b16 %v31
    %v109 = vunpack.c.h.b16 %v31
    %v110 = vunpack.c.l.b16 %v32
    %v111 = vunpack.c.h.b16 %v32
    %v112 = vunpack.c.l.b16 %v33
    %v113 = vunpack.c.h.b16 %v33
    %v114 = vunpack.c.l.b16 %v34
    %v115 = vunpack.c.h.b16 %v34
    %v116 = vunpack.c.l.b16 %v35
    %v117 = vunpack.c.h.b16 %v35
    %v118 = vunpack.c.l.b16 %v36
    %v119 = vunpack.c.h.b16 %v36
    %v120 = vunpack.c.l.b16 %v37
    %v121 = vunpack.c.h.b16 %v37
    %v122 = vunpack.c.l.b16 %v38
    %v123 = vunpack.c.h.b16 %v38
    %v124 = vunpack.c.l.b16 %v39
    %v125 = vunpack.c.h.b16 %v39
    %v126 = vunpack.c.l.b16 %v40
    %v127 = vunpack.c.h.b16 %v40
    %v128 = vunpack.c.l.b16 %v41
    %v129 = vunpack.c.h.b16 %v41
    %v130 = vunpack.c.l.b16 %v42
    %v131 = vunpack.c.h.b16 %v42
    %v132 = vunpack.c.l.b16 %v43
    %v133 = vunpack.c.h.b16 %v43
    %v134 = vunpack.c.l.b16 %v44
    %v135 = vunpack.c.h.b16 %v44
    %v136 = vunpack.c.l.b16 %v45
    %v137 = vunpack.c.h.b16 %v45
    %v138 = vunpack.c.l.b16 %v46
    %v139 = vunpack.c.h.b16 %v46
    %v140 = vunpack.c.l.b16 %v47
    %v141 = vunpack.c.h.b16 %v47
    %v142 = vunpack.c.l.b16 %v48
    %v143 = vunpack.c.h.b16 %v48
    %v144 = vunpack.c.l.b16 %v49
    %v145 = vunpack.c.h.b16 %v49
    %v146 = vunpack.c.l.b16 %v50
    %v147 = vunpack.c.h.b16 %v50
    %v148 = vpack.c.b16 %v88, %v84
    %v149 = vpack.c.b16 %v89, %v85
    %v150 = vpack.c.b16 %v90, %v86
    %v151 = vpack.c.b16 %v91, %v87
    %v152 = vpack.c.b16 %v96, %v92
    %v153 = vpack.c.b16 %v97, %v93
    %v154 = vpack.c.b16 %v98, %v94
    %v155 = vpack.c.b16 %v99, %v95
    %v156 = vpack.c.b16 %v104, %v100
    %v157 = vpack.c.b16 %v105, %v101
    %v158 = vpack.c.b16 %v106, %v102
    %v159 = vpack.c.b16 %v107, %v103
    %v160 = vpack.c.b16 %v112, %v108
    %v161 = vpack.c.b16 %v113, %v109
    %v162 = vpack.c.b16 %v114, %v110
    %v163 = vpack.c.b16 %v115, %v111
    %v164 = vpack.c.b16 %v120, %v116
    %v165 = vpack.c.b16 %v121, %v117
    %v166 = vpack.c.b16 %v122, %v118
    %v167 = vpack.c.b16 %v123, %v119
    %v168 = vpack.c.b16 %v128, %v124
    %v169 = vpack.c.b16 %v129, %v125
    %v170 = vpack.c.b16 %v130, %v126
    %v171 = vpack.c.b16 %v131, %v127
    %v172 = vpack.c.b16 %v136, %v132
    %v173 = vpack.c.b16 %v137, %v133
    %v174 = vpack.c.b16 %v138, %v134
    %v175 = vpack.c.b16 %v139, %v135
    %v176 = vpack.c.b16 %v144, %v140
    %v177 = vpack.c.b16 %v145, %v141
    %v178 = vpack.c.b16 %v146, %v142
    %v179 = vpack.c.b16 %v147, %v143
    %212 = vmatprep.subr.bf16.mxu0 %v149
    %213 = vmatpush1.bf16.msra.mxu0 %v148
    %214 = vmatprep.subr.bf16.mxu0 %v153
    %215 = vmatpush1.bf16.msra.mxu0 %v152
    %216 = vmatprep.subr.bf16.mxu0 %v157
    %217 = vmatpush1.bf16.msra.mxu0 %v156
    %218 = vmatprep.subr.bf16.mxu0 %v161
    %219 = vmatpush1.bf16.msra.mxu0 %v160
    %220 = vmatprep.subr.bf16.mxu0 %v165
    %221 = vmatpush1.bf16.msra.mxu0 %v164
    %222 = vmatprep.subr.bf16.mxu0 %v169
    %223 = vmatpush1.bf16.msra.mxu0 %v168
    %224 = vmatprep.subr.bf16.mxu0 %v173
    %225 = vmatpush1.bf16.msra.mxu0 %v172
    %226 = vmatprep.subr.bf16.mxu0 %v177
    %227 = vmatpush1.bf16.msra.mxu0 %v176
    %228 = vmatprep.subr.bf16.mxu0 0
    %229 = vmatpush1.bf16.msra.mxu0 0
    %230 = vmatprep.subr.bf16.mxu0 0
    %231 = vmatpush1.bf16.msra.mxu0 0
    %232 = vmatprep.subr.bf16.mxu0 0
    %233 = vmatpush1.bf16.msra.mxu0 0
    %234 = vmatprep.subr.bf16.mxu0 0
    %235 = vmatpush1.bf16.msra.mxu0 0
    %236 = vmatprep.subr.bf16.mxu0 0
    %237 = vmatpush1.bf16.msra.mxu0 0
    %238 = vmatprep.subr.bf16.mxu0 0
    %239 = vmatpush1.bf16.msra.mxu0 0
    %240 = vmatprep.subr.bf16.mxu0 0
    %241 = vmatpush1.bf16.msra.mxu0 0
    %242 = vmatprep.subr.bf16.mxu0 0
    %243 = vmatpush1.bf16.msra.mxu0 0
    %244 = vmatprep.mubr.bf16.mxu0 0
    %245 = vmatmul.mubr.bf16.gmra.mrb[0].mxu0 0
    %v246 = vpop.f32.mrb[0].mxu0
    %v247 = vadd.f32 0.0, %v246
    %v248 = vpop.f32.mrb[0].mxu0
    %v249 = vadd.f32 0.0, %v248
    %v250 = vpop.f32.mrb[0].mxu0
    %v251 = vpop.f32.mrb[0].mxu0
    %252 = vdwg.mxu0
    %253 = vmatprep.subr.bf16.mxu0 %v151
    %254 = vmatpush1.bf16.msra.mxu0 %v150
    %255 = vmatprep.subr.bf16.mxu0 %v155
    %256 = vmatpush1.bf16.msra.mxu0 %v154
    %257 = vmatprep.subr.bf16.mxu0 %v159
    %258 = vmatpush1.bf16.msra.mxu0 %v158
    %259 = vmatprep.subr.bf16.mxu0 %v163
    %260 = vmatpush1.bf16.msra.mxu0 %v162
    %261 = vmatprep.subr.bf16.mxu0 %v167
    %262 = vmatpush1.bf16.msra.mxu0 %v166
    %263 = vmatprep.subr.bf16.mxu0 %v171
    %264 = vmatpush1.bf16.msra.mxu0 %v170
    %265 = vmatprep.subr.bf16.mxu0 %v175
    %266 = vmatpush1.bf16.msra.mxu0 %v174
    %267 = vmatprep.subr.bf16.mxu0 %v179
    %268 = vmatpush1.bf16.msra.mxu0 %v178
    %269 = vmatprep.subr.bf16.mxu0 0
    %270 = vmatpush1.bf16.msra.mxu0 0
    %271 = vmatprep.subr.bf16.mxu0 0
    %272 = vmatpush1.bf16.msra.mxu0 0
    %273 = vmatprep.subr.bf16.mxu0 0
    %274 = vmatpush1.bf16.msra.mxu0 0
    %275 = vmatprep.subr.bf16.mxu0 0
    %276 = vmatpush1.bf16.msra.mxu0 0
    %277 = vmatprep.subr.bf16.mxu0 0
    %278 = vmatpush1.bf16.msra.mxu0 0
    %279 = vmatprep.subr.bf16.mxu0 0
    %280 = vmatpush1.bf16.msra.mxu0 0
    %281 = vmatprep.subr.bf16.mxu0 0
    %282 = vmatpush1.bf16.msra.mxu0 0
    %283 = vmatprep.subr.bf16.mxu0 0
    %284 = vmatpush1.bf16.msra.mxu0 0
    %285 = vmatprep.mubr.bf16.mxu0 0
    %286 = vmatmul.mubr.bf16.gmra.mrb[0].mxu0 0
    %v287 = vpop.f32.mrb[0].mxu0
    %v288 = vadd.f32 0.0, %v287
    %v289 = vpop.f32.mrb[0].mxu0
    %v290 = vadd.f32 0.0, %v289
    %v291 = vpop.f32.mrb[0].mxu0
    %v292 = vpop.f32.mrb[0].mxu0
    %293 = vdwg.mxu0
    %v298 = vcombine.low %v247, %v249
    %v299 = vcombine.low %v288, %v290
    %v301 = vunpack.c.l.s4 1983009808
    %v302 = vunpack.c.0.s8 %v301
    %v303 = vlaneseq
    %v304 = vshrl.u32 %v303, 7
    %v305 = vsub.s32 %v302, %v304
    %v306 = vrot.slane %v298, %v305
    %v308 = vunpack.c.l.s4 1983009808
    %v309 = vunpack.c.0.s8 %v308
    %v310 = vlaneseq
    %v311 = vshrl.u32 %v310, 7
    %v312 = vsub.s32 %v309, %v311
    %v313 = vrot.slane %v299, %v312
    %v314 = vcombine.low %v306, %v313
    %v316 = vadd.f32 %v51, %v314
    %v317 = vxor.u32 %v316, 2147483648
    %v318 = vmul.f32 %v317, 1.442695
    %v319 = vpow.pop %v318
    %v320 = vadd.f32 %v319, 1.0
    %v321 = vrcp.pop %v320
    %v322 = vmul.f32 1.0, %v321
    %v324 = vrot.slane %v316, 2
    %v326 = vxor.u32 %v324, 2147483648
    %v327 = vmul.f32 %v326, 1.442695
    %v328 = vpow.pop %v327
    %v329 = vadd.f32 %v328, 1.0
    %v330 = vrcp.pop %v329
    %v331 = vmul.f32 1.0, %v330
    %v332 = vrot.slane %v316, 4
    %v334 = vtanh.pop %v332
    %v335 = vrot.slane %v316, 6
    %v337 = vxor.u32 %v335, 2147483648
    %v338 = vmul.f32 %v337, 1.442695
    %v339 = vpow.pop %v338
    %v340 = vadd.f32 %v339, 1.0
    %v341 = vrcp.pop %v340
    %v342 = vmul.f32 1.0, %v341
    %v343 = vmul.f32 %v331, 0.0
    %v344 = vmul.f32 %v322, %v334
    %v345 = vadd.f32 %v343, %v344
    %v346 = vtanh.pop %v345
    %v347 = vmul.f32 %v342, %v346
    %s348 = scalar_lea.vmem %s0, 8
    %v349 = vld [vmem:[%s348] sm:$0xff]
    %v350 = vpack.c.bf16 %v347, %v347
    %351 = vmatprep.subr.bf16.mxu0 %v149
    %352 = vmatpush1.bf16.msra.mxu0 %v148
    %353 = vmatprep.subr.bf16.mxu0 %v153
    %354 = vmatpush1.bf16.msra.mxu0 %v152
    %355 = vmatprep.subr.bf16.mxu0 %v157
    %356 = vmatpush1.bf16.msra.mxu0 %v156
    %357 = vmatprep.subr.bf16.mxu0 %v161
    %358 = vmatpush1.bf16.msra.mxu0 %v160
    %359 = vmatprep.subr.bf16.mxu0 %v165
    %360 = vmatpush1.bf16.msra.mxu0 %v164
    %361 = vmatprep.subr.bf16.mxu0 %v169
    %362 = vmatpush1.bf16.msra.mxu0 %v168
    %363 = vmatprep.subr.bf16.mxu0 %v173
    %364 = vmatpush1.bf16.msra.mxu0 %v172
    %365 = vmatprep.subr.bf16.mxu0 %v177
    %366 = vmatpush1.bf16.msra.mxu0 %v176
    %367 = vmatprep.subr.bf16.mxu0 0
    %368 = vmatpush1.bf16.msra.mxu0 0
    %369 = vmatprep.subr.bf16.mxu0 0
    %370 = vmatpush1.bf16.msra.mxu0 0
    %371 = vmatprep.subr.bf16.mxu0 0
    %372 = vmatpush1.bf16.msra.mxu0 0
    %373 = vmatprep.subr.bf16.mxu0 0
    %374 = vmatpush1.bf16.msra.mxu0 0
    %375 = vmatprep.subr.bf16.mxu0 0
    %376 = vmatpush1.bf16.msra.mxu0 0
    %377 = vmatprep.subr.bf16.mxu0 0
    %378 = vmatpush1.bf16.msra.mxu0 0
    %379 = vmatprep.subr.bf16.mxu0 0
    %380 = vmatpush1.bf16.msra.mxu0 0
    %381 = vmatprep.subr.bf16.mxu0 0
    %382 = vmatpush1.bf16.msra.mxu0 0
    %383 = vmatprep.mubr.bf16.mxu0 0
    %384 = vmatmul.mubr.bf16.gmra.mrb[0].mxu0 %v350
    %v385 = vpop.f32.mrb[0].mxu0
    %v386 = vadd.f32 0.0, %v385
    %v387 = vpop.f32.mrb[0].mxu0
    %v388 = vadd.f32 0.0, %v387
    %v389 = vpop.f32.mrb[0].mxu0
    %v390 = vpop.f32.mrb[0].mxu0
    %391 = vdwg.mxu0
    %392 = vmatprep.subr.bf16.mxu0 %v151
    %393 = vmatpush1.bf16.msra.mxu0 %v150
    %394 = vmatprep.subr.bf16.mxu0 %v155
    %395 = vmatpush1.bf16.msra.mxu0 %v154
    %396 = vmatprep.subr.bf16.mxu0 %v159
    %397 = vmatpush1.bf16.msra.mxu0 %v158
    %398 = vmatprep.subr.bf16.mxu0 %v163
    %399 = vmatpush1.bf16.msra.mxu0 %v162
    %400 = vmatprep.subr.bf16.mxu0 %v167
    %401 = vmatpush1.bf16.msra.mxu0 %v166
    %402 = vmatprep.subr.bf16.mxu0 %v171
    %403 = vmatpush1.bf16.msra.mxu0 %v170
    %404 = vmatprep.subr.bf16.mxu0 %v175
    %405 = vmatpush1.bf16.msra.mxu0 %v174
    %406 = vmatprep.subr.bf16.mxu0 %v179
    %407 = vmatpush1.bf16.msra.mxu0 %v178
    %408 = vmatprep.subr.bf16.mxu0 0
    %409 = vmatpush1.bf16.msra.mxu0 0
    %410 = vmatprep.subr.bf16.mxu0 0
    %411 = vmatpush1.bf16.msra.mxu0 0
    %412 = vmatprep.subr.bf16.mxu0 0
    %413 = vmatpush1.bf16.msra.mxu0 0
    %414 = vmatprep.subr.bf16.mxu0 0
    %415 = vmatpush1.bf16.msra.mxu0 0
    %416 = vmatprep.subr.bf16.mxu0 0
    %417 = vmatpush1.bf16.msra.mxu0 0
    %418 = vmatprep.subr.bf16.mxu0 0
    %419 = vmatpush1.bf16.msra.mxu0 0
    %420 = vmatprep.subr.bf16.mxu0 0
    %421 = vmatpush1.bf16.msra.mxu0 0
    %422 = vmatprep.subr.bf16.mxu0 0
    %423 = vmatpush1.bf16.msra.mxu0 0
    %424 = vmatprep.mubr.bf16.mxu0 0
    %425 = vmatmul.mubr.bf16.gmra.mrb[0].mxu0 %v350
    %v426 = vpop.f32.mrb[0].mxu0
    %v427 = vadd.f32 0.0, %v426
    %v428 = vpop.f32.mrb[0].mxu0
    %v429 = vadd.f32 0.0, %v428
    %v430 = vpop.f32.mrb[0].mxu0
    %v431 = vpop.f32.mrb[0].mxu0
    %432 = vdwg.mxu0
    %v437 = vcombine.low %v386, %v388
    %v438 = vcombine.low %v427, %v429
    %v440 = vunpack.c.l.s4 1983009808
    %v441 = vunpack.c.0.s8 %v440
    %v442 = vlaneseq
    %v443 = vshrl.u32 %v442, 7
    %v444 = vsub.s32 %v441, %v443
    %v445 = vrot.slane %v437, %v444
    %v447 = vunpack.c.l.s4 1983009808
    %v448 = vunpack.c.0.s8 %v447
    %v449 = vlaneseq
    %v450 = vshrl.u32 %v449, 7
    %v451 = vsub.s32 %v448, %v450
    %v452 = vrot.slane %v438, %v451
    %v453 = vcombine.low %v445, %v452
    %v455 = vadd.f32 %v349, %v453
    %v456 = vxor.u32 %v455, 2147483648
    %v457 = vmul.f32 %v456, 1.442695
    %v458 = vpow.pop %v457
    %v459 = vadd.f32 %v458, 1.0
    %v460 = vrcp.pop %v459
    %v461 = vmul.f32 1.0, %v460
    %v463 = vrot.slane %v455, 2
    %v465 = vxor.u32 %v463, 2147483648
    %v466 = vmul.f32 %v465, 1.442695
    %v467 = vpow.pop %v466
    %v468 = vadd.f32 %v467, 1.0
    %v469 = vrcp.pop %v468
    %v470 = vmul.f32 1.0, %v469
    %v471 = vrot.slane %v455, 4
    %v473 = vtanh.pop %v471
    %v474 = vrot.slane %v455, 6
    %v476 = vxor.u32 %v474, 2147483648
    %v477 = vmul.f32 %v476, 1.442695
    %v478 = vpow.pop %v477
    %v479 = vadd.f32 %v478, 1.0
    %v480 = vrcp.pop %v479
    %v481 = vmul.f32 1.0, %v480
    %v482 = vmul.f32 %v470, %v345
    %v483 = vmul.f32 %v461, %v473
    %v484 = vadd.f32 %v482, %v483
    %v485 = vtanh.pop %v484
    %v486 = vmul.f32 %v481, %v485
    %s487 = scalar_lea.vmem %s0, 16
    %v488 = vld [vmem:[%s487] sm:$0xff]
    %v489 = vpack.c.bf16 %v486, %v486
    %490 = vmatprep.subr.bf16.mxu0 %v149
    %491 = vmatpush1.bf16.msra.mxu0 %v148
    %492 = vmatprep.subr.bf16.mxu0 %v153
    %493 = vmatpush1.bf16.msra.mxu0 %v152
    %494 = vmatprep.subr.bf16.mxu0 %v157
    %495 = vmatpush1.bf16.msra.mxu0 %v156
    %496 = vmatprep.subr.bf16.mxu0 %v161
    %497 = vmatpush1.bf16.msra.mxu0 %v160
    %498 = vmatprep.subr.bf16.mxu0 %v165
    %499 = vmatpush1.bf16.msra.mxu0 %v164
    %500 = vmatprep.subr.bf16.mxu0 %v169
    %501 = vmatpush1.bf16.msra.mxu0 %v168
    %502 = vmatprep.subr.bf16.mxu0 %v173
    %503 = vmatpush1.bf16.msra.mxu0 %v172
    %504 = vmatprep.subr.bf16.mxu0 %v177
    %505 = vmatpush1.bf16.msra.mxu0 %v176
    %506 = vmatprep.subr.bf16.mxu0 0
    %507 = vmatpush1.bf16.msra.mxu0 0
    %508 = vmatprep.subr.bf16.mxu0 0
    %509 = vmatpush1.bf16.msra.mxu0 0
    %510 = vmatprep.subr.bf16.mxu0 0
    %511 = vmatpush1.bf16.msra.mxu0 0
    %512 = vmatprep.subr.bf16.mxu0 0
    %513 = vmatpush1.bf16.msra.mxu0 0
    %514 = vmatprep.subr.bf16.mxu0 0
    %515 = vmatpush1.bf16.msra.mxu0 0
    %516 = vmatprep.subr.bf16.mxu0 0
    %517 = vmatpush1.bf16.msra.mxu0 0
    %518 = vmatprep.subr.bf16.mxu0 0
    %519 = vmatpush1.bf16.msra.mxu0 0
    %520 = vmatprep.subr.bf16.mxu0 0
    %521 = vmatpush1.bf16.msra.mxu0 0
    %522 = vmatprep.mubr.bf16.mxu0 0
    %523 = vmatmul.mubr.bf16.gmra.mrb[0].mxu0 %v489
    %v524 = vpop.f32.mrb[0].mxu0
    %v525 = vadd.f32 0.0, %v524
    %v526 = vpop.f32.mrb[0].mxu0
    %v527 = vadd.f32 0.0, %v526
    %v528 = vpop.f32.mrb[0].mxu0
    %v529 = vpop.f32.mrb[0].mxu0
    %530 = vdwg.mxu0
    %531 = vmatprep.subr.bf16.mxu0 %v151
    %532 = vmatpush1.bf16.msra.mxu0 %v150
    %533 = vmatprep.subr.bf16.mxu0 %v155
    %534 = vmatpush1.bf16.msra.mxu0 %v154
    %535 = vmatprep.subr.bf16.mxu0 %v159
    %536 = vmatpush1.bf16.msra.mxu0 %v158
    %537 = vmatprep.subr.bf16.mxu0 %v163
    %538 = vmatpush1.bf16.msra.mxu0 %v162
    %539 = vmatprep.subr.bf16.mxu0 %v167
    %540 = vmatpush1.bf16.msra.mxu0 %v166
    %541 = vmatprep.subr.bf16.mxu0 %v171
    %542 = vmatpush1.bf16.msra.mxu0 %v170
    %543 = vmatprep.subr.bf16.mxu0 %v175
    %544 = vmatpush1.bf16.msra.mxu0 %v174
    %545 = vmatprep.subr.bf16.mxu0 %v179
    %546 = vmatpush1.bf16.msra.mxu0 %v178
    %547 = vmatprep.subr.bf16.mxu0 0
    %548 = vmatpush1.bf16.msra.mxu0 0
    %549 = vmatprep.subr.bf16.mxu0 0
    %550 = vmatpush1.bf16.msra.mxu0 0
    %551 = vmatprep.subr.bf16.mxu0 0
    %552 = vmatpush1.bf16.msra.mxu0 0
    %553 = vmatprep.subr.bf16.mxu0 0
    %554 = vmatpush1.bf16.msra.mxu0 0
    %555 = vmatprep.subr.bf16.mxu0 0
    %556 = vmatpush1.bf16.msra.mxu0 0
    %557 = vmatprep.subr.bf16.mxu0 0
    %558 = vmatpush1.bf16.msra.mxu0 0
    %559 = vmatprep.subr.bf16.mxu0 0
    %560 = vmatpush1.bf16.msra.mxu0 0
    %561 = vmatprep.subr.bf16.mxu0 0
    %562 = vmatpush1.bf16.msra.mxu0 0
    %563 = vmatprep.mubr.bf16.mxu0 0
    %564 = vmatmul.mubr.bf16.gmra.mrb[0].mxu0 %v489
    %v565 = vpop.f32.mrb[0].mxu0
    %v566 = vadd.f32 0.0, %v565
    %v567 = vpop.f32.mrb[0].mxu0
    %v568 = vadd.f32 0.0, %v567
    %v569 = vpop.f32.mrb[0].mxu0
    %v570 = vpop.f32.mrb[0].mxu0
    %571 = vdwg.mxu0
    %v576 = vcombine.low %v525, %v527
    %v577 = vcombine.low %v566, %v568
    %v579 = vunpack.c.l.s4 1983009808
    %v580 = vunpack.c.0.s8 %v579
    %v581 = vlaneseq
    %v582 = vshrl.u32 %v581, 7
    %v583 = vsub.s32 %v580, %v582
    %v584 = vrot.slane %v576, %v583
    %v586 = vunpack.c.l.s4 1983009808
    %v587 = vunpack.c.0.s8 %v586
    %v588 = vlaneseq
    %v589 = vshrl.u32 %v588, 7
    %v590 = vsub.s32 %v587, %v589
    %v591 = vrot.slane %v577, %v590
    %v592 = vcombine.low %v584, %v591
    %v594 = vadd.f32 %v488, %v592
    %v595 = vxor.u32 %v594, 2147483648
    %v596 = vmul.f32 %v595, 1.442695
    %v597 = vpow.pop %v596
    %v598 = vadd.f32 %v597, 1.0
    %v599 = vrcp.pop %v598
    %v600 = vmul.f32 1.0, %v599
    %v602 = vrot.slane %v594, 2
    %v604 = vxor.u32 %v602, 2147483648
    %v605 = vmul.f32 %v604, 1.442695
    %v606 = vpow.pop %v605
    %v607 = vadd.f32 %v606, 1.0
    %v608 = vrcp.pop %v607
    %v609 = vmul.f32 1.0, %v608
    %v610 = vrot.slane %v594, 4
    %v612 = vtanh.pop %v610
    %v613 = vrot.slane %v594, 6
    %v615 = vxor.u32 %v613, 2147483648
    %v616 = vmul.f32 %v615, 1.442695
    %v617 = vpow.pop %v616
    %v618 = vadd.f32 %v617, 1.0
    %v619 = vrcp.pop %v618
    %v620 = vmul.f32 1.0, %v619
    %v621 = vmul.f32 %v609, %v484
    %v622 = vmul.f32 %v600, %v612
    %v623 = vadd.f32 %v621, %v622
    %v624 = vtanh.pop %v623
    %v625 = vmul.f32 %v620, %v624
    %s626 = scalar_lea.vmem %s0, 24
    %v627 = vld [vmem:[%s626] sm:$0xff]
    %v628 = vpack.c.bf16 %v625, %v625
    %629 = vmatprep.subr.bf16.mxu0 %v149
    %630 = vmatpush1.bf16.msra.mxu0 %v148
    %631 = vmatprep.subr.bf16.mxu0 %v153
    %632 = vmatpush1.bf16.msra.mxu0 %v152
    %633 = vmatprep.subr.bf16.mxu0 %v157
    %634 = vmatpush1.bf16.msra.mxu0 %v156
    %635 = vmatprep.subr.bf16.mxu0 %v161
    %636 = vmatpush1.bf16.msra.mxu0 %v160
    %637 = vmatprep.subr.bf16.mxu0 %v165
    %638 = vmatpush1.bf16.msra.mxu0 %v164
    %639 = vmatprep.subr.bf16.mxu0 %v169
    %640 = vmatpush1.bf16.msra.mxu0 %v168
    %641 = vmatprep.subr.bf16.mxu0 %v173
    %642 = vmatpush1.bf16.msra.mxu0 %v172
    %643 = vmatprep.subr.bf16.mxu0 %v177
    %644 = vmatpush1.bf16.msra.mxu0 %v176
    %645 = vmatprep.subr.bf16.mxu0 0
    %646 = vmatpush1.bf16.msra.mxu0 0
    %647 = vmatprep.subr.bf16.mxu0 0
    %648 = vmatpush1.bf16.msra.mxu0 0
    %649 = vmatprep.subr.bf16.mxu0 0
    %650 = vmatpush1.bf16.msra.mxu0 0
    %651 = vmatprep.subr.bf16.mxu0 0
    %652 = vmatpush1.bf16.msra.mxu0 0
    %653 = vmatprep.subr.bf16.mxu0 0
    %654 = vmatpush1.bf16.msra.mxu0 0
    %655 = vmatprep.subr.bf16.mxu0 0
    %656 = vmatpush1.bf16.msra.mxu0 0
    %657 = vmatprep.subr.bf16.mxu0 0
    %658 = vmatpush1.bf16.msra.mxu0 0
    %659 = vmatprep.subr.bf16.mxu0 0
    %660 = vmatpush1.bf16.msra.mxu0 0
    %661 = vmatprep.mubr.bf16.mxu0 0
    %662 = vmatmul.mubr.bf16.gmra.mrb[0].mxu0 %v628
    %v663 = vpop.f32.mrb[0].mxu0
    %v664 = vadd.f32 0.0, %v663
    %v665 = vpop.f32.mrb[0].mxu0
    %v666 = vadd.f32 0.0, %v665
    %v667 = vpop.f32.mrb[0].mxu0
    %v668 = vpop.f32.mrb[0].mxu0
    %669 = vdwg.mxu0
    %670 = vmatprep.subr.bf16.mxu0 %v151
    %671 = vmatpush1.bf16.msra.mxu0 %v150
    %672 = vmatprep.subr.bf16.mxu0 %v155
    %673 = vmatpush1.bf16.msra.mxu0 %v154
    %674 = vmatprep.subr.bf16.mxu0 %v159
    %675 = vmatpush1.bf16.msra.mxu0 %v158
    %676 = vmatprep.subr.bf16.mxu0 %v163
    %677 = vmatpush1.bf16.msra.mxu0 %v162
    %678 = vmatprep.subr.bf16.mxu0 %v167
    %679 = vmatpush1.bf16.msra.mxu0 %v166
    %680 = vmatprep.subr.bf16.mxu0 %v171
    %681 = vmatpush1.bf16.msra.mxu0 %v170
    %682 = vmatprep.subr.bf16.mxu0 %v175
    %683 = vmatpush1.bf16.msra.mxu0 %v174
    %684 = vmatprep.subr.bf16.mxu0 %v179
    %685 = vmatpush1.bf16.msra.mxu0 %v178
    %686 = vmatprep.subr.bf16.mxu0 0
    %687 = vmatpush1.bf16.msra.mxu0 0
    %688 = vmatprep.subr.bf16.mxu0 0
    %689 = vmatpush1.bf16.msra.mxu0 0
    %690 = vmatprep.subr.bf16.mxu0 0
    %691 = vmatpush1.bf16.msra.mxu0 0
    %692 = vmatprep.subr.bf16.mxu0 0
    %693 = vmatpush1.bf16.msra.mxu0 0
    %694 = vmatprep.subr.bf16.mxu0 0
    %695 = vmatpush1.bf16.msra.mxu0 0
    %696 = vmatprep.subr.bf16.mxu0 0
    %697 = vmatpush1.bf16.msra.mxu0 0
    %698 = vmatprep.subr.bf16.mxu0 0
    %699 = vmatpush1.bf16.msra.mxu0 0
    %700 = vmatprep.subr.bf16.mxu0 0
    %701 = vmatpush1.bf16.msra.mxu0 0
    %702 = vmatprep.mubr.bf16.mxu0 0
    %703 = vmatmul.mubr.bf16.gmra.mrb[0].mxu0 %v628
    %v704 = vpop.f32.mrb[0].mxu0
    %v705 = vadd.f32 0.0, %v704
    %v706 = vpop.f32.mrb[0].mxu0
    %v707 = vadd.f32 0.0, %v706
    %v708 = vpop.f32.mrb[0].mxu0
    %v709 = vpop.f32.mrb[0].mxu0
    %710 = vdwg.mxu0
    %v715 = vcombine.low %v664, %v666
    %v716 = vcombine.low %v705, %v707
    %v718 = vunpack.c.l.s4 1983009808
    %v719 = vunpack.c.0.s8 %v718
    %v720 = vlaneseq
    %v721 = vshrl.u32 %v720, 7
    %v722 = vsub.s32 %v719, %v721
    %v723 = vrot.slane %v715, %v722
    %v725 = vunpack.c.l.s4 1983009808
    %v726 = vunpack.c.0.s8 %v725
    %v727 = vlaneseq
    %v728 = vshrl.u32 %v727, 7
    %v729 = vsub.s32 %v726, %v728
    %v730 = vrot.slane %v716, %v729
    %v731 = vcombine.low %v723, %v730
    %v733 = vadd.f32 %v627, %v731
    %v734 = vxor.u32 %v733, 2147483648
    %v735 = vmul.f32 %v734, 1.442695
    %v736 = vpow.pop %v735
    %v737 = vadd.f32 %v736, 1.0
    %v738 = vrcp.pop %v737
    %v739 = vmul.f32 1.0, %v738
    %v741 = vrot.slane %v733, 2
    %v743 = vxor.u32 %v741, 2147483648
    %v744 = vmul.f32 %v743, 1.442695
    %v745 = vpow.pop %v744
    %v746 = vadd.f32 %v745, 1.0
    %v747 = vrcp.pop %v746
    %v748 = vmul.f32 1.0, %v747
    %v749 = vrot.slane %v733, 4
    %v751 = vtanh.pop %v749
    %v752 = vrot.slane %v733, 6
    %v754 = vxor.u32 %v752, 2147483648
    %v755 = vmul.f32 %v754, 1.442695
    %v756 = vpow.pop %v755
    %v757 = vadd.f32 %v756, 1.0
    %v758 = vrcp.pop %v757
    %v759 = vmul.f32 1.0, %v758
    %v760 = vmul.f32 %v748, %v623
    %v761 = vmul.f32 %v739, %v751
    %v762 = vadd.f32 %v760, %v761
    %v763 = vtanh.pop %v762
    %v764 = vmul.f32 %v759, %v763
    %v765 = vmul.f32 %v347, %v764
    %vm766 = vcmask 1041408
    %v767 = vsel %vm766, %v765, 0.0
    %768 = vadd.xlane.f32.xlu0 %v767
    %v769 = vpop.xlane.xlu0 %768
    %v770 = vmul.f32 %v486, %v764
    %v771 = vsel %vm766, %v770, 0.0
    %772 = vadd.xlane.f32.xlu0 %v771
    %v773 = vpop.xlane.xlu0 %772
    %v774 = vmul.f32 %v625, %v764
    %v775 = vsel %vm766, %v774, 0.0
    %776 = vadd.xlane.f32.xlu0 %v775
    %v777 = vpop.xlane.xlu0 %776
    %v778 = vmul.f32 %v764, %v764
    %v779 = vsel %vm766, %v778, 0.0
    %780 = vadd.xlane.f32.xlu0 %v779
    %v781 = vpop.xlane.xlu0 %780
    %vm782 = vcmask 7168
    %v783 = vsel %vm782, %v769, %v773
    %vm784 = vcmask 15360
    %v785 = vsel %vm784, %v783, %v777
    %vm786 = vcmask 23552
    %v787 = vsel %vm786, %v785, %v781
    %vm788 = vcmask 25600
    %v789 = vsel %vm788, %v787, -inf
    %790 = vmax.xlane.f32.xlu0 %v789
    %v791 = vpop.xlane.xlu0 %790
    %v792 = vsub.f32 %v787, %v791
    %v793 = vmul.f32 %v792, 1.442695
    %v794 = vpow.pop %v793
    %v795 = vsel %vm788, %v794, 0.0
    %796 = vadd.xlane.f32.xlu0 %v795
    %v797 = vpop.xlane.xlu0 %796
    %v798 = vrcp.pop %v797
    %v799 = vmul.f32 %v794, %v798
    %801 = vset.pattern.permute.xlu0 0
    %802 = vperm.xlu0 %801, %v799
    %v803 = vpop.permute.xlu0 %802
    %v805 = vmul.f32 %v803, %v347
    %v806 = vadd.f32 %v805, 0.0
    %807 = vset.pattern.permute.xlu0 1
    %808 = vperm.xlu0 %807, %v799
    %v809 = vpop.permute.xlu0 %808
    %v811 = vmul.f32 %v809, %v486
    %v812 = vadd.f32 %v806, %v811
    %813 = vset.pattern.permute.xlu0 2
    %814 = vperm.xlu0 %813, %v799
    %v815 = vpop.permute.xlu0 %814
    %v817 = vmul.f32 %v815, %v625
    %v818 = vadd.f32 %v812, %v817
    %819 = vset.pattern.permute.xlu0 3
    %820 = vperm.xlu0 %819, %v799
    %v821 = vpop.permute.xlu0 %820
    %v823 = vmul.f32 %v821, %v764
    %v824 = vadd.f32 %v818, %v823
    %v825 = vpack.c.bf16 %v824, %v824
    %v826 = vld [vmem:[%s2] sm:$0xf]
    %v827 = vld [vmem:[%s2 + $0x4] sm:$0xf]
    %v828 = vld [vmem:[%s2 + $0x8] sm:$0xf]
    %v829 = vld [vmem:[%s2 + $0xc] sm:$0xf]
    %v830 = vld [vmem:[%s2 + $0x10] sm:$0xf]
    %v831 = vld [vmem:[%s2 + $0x14] sm:$0xf]
    %v832 = vld [vmem:[%s2 + $0x18] sm:$0xf]
    %v833 = vld [vmem:[%s2 + $0x1c] sm:$0xf]
    %v834 = vld [vmem:[%s2 + $0x20] sm:$0xf]
    %v835 = vld [vmem:[%s2 + $0x24] sm:$0xf]
    %v836 = vld [vmem:[%s2 + $0x28] sm:$0xf]
    %v837 = vld [vmem:[%s2 + $0x2c] sm:$0xf]
    %v838 = vld [vmem:[%s2 + $0x30] sm:$0xf]
    %v839 = vld [vmem:[%s2 + $0x34] sm:$0xf]
    %v840 = vld [vmem:[%s2 + $0x38] sm:$0xf]
    %v841 = vld [vmem:[%s2 + $0x3c] sm:$0xf]
    %v842 = vld [vmem:[%s3] sm:$0x1]
    %v844 = vlaneseq
    %v845 = vshrl.u32 %v844, 7
    %v846 = vsub.s32 0, %v845
    %v847 = vrot.slane %v842, %v846
    %v865 = vunpack.c.l.b16 %v826
    %v866 = vunpack.c.l.b16 %v827
    %v867 = vunpack.c.l.b16 %v828
    %v868 = vunpack.c.l.b16 %v829
    %v869 = vunpack.c.l.b16 %v830
    %v870 = vunpack.c.l.b16 %v831
    %v871 = vunpack.c.l.b16 %v832
    %v872 = vunpack.c.l.b16 %v833
    %v873 = vunpack.c.l.b16 %v834
    %v874 = vunpack.c.l.b16 %v835
    %v875 = vunpack.c.l.b16 %v836
    %v876 = vunpack.c.l.b16 %v837
    %v877 = vunpack.c.l.b16 %v838
    %v878 = vunpack.c.l.b16 %v839
    %v879 = vunpack.c.l.b16 %v840
    %v880 = vunpack.c.l.b16 %v841
    %v881 = vpack.c.b16 %v866, %v865
    %v882 = vpack.c.b16 %v868, %v867
    %v883 = vpack.c.b16 %v870, %v869
    %v884 = vpack.c.b16 %v872, %v871
    %v885 = vpack.c.b16 %v874, %v873
    %v886 = vpack.c.b16 %v876, %v875
    %v887 = vpack.c.b16 %v878, %v877
    %v888 = vpack.c.b16 %v880, %v879
    %897 = vmatprep.subr.bf16.mxu0 0
    %898 = vmatpush1.bf16.msra.mxu0 %v881
    %899 = vmatprep.subr.bf16.mxu0 0
    %900 = vmatpush1.bf16.msra.mxu0 %v882
    %901 = vmatprep.subr.bf16.mxu0 0
    %902 = vmatpush1.bf16.msra.mxu0 %v883
    %903 = vmatprep.subr.bf16.mxu0 0
    %904 = vmatpush1.bf16.msra.mxu0 %v884
    %905 = vmatprep.subr.bf16.mxu0 0
    %906 = vmatpush1.bf16.msra.mxu0 %v885
    %907 = vmatprep.subr.bf16.mxu0 0
    %908 = vmatpush1.bf16.msra.mxu0 %v886
    %909 = vmatprep.subr.bf16.mxu0 0
    %910 = vmatpush1.bf16.msra.mxu0 %v887
    %911 = vmatprep.subr.bf16.mxu0 0
    %912 = vmatpush1.bf16.msra.mxu0 %v888
    %913 = vmatprep.subr.bf16.mxu0 0
    %914 = vmatpush1.bf16.msra.mxu0 0
    %915 = vmatprep.subr.bf16.mxu0 0
    %916 = vmatpush1.bf16.msra.mxu0 0
    %917 = vmatprep.subr.bf16.mxu0 0
    %918 = vmatpush1.bf16.msra.mxu0 0
    %919 = vmatprep.subr.bf16.mxu0 0
    %920 = vmatpush1.bf16.msra.mxu0 0
    %921 = vmatprep.subr.bf16.mxu0 0
    %922 = vmatpush1.bf16.msra.mxu0 0
    %923 = vmatprep.subr.bf16.mxu0 0
    %924 = vmatpush1.bf16.msra.mxu0 0
    %925 = vmatprep.subr.bf16.mxu0 0
    %926 = vmatpush1.bf16.msra.mxu0 0
    %927 = vmatprep.subr.bf16.mxu0 0
    %928 = vmatpush1.bf16.msra.mxu0 0
    %929 = vmatprep.mubr.bf16.mxu0 0
    %930 = vmatmul.mubr.bf16.gmra.mrb[0].mxu0 %v825
    %v931 = vpop.f32.mrb[0].mxu0
    %v932 = vadd.f32 %v847, %v931
    %v933 = vpop.f32.mrb[0].mxu0
    %v934 = vpop.f32.mrb[0].mxu0
    %v935 = vpop.f32.mrb[0].mxu0
    %936 = vdwg.mxu0
    %vm937 = vcmask 9216
    %938 = vst.msk [vmem:[#allocation2] sm:$0x3] %vm937, %v932
    // Predicated region
    $region18: #{forward.3} parent=1 // pred_check
      _
    $region19: #{forward.3} parent=1 // pred_check_branch
      %940 = sbr.rel (0) target = $region21
    $region20: #{forward.3} parent=1 // pred_region
      %s942 = ssub.s32 32, 32
      %943 = vsyncadd [#allocation3], %s942
      %s945 = sshll.u32 [#allocation2], 4
      %s946 = int_to_ptr.vmem [resolvable:$true] %s945
      %948 = dma.vmem_to_hbm [thread:$0]  %s946, 32, %s4, [#allocation3]
    $region21: #{forward.3} parent=1 // pred_fallthru
      _
    // Predicated region
    $region22: #{forward.3} parent=1 // pred_check
      _
    $region23: #{forward.3} parent=1 // pred_check_branch
      %950 = sbr.rel (0) target = $region25
    $region24: #{forward.3} parent=1 // pred_region
      %951 = dma.done [#allocation3], 32
    $region25: #{forward.3} parent=1 // pred_fallthru
      _
    %952 = vsyncpa [#allocation3], 1

// kernel: forward.2
$region0: #{forward.2}
  #allocation0 [shape = 'u32[]', space=smem, size = 0x4, offset = 0x4, fixed_abs, tag = 'smem constant byte address 0x4 - core index']
  #allocation1 [shape = 'u32[144,128]{1,0:T(1,128)}', space=vmem, size = 0x12000, scoped, tag = 'internal scratch']
  %s0 = inlined_call_operand.vmem [shape: s32[2,36,1], index: 0, kind: input, shape index: {}]
  %s1 = inlined_call_operand.vmem [shape: bf16[128,128], index: 1, kind: input, shape index: {}]
  %s2 = inlined_call_operand.hbm [shape: bf16[3,128,128], index: 2, kind: input, shape index: {}]
  %s3 = inlined_call_operand.vmem [shape: f32[1,128], index: 3, kind: input, shape index: {}]
  %s4 = inlined_call_operand.vmem [shape: f32[1,128], index: 4, kind: input, shape index: {}]
  %s5 = inlined_call_operand.vmem [shape: f32[1,128], index: 5, kind: input, shape index: {}]
  %s6 = inlined_call_operand.hbm [shape: bf16[3,128,128], index: 6, kind: input, shape index: {}]
  %s7 = inlined_call_operand.vmem [shape: f32[1,128], index: 7, kind: input, shape index: {}]
  %s8 = inlined_call_operand.vmem [shape: f32[1,128], index: 8, kind: input, shape index: {}]
  %s9 = inlined_call_operand.vmem [shape: f32[1,128], index: 9, kind: input, shape index: {}]
  %s10 = inlined_call_operand.hbm [shape: bf16[128,512], index: 10, kind: input, shape index: {}]
  %s11 = inlined_call_operand.vmem [shape: f32[1,512], index: 11, kind: input, shape index: {}]
  %s12 = inlined_call_operand.vmem [shape: f32[2,4,512], index: 12, kind: output, shape index: {}]
  %s13 = sld [smem:[#allocation0]]
  $region93: #{forward.2} parent=0
    _
  %s15 = ssub.s32 1, %s13
  %s16 = scalar_select 0, %s15, %s13
  $region1: #{forward.2} parent=0
    #allocation2 [shape = 'u8[98304]{0}', space=vmem, size = 0x18000, scoped, tag = 'input window, operand 2, single buffered']
    #allocation3 [shape = 's32[2]{0}', space=sflag, size = 0x8, scoped, tag = 'scoped memory for forward.2']
    #allocation4 [shape = 'u8[98304]{0}', space=vmem, size = 0x18000, scoped, tag = 'input window, operand 6, single buffered']
    #allocation5 [shape = 's32[1]{0}', space=sflag, size = 0x4, scoped, tag = 'scoped memory for forward.2']
    #allocation6 [shape = 'u8[131072]{0}', space=vmem, size = 0x20000, scoped, tag = 'input window, operand 10, single buffered']
    %17 = vsyncpa [#allocation3], 0
    %18 = vsyncpa [#allocation5], 0
    loop: start=0, step=1, limit=4
    $region2: #{forward.2} parent=1 // loop_pre_header
      _
    $region3: #{forward.2} parent=1 // loop_header
      %s20 = sphi 0, %s24
      %p21 = scmp.ge.s32.totalorder %s20, 4
      %s30 = sphi 0, %s32
      %s33 = sphi 0, %s30
      %s34 = sphi 0, %s33
      %s50 = sphi 0, %s34
      %s54 = sphi 0, %s54
      %s56 = sphi 0, %s54
      %s57 = sphi 0, %s56
      %s71 = sphi 0, %s57
      %s75 = sphi 0, %s75
      %s77 = sphi 0, %s75
      %s78 = sphi 0, %s77
      %s92 = sphi 0, %s78
      %s96 = sphi 0, %s96
      %s98 = sphi 0, %s96
      %s99 = sphi 0, %s98
      %s113 = sphi 0, %s99
      %s117 = sphi 0, %s117
      %s119 = sphi 0, %s117
      %s120 = sphi 0, %s119
      %s134 = sphi 0, %s120
      %s138 = sphi 0, %s138
      %s140 = sphi 0, %s138
      %s141 = sphi 0, %s140
      %s155 = sphi 0, %s141
      %s159 = sphi 0, %s159
      %s161 = sphi 0, %s159
      %s162 = sphi 0, %s161
      %s176 = sphi 0, %s162
      %s180 = sphi 0, %s180
      %s182 = sphi 0, %s180
      %s183 = sphi 0, %s182
      %s197 = sphi 0, %s183
      %s201 = sphi 0, %s201
      %s203 = sphi 0, %s201
      %s204 = sphi 0, %s203
      %s218 = sphi 0, %s204
      %s222 = sphi 0, %s222
      %s224 = sphi 0, %s222
      %s225 = sphi 0, %s224
      %s239 = sphi 0, %s225
      %s243 = sphi 0, %s243
      %s245 = sphi 0, %s243
      %s246 = sphi 0, %s245
      %s260 = sphi 0, %s246
      %s264 = sphi 0, %s264
      %s266 = sphi 0, %s264
      %s267 = sphi 0, %s266
      %s281 = sphi 0, %s267
      %s287 = sphi 0, %s289
      %s290 = sphi 0, %s287
      %s291 = sphi 0, %s290
      %s307 = sphi 0, %s291
    $region4: #{forward.2} parent=1 // loop_header_branch
      %23 = sbr.rel (%p21) target = $region8
    $region5: #{forward.2} parent=1 // loop_body
      %s25 = ssub.s32 %s20, 1
      %s26 = ssub.s32 %s20, 2
      %s27 = sadd.s32 %s20, 1
      %s28 = ssub.s32 %s20, %s27
      %p29 = scmp.eq.s32.totalorder %s28, 0
      %s31 = sadd.s32 %s30, 1
      %s32 = scalar_select %p29, %s30, %s31
      %p35 = pneg %p29
      %p36 = scmp.eq.s32.totalorder %s20, 1
      %p37 = por %p35, %p36
      %p38 = scmp.ne.s32.totalorder %s30, %s33
      %p39 = scmp.eq.s32.totalorder %s20, 0
      %p40 = por %p38, %p39
      %p41 = scmp.ne.s32.totalorder %s30, %s33
      %p42 = scmp.eq.s32.totalorder %s25, 1
      %p43 = por %p41, %p42
      %p44 = scmp.ne.s32.totalorder %s33, %s34
      %p45 = scmp.eq.s32.totalorder %s25, 0
      %p46 = por %p44, %p45
      %p47 = scmp.ne.s32.totalorder %s33, %s34
      %p48 = scmp.eq.s32.totalorder %s26, 1
      %p49 = por %p47, %p48
      %p51 = scmp.ne.s32.totalorder %s34, %s50
      %p52 = scmp.eq.s32.totalorder %s26, 0
      %p53 = por %p51, %p52
      %s55 = sadd.s32 %s54, 1
      %p58 = scmp.eq.s32.totalorder %s20, 1
      %p59 = scmp.ne.s32.totalorder %s54, %s56
      %p60 = scmp.eq.s32.totalorder %s20, 0
      %p61 = por %p59, %p60
      %p62 = scmp.ne.s32.totalorder %s54, %s56
      %p63 = scmp.eq.s32.totalorder %s25, 1
      %p64 = por %p62, %p63
      %p65 = scmp.ne.s32.totalorder %s56, %s57
      %p66 = scmp.eq.s32.totalorder %s25, 0
      %p67 = por %p65, %p66
      %p68 = scmp.ne.s32.totalorder %s56, %s57
      %p69 = scmp.eq.s32.totalorder %s26, 1
      %p70 = por %p68, %p69
      %p72 = scmp.ne.s32.totalorder %s57, %s71
      %p73 = scmp.eq.s32.totalorder %s26, 0
      %p74 = por %p72, %p73
      %s76 = sadd.s32 %s75, 1
      %p79 = scmp.eq.s32.totalorder %s20, 1
      %p80 = scmp.ne.s32.totalorder %s75, %s77
      %p81 = scmp.eq.s32.totalorder %s20, 0
      %p82 = por %p80, %p81
      %p83 = scmp.ne.s32.totalorder %s75, %s77
      %p84 = scmp.eq.s32.totalorder %s25, 1
      %p85 = por %p83, %p84
      %p86 = scmp.ne.s32.totalorder %s77, %s78
      %p87 = scmp.eq.s32.totalorder %s25, 0
      %p88 = por %p86, %p87
      %p89 = scmp.ne.s32.totalorder %s77, %s78
      %p90 = scmp.eq.s32.totalorder %s26, 1
      %p91 = por %p89, %p90
      %p93 = scmp.ne.s32.totalorder %s78, %s92
      %p94 = scmp.eq.s32.totalorder %s26, 0
      %p95 = por %p93, %p94
      %s97 = sadd.s32 %s96, 1
      %p100 = scmp.eq.s32.totalorder %s20, 1
      %p101 = scmp.ne.s32.totalorder %s96, %s98
      %p102 = scmp.eq.s32.totalorder %s20, 0
      %p103 = por %p101, %p102
      %p104 = scmp.ne.s32.totalorder %s96, %s98
      %p105 = scmp.eq.s32.totalorder %s25, 1
      %p106 = por %p104, %p105
      %p107 = scmp.ne.s32.totalorder %s98, %s99
      %p108 = scmp.eq.s32.totalorder %s25, 0
      %p109 = por %p107, %p108
      %p110 = scmp.ne.s32.totalorder %s98, %s99
      %p111 = scmp.eq.s32.totalorder %s26, 1
      %p112 = por %p110, %p111
      %p114 = scmp.ne.s32.totalorder %s99, %s113
      %p115 = scmp.eq.s32.totalorder %s26, 0
      %p116 = por %p114, %p115
      %s118 = sadd.s32 %s117, 1
      %p121 = scmp.eq.s32.totalorder %s20, 1
      %p122 = scmp.ne.s32.totalorder %s117, %s119
      %p123 = scmp.eq.s32.totalorder %s20, 0
      %p124 = por %p122, %p123
      %p125 = scmp.ne.s32.totalorder %s117, %s119
      %p126 = scmp.eq.s32.totalorder %s25, 1
      %p127 = por %p125, %p126
      %p128 = scmp.ne.s32.totalorder %s119, %s120
      %p129 = scmp.eq.s32.totalorder %s25, 0
      %p130 = por %p128, %p129
      %p131 = scmp.ne.s32.totalorder %s119, %s120
      %p132 = scmp.eq.s32.totalorder %s26, 1
      %p133 = por %p131, %p132
      %p135 = scmp.ne.s32.totalorder %s120, %s134
      %p136 = scmp.eq.s32.totalorder %s26, 0
      %p137 = por %p135, %p136
      %s139 = sadd.s32 %s138, 1
      %p142 = scmp.eq.s32.totalorder %s20, 1
      %p143 = scmp.ne.s32.totalorder %s138, %s140
      %p144 = scmp.eq.s32.totalorder %s20, 0
      %p145 = por %p143, %p144
      %p146 = scmp.ne.s32.totalorder %s138, %s140
      %p147 = scmp.eq.s32.totalorder %s25, 1
      %p148 = por %p146, %p147
      %p149 = scmp.ne.s32.totalorder %s140, %s141
      %p150 = scmp.eq.s32.totalorder %s25, 0
      %p151 = por %p149, %p150
      %p152 = scmp.ne.s32.totalorder %s140, %s141
      %p153 = scmp.eq.s32.totalorder %s26, 1
      %p154 = por %p152, %p153
      %p156 = scmp.ne.s32.totalorder %s141, %s155
      %p157 = scmp.eq.s32.totalorder %s26, 0
      %p158 = por %p156, %p157
      %s160 = sadd.s32 %s159, 1
      %p163 = scmp.eq.s32.totalorder %s20, 1
      %p164 = scmp.ne.s32.totalorder %s159, %s161
      %p165 = scmp.eq.s32.totalorder %s20, 0
      %p166 = por %p164, %p165
      %p167 = scmp.ne.s32.totalorder %s159, %s161
      %p168 = scmp.eq.s32.totalorder %s25, 1
      %p169 = por %p167, %p168
      %p170 = scmp.ne.s32.totalorder %s161, %s162
      %p171 = scmp.eq.s32.totalorder %s25, 0
      %p172 = por %p170, %p171
      %p173 = scmp.ne.s32.totalorder %s161, %s162
      %p174 = scmp.eq.s32.totalorder %s26, 1
      %p175 = por %p173, %p174
      %p177 = scmp.ne.s32.totalorder %s162, %s176
      %p178 = scmp.eq.s32.totalorder %s26, 0
      %p179 = por %p177, %p178
      %s181 = sadd.s32 %s180, 1
      %p184 = scmp.eq.s32.totalorder %s20, 1
      %p185 = scmp.ne.s32.totalorder %s180, %s182
      %p186 = scmp.eq.s32.totalorder %s20, 0
      %p187 = por %p185, %p186
      %p188 = scmp.ne.s32.totalorder %s180, %s182
      %p189 = scmp.eq.s32.totalorder %s25, 1
      %p190 = por %p188, %p189
      %p191 = scmp.ne.s32.totalorder %s182, %s183
      %p192 = scmp.eq.s32.totalorder %s25, 0
      %p193 = por %p191, %p192
      %p194 = scmp.ne.s32.totalorder %s182, %s183
      %p195 = scmp.eq.s32.totalorder %s26, 1
      %p196 = por %p194, %p195
      %p198 = scmp.ne.s32.totalorder %s183, %s197
      %p199 = scmp.eq.s32.totalorder %s26, 0
      %p200 = por %p198, %p199
      %s202 = sadd.s32 %s201, 1
      %p205 = scmp.eq.s32.totalorder %s20, 1
      %p206 = scmp.ne.s32.totalorder %s201, %s203
      %p207 = scmp.eq.s32.totalorder %s20, 0
      %p208 = por %p206, %p207
      %p209 = scmp.ne.s32.totalorder %s201, %s203
      %p210 = scmp.eq.s32.totalorder %s25, 1
      %p211 = por %p209, %p210
      %p212 = scmp.ne.s32.totalorder %s203, %s204
      %p213 = scmp.eq.s32.totalorder %s25, 0
      %p214 = por %p212, %p213
      %p215 = scmp.ne.s32.totalorder %s203, %s204
      %p216 = scmp.eq.s32.totalorder %s26, 1
      %p217 = por %p215, %p216
      %p219 = scmp.ne.s32.totalorder %s204, %s218
      %p220 = scmp.eq.s32.totalorder %s26, 0
      %p221 = por %p219, %p220
      %s223 = sadd.s32 %s222, 1
      %p226 = scmp.eq.s32.totalorder %s20, 1
      %p227 = scmp.ne.s32.totalorder %s222, %s224
      %p228 = scmp.eq.s32.totalorder %s20, 0
      %p229 = por %p227, %p228
      %p230 = scmp.ne.s32.totalorder %s222, %s224
      %p231 = scmp.eq.s32.totalorder %s25, 1
      %p232 = por %p230, %p231
      %p233 = scmp.ne.s32.totalorder %s224, %s225
      %p234 = scmp.eq.s32.totalorder %s25, 0
      %p235 = por %p233, %p234
      %p236 = scmp.ne.s32.totalorder %s224, %s225
      %p237 = scmp.eq.s32.totalorder %s26, 1
      %p238 = por %p236, %p237
      %p240 = scmp.ne.s32.totalorder %s225, %s239
      %p241 = scmp.eq.s32.totalorder %s26, 0
      %p242 = por %p240, %p241
      %s244 = sadd.s32 %s243, 1
      %p247 = scmp.eq.s32.totalorder %s20, 1
      %p248 = scmp.ne.s32.totalorder %s243, %s245
      %p249 = scmp.eq.s32.totalorder %s20, 0
      %p250 = por %p248, %p249
      %p251 = scmp.ne.s32.totalorder %s243, %s245
      %p252 = scmp.eq.s32.totalorder %s25, 1
      %p253 = por %p251, %p252
      %p254 = scmp.ne.s32.totalorder %s245, %s246
      %p255 = scmp.eq.s32.totalorder %s25, 0
      %p256 = por %p254, %p255
      %p257 = scmp.ne.s32.totalorder %s245, %s246
      %p258 = scmp.eq.s32.totalorder %s26, 1
      %p259 = por %p257, %p258
      %p261 = scmp.ne.s32.totalorder %s246, %s260
      %p262 = scmp.eq.s32.totalorder %s26, 0
      %p263 = por %p261, %p262
      %s265 = sadd.s32 %s264, 1
      %p268 = scmp.eq.s32.totalorder %s20, 1
      %p269 = scmp.ne.s32.totalorder %s264, %s266
      %p270 = scmp.eq.s32.totalorder %s20, 0
      %p271 = por %p269, %p270
      %p272 = scmp.ne.s32.totalorder %s264, %s266
      %p273 = scmp.eq.s32.totalorder %s25, 1
      %p274 = por %p272, %p273
      %p275 = scmp.ne.s32.totalorder %s266, %s267
      %p276 = scmp.eq.s32.totalorder %s25, 0
      %p277 = por %p275, %p276
      %p278 = scmp.ne.s32.totalorder %s266, %s267
      %p279 = scmp.eq.s32.totalorder %s26, 1
      %p280 = por %p278, %p279
      %p282 = scmp.ne.s32.totalorder %s267, %s281
      %p283 = scmp.eq.s32.totalorder %s26, 0
      %p284 = por %p282, %p283
      %s285 = ssub.s32 %s20, %s27
      %p286 = scmp.eq.s32.totalorder %s285, 0
      %s288 = sadd.s32 %s287, 1
      %s289 = scalar_select %p286, %s287, %s288
      %p292 = pneg %p286
      %p293 = scmp.eq.s32.totalorder %s20, 1
      %p294 = por %p292, %p293
      %p295 = scmp.ne.s32.totalorder %s287, %s290
      %p296 = scmp.eq.s32.totalorder %s20, 0
      %p297 = por %p295, %p296
      %p298 = scmp.ne.s32.totalorder %s287, %s290
      %p299 = scmp.eq.s32.totalorder %s25, 1
      %p300 = por %p298, %p299
      %p301 = scmp.ne.s32.totalorder %s290, %s291
      %p302 = scmp.eq.s32.totalorder %s25, 0
      %p303 = por %p301, %p302
      %p304 = scmp.ne.s32.totalorder %s290, %s291
      %p305 = scmp.eq.s32.totalorder %s26, 1
      %p306 = por %p304, %p305
      %p308 = scmp.ne.s32.totalorder %s291, %s307
      %p309 = scmp.eq.s32.totalorder %s26, 0
      %p310 = por %p308, %p309
      %p311 = scmp.le.s32.totalorder 1, %s20
      %p312 = scmp.lt.s32.totalorder %s20, 3
      %p313 = pnand %p311, %p312
      %p314 = pneg %p313
      // Predicated region
      $region9: #{forward.2} parent=5 // pred_check
        _
      $region10: #{forward.2} parent=5 // pred_check_branch
        %316 = sbr.rel (%p313) target = $region12
      $region11: #{forward.2} parent=5 // pred_region
        %s317 = ssub.s32 %s20, 1
        // Predicated region
        $region13: #{forward.2} parent=11 // pred_check
          %p318 = pneg %p67
        $region14: #{forward.2} parent=11 // pred_check_branch
          %320 = sbr.rel (%p318) target = $region16
        $region15: #{forward.2} parent=11 // pred_region
          _
        $region16: #{forward.2} parent=11 // pred_fallthru
          _
        // Predicated region
        $region17: #{forward.2} parent=11 // pred_check
          %p321 = pneg %p88
        $region18: #{forward.2} parent=11 // pred_check_branch
          %323 = sbr.rel (%p321) target = $region20
        $region19: #{forward.2} parent=11 // pred_region
          %s325 = ssub.s32 3072, 3072
          %326 = vsyncadd [#allocation3], %s325
          %s327 = sshll.u32 [#allocation2], 4
          %s328 = int_to_ptr.vmem [resolvable:$true] %s327
          %333 = dma.hbm_to_vmem [thread:$0]  %s2, 3072, %s328, [#allocation3], 64, 64, 4
        $region20: #{forward.2} parent=11 // pred_fallthru
          _
        // Predicated region
        $region21: #{forward.2} parent=11 // pred_check
          %p334 = pneg %p109
        $region22: #{forward.2} parent=11 // pred_check_branch
          %336 = sbr.rel (%p334) target = $region24
        $region23: #{forward.2} parent=11 // pred_region
          _
        $region24: #{forward.2} parent=11 // pred_fallthru
          _
        // Predicated region
        $region25: #{forward.2} parent=11 // pred_check
          %p337 = pneg %p130
        $region26: #{forward.2} parent=11 // pred_check_branch
          %339 = sbr.rel (%p337) target = $region28
        $region27: #{forward.2} parent=11 // pred_region
          _
        $region28: #{forward.2} parent=11 // pred_fallthru
          _
        // Predicated region
        $region29: #{forward.2} parent=11 // pred_check
          %p340 = pneg %p151
        $region30: #{forward.2} parent=11 // pred_check_branch
          %342 = sbr.rel (%p340) target = $region32
        $region31: #{forward.2} parent=11 // pred_region
          _
        $region32: #{forward.2} parent=11 // pred_fallthru
          _
        // Predicated region
        $region33: #{forward.2} parent=11 // pred_check
          %p343 = pneg %p172
        $region34: #{forward.2} parent=11 // pred_check_branch
          %345 = sbr.rel (%p343) target = $region36
        $region35: #{forward.2} parent=11 // pred_region
          %s347 = ssub.s32 3072, 3072
          %348 = vsyncadd [#allocation5], %s347
          %s349 = sshll.u32 [#allocation4], 4
          %s350 = int_to_ptr.vmem [resolvable:$true] %s349
          %355 = dma.hbm_to_vmem [thread:$0]  %s6, 3072, %s350, [#allocation5], 64, 64, 4
        $region36: #{forward.2} parent=11 // pred_fallthru
          _
        // Predicated region
        $region37: #{forward.2} parent=11 // pred_check
          %p356 = pneg %p193
        $region38: #{forward.2} parent=11 // pred_check_branch
          %358 = sbr.rel (%p356) target = $region40
        $region39: #{forward.2} parent=11 // pred_region
          _
        $region40: #{forward.2} parent=11 // pred_fallthru
          _
        // Predicated region
        $region41: #{forward.2} parent=11 // pred_check
          %p359 = pneg %p214
        $region42: #{forward.2} parent=11 // pred_check_branch
          %361 = sbr.rel (%p359) target = $region44
        $region43: #{forward.2} parent=11 // pred_region
          _
        $region44: #{forward.2} parent=11 // pred_fallthru
          _
        // Predicated region
        $region45: #{forward.2} parent=11 // pred_check
          %p362 = pneg %p235
        $region46: #{forward.2} parent=11 // pred_check_branch
          %364 = sbr.rel (%p362) target = $region48
        $region47: #{forward.2} parent=11 // pred_region
          _
        $region48: #{forward.2} parent=11 // pred_fallthru
          _
        // Predicated region
        $region49: #{forward.2} parent=11 // pred_check
          %p365 = pneg %p256
        $region50: #{forward.2} parent=11 // pred_check_branch
          %367 = sbr.rel (%p365) target = $region52
        $region51: #{forward.2} parent=11 // pred_region
          %s369 = ssub.s32 4096, 4096
          %370 = vsyncadd [#allocation5], %s369
          %s371 = sshll.u32 [#allocation6], 4
          %s372 = int_to_ptr.vmem [resolvable:$true] %s371
          %377 = dma.hbm_to_vmem [thread:$0]  %s10, 4096, %s372, [#allocation5], 256, 256, 16
        $region52: #{forward.2} parent=11 // pred_fallthru
          _
        // Predicated region
        $region53: #{forward.2} parent=11 // pred_check
          %p378 = pneg %p277
        $region54: #{forward.2} parent=11 // pred_check_branch
          %380 = sbr.rel (%p378) target = $region56
        $region55: #{forward.2} parent=11 // pred_region
          _
        $region56: #{forward.2} parent=11 // pred_fallthru
          _
      $region12: #{forward.2} parent=5 // pred_fallthru
        _
      %p381 = scmp.lt.s32.totalorder %s20, 2
      // Predicated region
      $region57: #{forward.2} parent=5 // pred_check
        %p382 = pneg %p381
      $region58: #{forward.2} parent=5 // pred_check_branch
        %384 = sbr.rel (%p382) target = $region60
      $region59: #{forward.2} parent=5 // pred_region
        // Predicated region
        $region61: #{forward.2} parent=59 // pred_check
          %p385 = pneg %p40
        $region62: #{forward.2} parent=59 // pred_check_branch
          %387 = sbr.rel (%p385) target = $region64
        $region63: #{forward.2} parent=59 // pred_region
          %p388 = scmp.lt.s32.totalorder %s20, 1
          %s389 = scalar_select %p388, %s20, 1
          %s390 = smul.addr %s389, 5
          %s391 = smul.addr %s390, 8
          %s392 = scalar_lea.vmem %s0, %s391
        $region64: #{forward.2} parent=59 // pred_fallthru
          _
      $region60: #{forward.2} parent=5 // pred_fallthru
        _
      %p393 = scmp.le.s32.totalorder 1, %s20
      %p394 = scmp.lt.s32.totalorder %s20, 3
      %p395 = pnand %p393, %p394
      %p396 = pneg %p395
      // Predicated region
      $region65: #{forward.2} parent=5 // pred_check
        _
      $region66: #{forward.2} parent=5 // pred_check_branch
        %398 = sbr.rel (%p395) target = $region68
      $region67: #{forward.2} parent=5 // pred_region
        %s399 = ssub.s32 %s20, 1
        // Predicated region
        $region69: #{forward.2} parent=67 // pred_check
          %p400 = pneg %p88
        $region70: #{forward.2} parent=67 // pred_check_branch
          %402 = sbr.rel (%p400) target = $region72
        $region71: #{forward.2} parent=67 // pred_region
          %403 = dma.done [#allocation3], 3072
        $region72: #{forward.2} parent=67 // pred_fallthru
          _
        // Predicated region
        $region73: #{forward.2} parent=67 // pred_check
          %p404 = pneg %p172
        $region74: #{forward.2} parent=67 // pred_check_branch
          %406 = sbr.rel (%p404) target = $region76
        $region75: #{forward.2} parent=67 // pred_region
          %407 = dma.done [#allocation5], 3072
        $region76: #{forward.2} parent=67 // pred_fallthru
          _
        // Predicated region
        $region77: #{forward.2} parent=67 // pred_check
          %p408 = pneg %p256
        $region78: #{forward.2} parent=67 // pred_check_branch
          %410 = sbr.rel (%p408) target = $region80
        $region79: #{forward.2} parent=67 // pred_region
          %411 = dma.done [#allocation5], 4096
        $region80: #{forward.2} parent=67 // pred_fallthru
          _
        %p412 = scmp.lt.s32.totalorder %s25, 1
        %s413 = scalar_select %p412, %s25, 1
        %s414 = smul.addr %s413, 5
        %s415 = smul.addr %s414, 8
        %s416 = scalar_lea.vmem %s0, %s415
        %p417 = pneg %p46
        %p418 = pneg %p43
        %p419 = pneg %p67
        %p420 = pneg %p64
        %p421 = pneg %p88
        %p422 = pneg %p85
        %p423 = pneg %p109
        %p424 = pneg %p106
        %p425 = pneg %p130
        %p426 = pneg %p127
        %p427 = pneg %p151
        %p428 = pneg %p148
        %p429 = pneg %p172
        %p430 = pneg %p169
        %p431 = pneg %p193
        %p432 = pneg %p190
        %p433 = pneg %p214
        %p434 = pneg %p211
        %p435 = pneg %p235
        %p436 = pneg %p232
        %p437 = pneg %p256
        %p438 = pneg %p253
        %p439 = pneg %p277
        %p440 = pneg %p274
        %p441 = pneg %p303
        %p442 = pneg %p300
        %p443 = scmp.lt.s32.totalorder %s25, 1
        %s444 = scalar_select %p443, %s25, 1
        %s445 = smul.addr %s444, 4
        %s446 = smul.addr %s445, 4
        %s447 = scalar_lea.vmem %s12, %s446
        %p448 = scmp.lt.s32.totalorder %s25, 1
        %s449 = scalar_select %p448, %s25, 1
        %s450 = smul.addr %s449, 5
        %s451 = smul.addr %s450, 8
        %s452 = scalar_lea.vmem %s0, %s451
        %p453 = scmp.lt.s32.totalorder %s25, 1
        %s454 = scalar_select %p453, %s25, 1
        %s455 = smul.addr %s454, 4
        %s456 = smul.addr %s455, 4
        %s457 = scalar_lea.vmem %s12, %s456
        %v459 = vld [vmem:[%s452] sm:$0xff]
        %v460 = vld [vmem:[%s452 + $0x8] sm:$0xff]
        %v461 = vld [vmem:[%s452 + $0x10] sm:$0xff]
        %v462 = vld [vmem:[%s452 + $0x18] sm:$0xff]
        %v463 = vld [vmem:[%s452 + $0x20] sm:$0xf]
        %v464 = vlaneseq
        %v465 = vand.u32 %v464, 127
        %466 = vset.pattern.permute.xlu0 0
        %467 = vperm.xlu0 %466, %v459
        %v468 = vpop.permute.xlu0 %467
        %469 = vset.pattern.permute.xlu0 0
        %470 = vperm.xlu0 %469, %v460
        %v471 = vpop.permute.xlu0 %470
        %472 = vset.pattern.permute.xlu0 0
        %473 = vperm.xlu0 %472, %v461
        %v474 = vpop.permute.xlu0 %473
        %475 = vset.pattern.permute.xlu0 0
        %476 = vperm.xlu0 %475, %v462
        %v477 = vpop.permute.xlu0 %476
        %478 = vset.pattern.permute.xlu0 0
        %479 = vperm.xlu0 %478, %v463
        %v480 = vpop.permute.xlu0 %479
        %vm481 = vcmp.eq.s32.totalorder %v465, %v468
        %vm482 = vcmp.eq.s32.totalorder %v465, %v471
        %vm483 = vcmp.eq.s32.totalorder %v465, %v474
        %vm484 = vcmp.eq.s32.totalorder %v465, %v477
        %vm485 = vcmp.eq.s32.totalorder %v465, %v480
        %v486 = vsel %vm481, 1, 0
        %v487 = vsel %vm482, 1, 0
        %v488 = vsel %vm483, 1, 0
        %v489 = vsel %vm484, 1, 0
        %v490 = vsel %vm485, 1, 0
        %v491 = vcvt.s32.f32 %v486
        %v492 = vcvt.s32.f32 %v487
        %v493 = vcvt.s32.f32 %v488
        %v494 = vcvt.s32.f32 %v489
        %v495 = vcvt.s32.f32 %v490
        %v496 = vpack.c.bf16 %v492, %v491
        %v497 = vpack.c.bf16 %v494, %v493
        %v498 = vpack.c.bf16 %v495, %v495
        %v499 = vld [vmem:[%s1] sm:$0xf]
        %v500 = vld [vmem:[%s1 + $0x4] sm:$0xf]
        %v501 = vld [vmem:[%s1 + $0x8] sm:$0xf]
        %v502 = vld [vmem:[%s1 + $0xc] sm:$0xf]
        %v503 = vld [vmem:[%s1 + $0x10] sm:$0xf]
        %v504 = vld [vmem:[%s1 + $0x14] sm:$0xf]
        %v505 = vld [vmem:[%s1 + $0x18] sm:$0xf]
        %v506 = vld [vmem:[%s1 + $0x1c] sm:$0xf]
        %v507 = vld [vmem:[%s1 + $0x20] sm:$0xf]
        %v508 = vld [vmem:[%s1 + $0x24] sm:$0xf]
        %v509 = vld [vmem:[%s1 + $0x28] sm:$0xf]
        %v510 = vld [vmem:[%s1 + $0x2c] sm:$0xf]
        %v511 = vld [vmem:[%s1 + $0x30] sm:$0xf]
        %v512 = vld [vmem:[%s1 + $0x34] sm:$0xf]
        %v513 = vld [vmem:[%s1 + $0x38] sm:$0xf]
        %v514 = vld [vmem:[%s1 + $0x3c] sm:$0xf]
        %v531 = vunpack.c.l.b16 %v499
        %v532 = vunpack.c.l.b16 %v500
        %v533 = vunpack.c.l.b16 %v501
        %v534 = vunpack.c.l.b16 %v502
        %v535 = vunpack.c.l.b16 %v503
        %v536 = vunpack.c.l.b16 %v504
        %v537 = vunpack.c.l.b16 %v505
        %v538 = vunpack.c.l.b16 %v506
        %v539 = vunpack.c.l.b16 %v507
        %v540 = vunpack.c.l.b16 %v508
        %v541 = vunpack.c.l.b16 %v509
        %v542 = vunpack.c.l.b16 %v510
        %v543 = vunpack.c.l.b16 %v511
        %v544 = vunpack.c.l.b16 %v512
        %v545 = vunpack.c.l.b16 %v513
        %v546 = vunpack.c.l.b16 %v514
        %v547 = vpack.c.b16 %v532, %v531
        %v548 = vpack.c.b16 %v534, %v533
        %v549 = vpack.c.b16 %v536, %v535
        %v550 = vpack.c.b16 %v538, %v537
        %v551 = vpack.c.b16 %v540, %v539
        %v552 = vpack.c.b16 %v542, %v541
        %v553 = vpack.c.b16 %v544, %v543
        %v554 = vpack.c.b16 %v546, %v545
        %563 = vmatprep.subr.bf16.mxu0 0
        %564 = vmatpush1.bf16.msra.mxu0 %v547
        %565 = vmatprep.subr.bf16.mxu0 0
        %566 = vmatpush1.bf16.msra.mxu0 %v548
        %567 = vmatprep.subr.bf16.mxu0 0
        %568 = vmatpush1.bf16.msra.mxu0 %v549
        %569 = vmatprep.subr.bf16.mxu0 0
        %570 = vmatpush1.bf16.msra.mxu0 %v550
        %571 = vmatprep.subr.bf16.mxu0 0
        %572 = vmatpush1.bf16.msra.mxu0 %v551
        %573 = vmatprep.subr.bf16.mxu0 0
        %574 = vmatpush1.bf16.msra.mxu0 %v552
        %575 = vmatprep.subr.bf16.mxu0 0
        %576 = vmatpush1.bf16.msra.mxu0 %v553
        %577 = vmatprep.subr.bf16.mxu0 0
        %578 = vmatpush1.bf16.msra.mxu0 %v554
        %579 = vmatprep.subr.bf16.mxu0 0
        %580 = vmatpush1.bf16.msra.mxu0 0
        %581 = vmatprep.subr.bf16.mxu0 0
        %582 = vmatpush1.bf16.msra.mxu0 0
        %583 = vmatprep.subr.bf16.mxu0 0
        %584 = vmatpush1.bf16.msra.mxu0 0
        %585 = vmatprep.subr.bf16.mxu0 0
        %586 = vmatpush1.bf16.msra.mxu0 0
        %587 = vmatprep.subr.bf16.mxu0 0
        %588 = vmatpush1.bf16.msra.mxu0 0
        %589 = vmatprep.subr.bf16.mxu0 0
        %590 = vmatpush1.bf16.msra.mxu0 0
        %591 = vmatprep.subr.bf16.mxu0 0
        %592 = vmatpush1.bf16.msra.mxu0 0
        %593 = vmatprep.subr.bf16.mxu0 0
        %594 = vmatpush1.bf16.msra.mxu0 0
        %595 = vmatprep.mubr.bf16.mxu0 0
        %596 = vmatmul.mubr.bf16.gmra.mrb[0].mxu0 %v496
        %v597 = vpop.f32.mrb[0].mxu0
        %v598 = vadd.f32 0.0, %v597
        %v599 = vpop.f32.mrb[0].mxu0
        %v600 = vpop.f32.mrb[0].mxu0
        %v601 = vadd.f32 0.0, %v600
        %v602 = vpop.f32.mrb[0].mxu0
        %603 = vmatprep.mubr.bf16.mxu0 0
        %604 = vmatmul.mubr.bf16.gmra.mrb[0].mxu0 %v497
        %v605 = vpop.f32.mrb[0].mxu0
        %v606 = vadd.f32 0.0, %v605
        %v607 = vpop.f32.mrb[0].mxu0
        %v608 = vpop.f32.mrb[0].mxu0
        %v609 = vadd.f32 0.0, %v608
        %v610 = vpop.f32.mrb[0].mxu0
        %611 = vmatprep.mubr.bf16.mxu0 0
        %612 = vmatmul.mubr.bf16.gmra.mrb[0].mxu0 %v498
        %v613 = vpop.f32.mrb[0].mxu0
        %v614 = vadd.f32 0.0, %v613
        %v615 = vpop.f32.mrb[0].mxu0
        %v616 = vpop.f32.mrb[0].mxu0
        %v617 = vpop.f32.mrb[0].mxu0
        %618 = vdwg.mxu0
        %v619 = vpack.c.bf16 %v601, %v598
        %v620 = vpack.c.bf16 %v609, %v606
        %v621 = vpack.c.bf16 %v614, %v614
        %vm622 = vsmask.f32 256
        %v624 = vshrl.u32 %v619, 16
        %v626 = vrot.slane %v624, 7
        %v627 = vshll.u32 %v619, 16
        %v629 = vor.u32 %v626, %v627
        %v631 = vshrl.u32 %v620, 16
        %v633 = vrot.slane %v631, 7
        %v634 = vshll.u32 %v620, 16
        %v636 = vor.u32 %v633, %v634
        %v637 = vsel %vm622, %v626, %v636
        %v639 = vshrl.u32 %v621, 16
        %v641 = vrot.slane %v639, 7
        %v642 = vshll.u32 %v621, 16
        %v644 = vor.u32 %v641, %v642
        %v645 = vsel %vm622, %v633, %v644
        %vm649 = vcmask 1040384
        %vm650 = vmand %vm649, %vm622
        %v651 = vsel %vm650, 0, %v629
        %vm652 = vcmask 1042432
        %vm653 = vsmask.f32 2304
        %vm654 = vmand %vm652, %vm653
        %v655 = vsel %vm654, %v645, 0
        %v656 = vld [vmem:[%s3] sm:$0x1]
        %v657 = vld [vmem:[#allocation2] sm:$0xf]
        %v658 = vld [vmem:[#allocation2 + $0x4] sm:$0xf]
        %v659 = vld [vmem:[#allocation2 + $0x8] sm:$0xf]
        %v660 = vld [vmem:[#allocation2 + $0xc] sm:$0xf]
        %v661 = vld [vmem:[#allocation2 + $0x10] sm:$0xf]
        %v662 = vld [vmem:[#allocation2 + $0x14] sm:$0xf]
        %v663 = vld [vmem:[#allocation2 + $0x18] sm:$0xf]
        %v664 = vld [vmem:[#allocation2 + $0x1c] sm:$0xf]
        %v665 = vld [vmem:[#allocation2 + $0x20] sm:$0xf]
        %v666 = vld [vmem:[#allocation2 + $0x24] sm:$0xf]
        %v667 = vld [vmem:[#allocation2 + $0x28] sm:$0xf]
        %v668 = vld [vmem:[#allocation2 + $0x2c] sm:$0xf]
        %v669 = vld [vmem:[#allocation2 + $0x30] sm:$0xf]
        %v670 = vld [vmem:[#allocation2 + $0x34] sm:$0xf]
        %v671 = vld [vmem:[#allocation2 + $0x38] sm:$0xf]
        %v672 = vld [vmem:[#allocation2 + $0x3c] sm:$0xf]
        %v689 = vunpack.c.l.b16 %v657
        %v690 = vunpack.c.l.b16 %v658
        %v691 = vunpack.c.l.b16 %v659
        %v692 = vunpack.c.l.b16 %v660
        %v693 = vunpack.c.l.b16 %v661
        %v694 = vunpack.c.l.b16 %v662
        %v695 = vunpack.c.l.b16 %v663
        %v696 = vunpack.c.l.b16 %v664
        %v697 = vunpack.c.l.b16 %v665
        %v698 = vunpack.c.l.b16 %v666
        %v699 = vunpack.c.l.b16 %v667
        %v700 = vunpack.c.l.b16 %v668
        %v701 = vunpack.c.l.b16 %v669
        %v702 = vunpack.c.l.b16 %v670
        %v703 = vunpack.c.l.b16 %v671
        %v704 = vunpack.c.l.b16 %v672
        %v705 = vpack.c.b16 %v690, %v689
        %v706 = vpack.c.b16 %v692, %v691
        %v707 = vpack.c.b16 %v694, %v693
        %v708 = vpack.c.b16 %v696, %v695
        %v709 = vpack.c.b16 %v698, %v697
        %v710 = vpack.c.b16 %v700, %v699
        %v711 = vpack.c.b16 %v702, %v701
        %v712 = vpack.c.b16 %v704, %v703
        %721 = vmatprep.subr.bf16.mxu0 0
        %722 = vmatpush1.bf16.msra.mxu0 %v705
        %723 = vmatprep.subr.bf16.mxu0 0
        %724 = vmatpush1.bf16.msra.mxu0 %v706
        %725 = vmatprep.subr.bf16.mxu0 0
        %726 = vmatpush1.bf16.msra.mxu0 %v707
        %727 = vmatprep.subr.bf16.mxu0 0
        %728 = vmatpush1.bf16.msra.mxu0 %v708
        %729 = vmatprep.subr.bf16.mxu0 0
        %730 = vmatpush1.bf16.msra.mxu0 %v709
        %731 = vmatprep.subr.bf16.mxu0 0
        %732 = vmatpush1.bf16.msra.mxu0 %v710
        %733 = vmatprep.subr.bf16.mxu0 0
        %734 = vmatpush1.bf16.msra.mxu0 %v711
        %735 = vmatprep.subr.bf16.mxu0 0
        %736 = vmatpush1.bf16.msra.mxu0 %v712
        %737 = vmatprep.subr.bf16.mxu0 0
        %738 = vmatpush1.bf16.msra.mxu0 0
        %739 = vmatprep.subr.bf16.mxu0 0
        %740 = vmatpush1.bf16.msra.mxu0 0
        %741 = vmatprep.subr.bf16.mxu0 0
        %742 = vmatpush1.bf16.msra.mxu0 0
        %743 = vmatprep.subr.bf16.mxu0 0
        %744 = vmatpush1.bf16.msra.mxu0 0
        %745 = vmatprep.subr.bf16.mxu0 0
        %746 = vmatpush1.bf16.msra.mxu0 0
        %747 = vmatprep.subr.bf16.mxu0 0
        %748 = vmatpush1.bf16.msra.mxu0 0
        %749 = vmatprep.subr.bf16.mxu0 0
        %750 = vmatpush1.bf16.msra.mxu0 0
        %751 = vmatprep.subr.bf16.mxu0 0
        %752 = vmatpush1.bf16.msra.mxu0 0
        %753 = vmatprep.mubr.bf16.mxu0 0
        %754 = vmatmul.mubr.bf16.gmra.mrb[0].mxu0 %v651
        %v755 = vpop.f32.mrb[0].mxu0
        %v756 = vadd.f32 0.0, %v755
        %v757 = vpop.f32.mrb[0].mxu0
        %v758 = vpop.f32.mrb[0].mxu0
        %v759 = vadd.f32 0.0, %v758
        %v760 = vpop.f32.mrb[0].mxu0
        %761 = vmatprep.mubr.bf16.mxu0 0
        %762 = vmatmul.mubr.bf16.gmra.mrb[0].mxu0 %v637
        %v763 = vpop.f32.mrb[0].mxu0
        %v764 = vadd.f32 0.0, %v763
        %v765 = vpop.f32.mrb[0].mxu0
        %v766 = vpop.f32.mrb[0].mxu0
        %v767 = vadd.f32 0.0, %v766
        %v768 = vpop.f32.mrb[0].mxu0
        %769 = vmatprep.mubr.bf16.mxu0 0
        %770 = vmatmul.mubr.bf16.gmra.mrb[0].mxu0 %v655
        %v771 = vpop.f32.mrb[0].mxu0
        %v772 = vadd.f32 0.0, %v771
        %v773 = vpop.f32.mrb[0].mxu0
        %v774 = vpop.f32.mrb[0].mxu0
        %v775 = vpop.f32.mrb[0].mxu0
        %776 = vdwg.mxu0
        %v778 = vlaneseq
        %v779 = vshrl.u32 %v778, 7
        %v780 = vsub.s32 0, %v779
        %v781 = vrot.slane %v656, %v780
        %v783 = vadd.f32 %v781, %v756
        %v784 = vadd.f32 %v781, %v759
        %v785 = vadd.f32 %v781, %v764
        %v786 = vadd.f32 %v781, %v767
        %v787 = vadd.f32 %v781, %v772
        %s788 = scalar_lea.vmem [#allocation2], 64
        %v789 = vld [vmem:[%s788] sm:$0xf]
        %v790 = vld [vmem:[%s788 + $0x4] sm:$0xf]
        %v791 = vld [vmem:[%s788 + $0x8] sm:$0xf]
        %v792 = vld [vmem:[%s788 + $0xc] sm:$0xf]
        %v793 = vld [vmem:[%s788 + $0x10] sm:$0xf]
        %v794 = vld [vmem:[%s788 + $0x14] sm:$0xf]
        %v795 = vld [vmem:[%s788 + $0x18] sm:$0xf]
        %v796 = vld [vmem:[%s788 + $0x1c] sm:$0xf]
        %v797 = vld [vmem:[%s788 + $0x20] sm:$0xf]
        %v798 = vld [vmem:[%s788 + $0x24] sm:$0xf]
        %v799 = vld [vmem:[%s788 + $0x28] sm:$0xf]
        %v800 = vld [vmem:[%s788 + $0x2c] sm:$0xf]
        %v801 = vld [vmem:[%s788 + $0x30] sm:$0xf]
        %v802 = vld [vmem:[%s788 + $0x34] sm:$0xf]
        %v803 = vld [vmem:[%s788 + $0x38] sm:$0xf]
        %v804 = vld [vmem:[%s788 + $0x3c] sm:$0xf]
        %vm805 = vsmask.f32 7424
        %v807 = vshrl.u32 %v651, 16
        %v809 = vshll.u32 %v651, 16
        %v811 = vrot.slane %v809, 1
        %v812 = vor.u32 %v807, %v811
        %v814 = vshll.u32 %v637, 16
        %v816 = vrot.slane %v814, 1
        %v817 = vsel %vm805, %v812, %v816
        %v818 = vshrl.u32 %v637, 16
        %v820 = vor.u32 %v818, %v816
        %v822 = vshll.u32 %v655, 16
        %v824 = vrot.slane %v822, 1
        %v825 = vsel %vm805, %v820, %v824
        %v826 = vshrl.u32 %v655, 16
        %v828 = vor.u32 %v826, %v824
        %v848 = vunpack.c.l.b16 %v789
        %v849 = vunpack.c.l.b16 %v790
        %v850 = vunpack.c.l.b16 %v791
        %v851 = vunpack.c.l.b16 %v792
        %v852 = vunpack.c.l.b16 %v793
        %v853 = vunpack.c.l.b16 %v794
        %v854 = vunpack.c.l.b16 %v795
        %v855 = vunpack.c.l.b16 %v796
        %v856 = vunpack.c.l.b16 %v797
        %v857 = vunpack.c.l.b16 %v798
        %v858 = vunpack.c.l.b16 %v799
        %v859 = vunpack.c.l.b16 %v800
        %v860 = vunpack.c.l.b16 %v801
        %v861 = vunpack.c.l.b16 %v802
        %v862 = vunpack.c.l.b16 %v803
        %v863 = vunpack.c.l.b16 %v804
        %v864 = vpack.c.b16 %v849, %v848
        %v865 = vpack.c.b16 %v851, %v850
        %v866 = vpack.c.b16 %v853, %v852
        %v867 = vpack.c.b16 %v855, %v854
        %v868 = vpack.c.b16 %v857, %v856
        %v869 = vpack.c.b16 %v859, %v858
        %v870 = vpack.c.b16 %v861, %v860
        %v871 = vpack.c.b16 %v863, %v862
        %880 = vmatprep.subr.bf16.mxu0 0
        %881 = vmatpush1.bf16.msra.mxu0 %v864
        %882 = vmatprep.subr.bf16.mxu0 0
        %883 = vmatpush1.bf16.msra.mxu0 %v865
        %884 = vmatprep.subr.bf16.mxu0 0
        %885 = vmatpush1.bf16.msra.mxu0 %v866
        %886 = vmatprep.subr.bf16.mxu0 0
        %887 = vmatpush1.bf16.msra.mxu0 %v867
        %888 = vmatprep.subr.bf16.mxu0 0
        %889 = vmatpush1.bf16.msra.mxu0 %v868
        %890 = vmatprep.subr.bf16.mxu0 0
        %891 = vmatpush1.bf16.msra.mxu0 %v869
        %892 = vmatprep.subr.bf16.mxu0 0
        %893 = vmatpush1.bf16.msra.mxu0 %v870
        %894 = vmatprep.subr.bf16.mxu0 0
        %895 = vmatpush1.bf16.msra.mxu0 %v871
        %896 = vmatprep.subr.bf16.mxu0 0
        %897 = vmatpush1.bf16.msra.mxu0 0
        %898 = vmatprep.subr.bf16.mxu0 0
        %899 = vmatpush1.bf16.msra.mxu0 0
        %900 = vmatprep.subr.bf16.mxu0 0
        %901 = vmatpush1.bf16.msra.mxu0 0
        %902 = vmatprep.subr.bf16.mxu0 0
        %903 = vmatpush1.bf16.msra.mxu0 0
        %904 = vmatprep.subr.bf16.mxu0 0
        %905 = vmatpush1.bf16.msra.mxu0 0
        %906 = vmatprep.subr.bf16.mxu0 0
        %907 = vmatpush1.bf16.msra.mxu0 0
        %908 = vmatprep.subr.bf16.mxu0 0
        %909 = vmatpush1.bf16.msra.mxu0 0
        %910 = vmatprep.subr.bf16.mxu0 0
        %911 = vmatpush1.bf16.msra.mxu0 0
        %912 = vmatprep.mubr.bf16.mxu0 0
        %913 = vmatmul.mubr.bf16.gmra.mrb[0].mxu0 %v817
        %v914 = vpop.f32.mrb[0].mxu0
        %v915 = vadd.f32 0.0, %v914
        %v916 = vpop.f32.mrb[0].mxu0
        %v917 = vpop.f32.mrb[0].mxu0
        %v918 = vadd.f32 0.0, %v917
        %v919 = vpop.f32.mrb[0].mxu0
        %920 = vmatprep.mubr.bf16.mxu0 0
        %921 = vmatmul.mubr.bf16.gmra.mrb[0].mxu0 %v825
        %v922 = vpop.f32.mrb[0].mxu0
        %v923 = vadd.f32 0.0, %v922
        %v924 = vpop.f32.mrb[0].mxu0
        %v925 = vpop.f32.mrb[0].mxu0
        %v926 = vadd.f32 0.0, %v925
        %v927 = vpop.f32.mrb[0].mxu0
        %928 = vmatprep.mubr.bf16.mxu0 0
        %929 = vmatmul.mubr.bf16.gmra.mrb[0].mxu0 %v828
        %v930 = vpop.f32.mrb[0].mxu0
        %v931 = vadd.f32 0.0, %v930
        %v932 = vpop.f32.mrb[0].mxu0
        %v933 = vpop.f32.mrb[0].mxu0
        %v934 = vpop.f32.mrb[0].mxu0
        %935 = vdwg.mxu0
        %v936 = vadd.f32 %v783, %v915
        %v937 = vadd.f32 %v784, %v918
        %v938 = vadd.f32 %v785, %v923
        %v939 = vadd.f32 %v786, %v926
        %v940 = vadd.f32 %v787, %v931
        %s941 = scalar_lea.vmem [#allocation2], 128
        %v942 = vld [vmem:[%s941] sm:$0xf]
        %v943 = vld [vmem:[%s941 + $0x4] sm:$0xf]
        %v944 = vld [vmem:[%s941 + $0x8] sm:$0xf]
        %v945 = vld [vmem:[%s941 + $0xc] sm:$0xf]
        %v946 = vld [vmem:[%s941 + $0x10] sm:$0xf]
        %v947 = vld [vmem:[%s941 + $0x14] sm:$0xf]
        %v948 = vld [vmem:[%s941 + $0x18] sm:$0xf]
        %v949 = vld [vmem:[%s941 + $0x1c] sm:$0xf]
        %v950 = vld [vmem:[%s941 + $0x20] sm:$0xf]
        %v951 = vld [vmem:[%s941 + $0x24] sm:$0xf]
        %v952 = vld [vmem:[%s941 + $0x28] sm:$0xf]
        %v953 = vld [vmem:[%s941 + $0x2c] sm:$0xf]
        %v954 = vld [vmem:[%s941 + $0x30] sm:$0xf]
        %v955 = vld [vmem:[%s941 + $0x34] sm:$0xf]
        %v956 = vld [vmem:[%s941 + $0x38] sm:$0xf]
        %v957 = vld [vmem:[%s941 + $0x3c] sm:$0xf]
        %vm960 = vcmask 1046528
        %v961 = vrot.slane %v651, 1
        %v962 = vrot.slane %v637, 1
        %v963 = vsel %vm960, %v961, %v962
        %v964 = vrot.slane %v655, 1
        %v965 = vsel %vm960, %v962, %v964
        %v985 = vunpack.c.l.b16 %v942
        %v986 = vunpack.c.l.b16 %v943
        %v987 = vunpack.c.l.b16 %v944
        %v988 = vunpack.c.l.b16 %v945
        %v989 = vunpack.c.l.b16 %v946
        %v990 = vunpack.c.l.b16 %v947
        %v991 = vunpack.c.l.b16 %v948
        %v992 = vunpack.c.l.b16 %v949
        %v993 = vunpack.c.l.b16 %v950
        %v994 = vunpack.c.l.b16 %v951
        %v995 = vunpack.c.l.b16 %v952
        %v996 = vunpack.c.l.b16 %v953
        %v997 = vunpack.c.l.b16 %v954
        %v998 = vunpack.c.l.b16 %v955
        %v999 = vunpack.c.l.b16 %v956
        %v1000 = vunpack.c.l.b16 %v957
        %v1001 = vpack.c.b16 %v986, %v985
        %v1002 = vpack.c.b16 %v988, %v987
        %v1003 = vpack.c.b16 %v990, %v989
        %v1004 = vpack.c.b16 %v992, %v991
        %v1005 = vpack.c.b16 %v994, %v993
        %v1006 = vpack.c.b16 %v996, %v995
        %v1007 = vpack.c.b16 %v998, %v997
        %v1008 = vpack.c.b16 %v1000, %v999
        %1017 = vmatprep.subr.bf16.mxu0 0
        %1018 = vmatpush1.bf16.msra.mxu0 %v1001
        %1019 = vmatprep.subr.bf16.mxu0 0
        %1020 = vmatpush1.bf16.msra.mxu0 %v1002
        %1021 = vmatprep.subr.bf16.mxu0 0
        %1022 = vmatpush1.bf16.msra.mxu0 %v1003
        %1023 = vmatprep.subr.bf16.mxu0 0
        %1024 = vmatpush1.bf16.msra.mxu0 %v1004
        %1025 = vmatprep.subr.bf16.mxu0 0
        %1026 = vmatpush1.bf16.msra.mxu0 %v1005
        %1027 = vmatprep.subr.bf16.mxu0 0
        %1028 = vmatpush1.bf16.msra.mxu0 %v1006
        %1029 = vmatprep.subr.bf16.mxu0 0
        %1030 = vmatpush1.bf16.msra.mxu0 %v1007
        %1031 = vmatprep.subr.bf16.mxu0 0
        %1032 = vmatpush1.bf16.msra.mxu0 %v1008
        %1033 = vmatprep.subr.bf16.mxu0 0
        %1034 = vmatpush1.bf16.msra.mxu0 0
        %1035 = vmatprep.subr.bf16.mxu0 0
        %1036 = vmatpush1.bf16.msra.mxu0 0
        %1037 = vmatprep.subr.bf16.mxu0 0
        %1038 = vmatpush1.bf16.msra.mxu0 0
        %1039 = vmatprep.subr.bf16.mxu0 0
        %1040 = vmatpush1.bf16.msra.mxu0 0
        %1041 = vmatprep.subr.bf16.mxu0 0
        %1042 = vmatpush1.bf16.msra.mxu0 0
        %1043 = vmatprep.subr.bf16.mxu0 0
        %1044 = vmatpush1.bf16.msra.mxu0 0
        %1045 = vmatprep.subr.bf16.mxu0 0
        %1046 = vmatpush1.bf16.msra.mxu0 0
        %1047 = vmatprep.subr.bf16.mxu0 0
        %1048 = vmatpush1.bf16.msra.mxu0 0
        %1049 = vmatprep.mubr.bf16.mxu0 0
        %1050 = vmatmul.mubr.bf16.gmra.mrb[0].mxu0 %v963
        %v1051 = vpop.f32.mrb[0].mxu0
        %v1052 = vadd.f32 0.0, %v1051
        %v1053 = vpop.f32.mrb[0].mxu0
        %v1054 = vpop.f32.mrb[0].mxu0
        %v1055 = vadd.f32 0.0, %v1054
        %v1056 = vpop.f32.mrb[0].mxu0
        %1057 = vmatprep.mubr.bf16.mxu0 0
        %1058 = vmatmul.mubr.bf16.gmra.mrb[0].mxu0 %v965
        %v1059 = vpop.f32.mrb[0].mxu0
        %v1060 = vadd.f32 0.0, %v1059
        %v1061 = vpop.f32.mrb[0].mxu0
        %v1062 = vpop.f32.mrb[0].mxu0
        %v1063 = vadd.f32 0.0, %v1062
        %v1064 = vpop.f32.mrb[0].mxu0
        %1065 = vmatprep.mubr.bf16.mxu0 0
        %1066 = vmatmul.mubr.bf16.gmra.mrb[0].mxu0 %v964
        %v1067 = vpop.f32.mrb[0].mxu0
        %v1068 = vadd.f32 0.0, %v1067
        %v1069 = vpop.f32.mrb[0].mxu0
        %v1070 = vpop.f32.mrb[0].mxu0
        %v1071 = vpop.f32.mrb[0].mxu0
        %1072 = vdwg.mxu0
        %v1073 = vadd.f32 %v936, %v1052
        %v1074 = vadd.f32 %v937, %v1055
        %v1075 = vadd.f32 %v938, %v1060
        %v1076 = vadd.f32 %v939, %v1063
        %v1077 = vadd.f32 %v940, %v1068
        %vm1078 = vcmask 1042432
        %v1079 = vsel %vm1078, %v1073, -inf
        %v1080 = vrot.slane %v1079, 4
        %v1081 = vmax.f32 %v1079, %v1080
        %v1082 = vrot.slane %v1081, 2
        %v1083 = vmax.f32 %v1081, %v1082
        %v1084 = vrot.slane %v1083, 1
        %v1085 = vmax.f32 %v1083, %v1084
        %vm1086 = vcmask 1045507
        %v1087 = vsel %vm1086, %v1073, -inf
        %v1088 = vrot.slane %v1087, 4
        %v1089 = vmax.f32 %v1087, %v1088
        %v1090 = vrot.slane %v1089, 2
        %v1091 = vmax.f32 %v1089, %v1090
        %v1092 = vrot.slane %v1091, 1
        %v1093 = vmax.f32 %v1091, %v1092
        %vm1094 = vcmask 1047558
        %v1095 = vsel %vm1094, %v1073, -inf
        %vm1096 = vcmask 1040384
        %v1097 = vsel %vm1096, %v1074, -inf
        %v1098 = vmax.f32 %v1095, %v1097
        %v1099 = vrot.slane %v1098, 4
        %v1100 = vmax.f32 %v1098, %v1099
        %v1101 = vrot.slane %v1100, 2
        %v1102 = vmax.f32 %v1100, %v1101
        %v1103 = vrot.slane %v1102, 1
        %v1104 = vmax.f32 %v1102, %v1103
        %vm1105 = vcmask 1043457
        %v1106 = vsel %vm1105, %v1074, -inf
        %v1107 = vrot.slane %v1106, 4
        %v1108 = vmax.f32 %v1106, %v1107
        %v1109 = vrot.slane %v1108, 2
        %v1110 = vmax.f32 %v1108, %v1109
        %v1111 = vrot.slane %v1110, 1
        %v1112 = vmax.f32 %v1110, %v1111
        %vm1113 = vcmask 1046532
        %v1114 = vsel %vm1113, %v1074, -inf
        %v1115 = vrot.slane %v1114, 4
        %v1116 = vmax.f32 %v1114, %v1115
        %v1117 = vrot.slane %v1116, 2
        %v1118 = vmax.f32 %v1116, %v1117
        %v1119 = vrot.slane %v1118, 1
        %v1120 = vmax.f32 %v1118, %v1119
        %vm1121 = vcmask 1047559
        %v1122 = vsel %vm1121, %v1074, -inf
        %vm1123 = vcmask 1041408
        %v1124 = vsel %vm1123, %v1075, -inf
        %v1125 = vmax.f32 %v1122, %v1124
        %v1126 = vrot.slane %v1125, 4
        %v1127 = vmax.f32 %v1125, %v1126
        %v1128 = vrot.slane %v1127, 2
        %v1129 = vmax.f32 %v1127, %v1128
        %v1130 = vrot.slane %v1129, 1
        %v1131 = vmax.f32 %v1129, %v1130
        %vm1132 = vcmask 1044482
        %v1133 = vsel %vm1132, %v1075, -inf
        %v1134 = vrot.slane %v1133, 4
        %v1135 = vmax.f32 %v1133, %v1134
        %v1136 = vrot.slane %v1135, 2
        %v1137 = vmax.f32 %v1135, %v1136
        %v1138 = vrot.slane %v1137, 1
        %v1139 = vmax.f32 %v1137, %v1138
        %vm1140 = vcmask 1047557
        %v1141 = vsel %vm1140, %v1075, -inf
        %v1142 = vrot.slane %v1141, 4
        %v1143 = vmax.f32 %v1141, %v1142
        %v1144 = vrot.slane %v1143, 2
        %v1145 = vmax.f32 %v1143, %v1144
        %v1146 = vrot.slane %v1145, 1
        %v1147 = vmax.f32 %v1145, %v1146
        %v1148 = vsel %vm1078, %v1076, -inf
        %v1149 = vrot.slane %v1148, 4
        %v1150 = vmax.f32 %v1148, %v1149
        %v1151 = vrot.slane %v1150, 2
        %v1152 = vmax.f32 %v1150, %v1151
        %v1153 = vrot.slane %v1152, 1
        %v1154 = vmax.f32 %v1152, %v1153
        %v1155 = vsel %vm1086, %v1076, -inf
        %v1156 = vrot.slane %v1155, 4
        %v1157 = vmax.f32 %v1155, %v1156
        %v1158 = vrot.slane %v1157, 2
        %v1159 = vmax.f32 %v1157, %v1158
        %v1160 = vrot.slane %v1159, 1
        %v1161 = vmax.f32 %v1159, %v1160
        %v1162 = vsel %vm1094, %v1076, -inf
        %v1163 = vsel %vm1096, %v1077, -inf
        %v1164 = vmax.f32 %v1162, %v1163
        %v1165 = vrot.slane %v1164, 4
        %v1166 = vmax.f32 %v1164, %v1165
        %v1167 = vrot.slane %v1166, 2
        %v1168 = vmax.f32 %v1166, %v1167
        %v1169 = vrot.slane %v1168, 1
        %v1170 = vmax.f32 %v1168, %v1169
        %v1171 = vsel %vm1105, %v1077, -inf
        %v1172 = vrot.slane %v1171, 4
        %v1173 = vmax.f32 %v1171, %v1172
        %v1174 = vrot.slane %v1173, 2
        %v1175 = vmax.f32 %v1173, %v1174
        %v1176 = vrot.slane %v1175, 1
        %v1177 = vmax.f32 %v1175, %v1176
        %v1178 = vsel %vm1096, %v1085, %v1093
        %v1179 = vsel %vm1123, %v1178, %v1104
        %v1180 = vsel %vm1078, %v1179, %v1112
        %vm1181 = vcmask 1043456
        %v1182 = vsel %vm1181, %v1180, %v1120
        %vm1183 = vcmask 1044480
        %v1184 = vsel %vm1183, %v1182, %v1131
        %vm1185 = vcmask 1045504
        %v1186 = vsel %vm1185, %v1184, %v1139
        %vm1187 = vcmask 1046528
        %v1188 = vsel %vm1187, %v1186, %v1147
        %v1189 = vsel %vm1096, %v1154, %v1161
        %v1190 = vsel %vm1123, %v1189, %v1170
        %v1191 = vsel %vm1078, %v1190, %v1177
        %v1192 = vld [vmem:[%s4] sm:$0x1]
        %v1194 = vlaneseq
        %v1195 = vshrl.u32 %v1194, 7
        %v1196 = vsub.s32 0, %v1195
        %v1197 = vrot.slane %v1192, %v1196
        %v1199 = vmul.f32 %v1188, %v1197
        %v1200 = vmul.f32 %v1191, %v1197
        %v1201 = vld [vmem:[%s5] sm:$0x1]
        %v1203 = vlaneseq
        %v1204 = vshrl.u32 %v1203, 7
        %v1205 = vsub.s32 0, %v1204
        %v1206 = vrot.slane %v1201, %v1205
        %v1208 = vadd.f32 %v1199, %v1206
        %v1209 = vadd.f32 %v1200, %v1206
        %v1210 = vpack.c.bf16 %v1209, %v1208
        %v1212 = vshrl.u32 %v1210, 16
        %v1214 = vrot.slane %v1212, 7
        %v1215 = vshll.u32 %v1210, 16
        %v1217 = vor.u32 %v1214, %v1215
        %v1219 = vsel %vm650, 0, %v1217
        %vm1220 = vsmask.f32 6400
        %vm1221 = vmand %vm960, %vm1220
        %v1222 = vsel %vm1221, %v1219, 0
        %v1223 = vld [vmem:[%s7] sm:$0x1]
        %v1224 = vld [vmem:[#allocation4] sm:$0xf]
        %v1225 = vld [vmem:[#allocation4 + $0x4] sm:$0xf]
        %v1226 = vld [vmem:[#allocation4 + $0x8] sm:$0xf]
        %v1227 = vld [vmem:[#allocation4 + $0xc] sm:$0xf]
        %v1228 = vld [vmem:[#allocation4 + $0x10] sm:$0xf]
        %v1229 = vld [vmem:[#allocation4 + $0x14] sm:$0xf]
        %v1230 = vld [vmem:[#allocation4 + $0x18] sm:$0xf]
        %v1231 = vld [vmem:[#allocation4 + $0x1c] sm:$0xf]
        %v1232 = vld [vmem:[#allocation4 + $0x20] sm:$0xf]
        %v1233 = vld [vmem:[#allocation4 + $0x24] sm:$0xf]
        %v1234 = vld [vmem:[#allocation4 + $0x28] sm:$0xf]
        %v1235 = vld [vmem:[#allocation4 + $0x2c] sm:$0xf]
        %v1236 = vld [vmem:[#allocation4 + $0x30] sm:$0xf]
        %v1237 = vld [vmem:[#allocation4 + $0x34] sm:$0xf]
        %v1238 = vld [vmem:[#allocation4 + $0x38] sm:$0xf]
        %v1239 = vld [vmem:[#allocation4 + $0x3c] sm:$0xf]
        %v1256 = vunpack.c.l.b16 %v1224
        %v1257 = vunpack.c.l.b16 %v1225
        %v1258 = vunpack.c.l.b16 %v1226
        %v1259 = vunpack.c.l.b16 %v1227
        %v1260 = vunpack.c.l.b16 %v1228
        %v1261 = vunpack.c.l.b16 %v1229
        %v1262 = vunpack.c.l.b16 %v1230
        %v1263 = vunpack.c.l.b16 %v1231
        %v1264 = vunpack.c.l.b16 %v1232
        %v1265 = vunpack.c.l.b16 %v1233
        %v1266 = vunpack.c.l.b16 %v1234
        %v1267 = vunpack.c.l.b16 %v1235
        %v1268 = vunpack.c.l.b16 %v1236
        %v1269 = vunpack.c.l.b16 %v1237
        %v1270 = vunpack.c.l.b16 %v1238
        %v1271 = vunpack.c.l.b16 %v1239
        %v1272 = vpack.c.b16 %v1257, %v1256
        %v1273 = vpack.c.b16 %v1259, %v1258
        %v1274 = vpack.c.b16 %v1261, %v1260
        %v1275 = vpack.c.b16 %v1263, %v1262
        %v1276 = vpack.c.b16 %v1265, %v1264
        %v1277 = vpack.c.b16 %v1267, %v1266
        %v1278 = vpack.c.b16 %v1269, %v1268
        %v1279 = vpack.c.b16 %v1271, %v1270
        %1288 = vmatprep.subr.bf16.mxu0 0
        %1289 = vmatpush1.bf16.msra.mxu0 %v1272
        %1290 = vmatprep.subr.bf16.mxu0 0
        %1291 = vmatpush1.bf16.msra.mxu0 %v1273
        %1292 = vmatprep.subr.bf16.mxu0 0
        %1293 = vmatpush1.bf16.msra.mxu0 %v1274
        %1294 = vmatprep.subr.bf16.mxu0 0
        %1295 = vmatpush1.bf16.msra.mxu0 %v1275
        %1296 = vmatprep.subr.bf16.mxu0 0
        %1297 = vmatpush1.bf16.msra.mxu0 %v1276
        %1298 = vmatprep.subr.bf16.mxu0 0
        %1299 = vmatpush1.bf16.msra.mxu0 %v1277
        %1300 = vmatprep.subr.bf16.mxu0 0
        %1301 = vmatpush1.bf16.msra.mxu0 %v1278
        %1302 = vmatprep.subr.bf16.mxu0 0
        %1303 = vmatpush1.bf16.msra.mxu0 %v1279
        %1304 = vmatprep.subr.bf16.mxu0 0
        %1305 = vmatpush1.bf16.msra.mxu0 0
        %1306 = vmatprep.subr.bf16.mxu0 0
        %1307 = vmatpush1.bf16.msra.mxu0 0
        %1308 = vmatprep.subr.bf16.mxu0 0
        %1309 = vmatpush1.bf16.msra.mxu0 0
        %1310 = vmatprep.subr.bf16.mxu0 0
        %1311 = vmatpush1.bf16.msra.mxu0 0
        %1312 = vmatprep.subr.bf16.mxu0 0
        %1313 = vmatpush1.bf16.msra.mxu0 0
        %1314 = vmatprep.subr.bf16.mxu0 0
        %1315 = vmatpush1.bf16.msra.mxu0 0
        %1316 = vmatprep.subr.bf16.mxu0 0
        %1317 = vmatpush1.bf16.msra.mxu0 0
        %1318 = vmatprep.subr.bf16.mxu0 0
        %1319 = vmatpush1.bf16.msra.mxu0 0
        %1320 = vmatprep.mubr.bf16.mxu0 0
        %1321 = vmatmul.mubr.bf16.gmra.mrb[0].mxu0 %v1222
        %v1322 = vpop.f32.mrb[0].mxu0
        %v1323 = vadd.f32 0.0, %v1322
        %v1324 = vpop.f32.mrb[0].mxu0
        %v1325 = vpop.f32.mrb[0].mxu0
        %v1326 = vadd.f32 0.0, %v1325
        %v1327 = vpop.f32.mrb[0].mxu0
        %1328 = vdwg.mxu0
        %v1330 = vlaneseq
        %v1331 = vshrl.u32 %v1330, 7
        %v1332 = vsub.s32 0, %v1331
        %v1333 = vrot.slane %v1223, %v1332
        %v1335 = vadd.f32 %v1333, %v1323
        %v1336 = vadd.f32 %v1333, %v1326
        %s1337 = scalar_lea.vmem [#allocation4], 64
        %v1338 = vld [vmem:[%s1337] sm:$0xf]
        %v1339 = vld [vmem:[%s1337 + $0x4] sm:$0xf]
        %v1340 = vld [vmem:[%s1337 + $0x8] sm:$0xf]
        %v1341 = vld [vmem:[%s1337 + $0xc] sm:$0xf]
        %v1342 = vld [vmem:[%s1337 + $0x10] sm:$0xf]
        %v1343 = vld [vmem:[%s1337 + $0x14] sm:$0xf]
        %v1344 = vld [vmem:[%s1337 + $0x18] sm:$0xf]
        %v1345 = vld [vmem:[%s1337 + $0x1c] sm:$0xf]
        %v1346 = vld [vmem:[%s1337 + $0x20] sm:$0xf]
        %v1347 = vld [vmem:[%s1337 + $0x24] sm:$0xf]
        %v1348 = vld [vmem:[%s1337 + $0x28] sm:$0xf]
        %v1349 = vld [vmem:[%s1337 + $0x2c] sm:$0xf]
        %v1350 = vld [vmem:[%s1337 + $0x30] sm:$0xf]
        %v1351 = vld [vmem:[%s1337 + $0x34] sm:$0xf]
        %v1352 = vld [vmem:[%s1337 + $0x38] sm:$0xf]
        %v1353 = vld [vmem:[%s1337 + $0x3c] sm:$0xf]
        %v1355 = vshrl.u32 %v1222, 16
        %v1357 = vshll.u32 %v1222, 16
        %v1359 = vrot.slane %v1357, 1
        %v1360 = vor.u32 %v1355, %v1359
        %v1378 = vunpack.c.l.b16 %v1338
        %v1379 = vunpack.c.l.b16 %v1339
        %v1380 = vunpack.c.l.b16 %v1340
        %v1381 = vunpack.c.l.b16 %v1341
        %v1382 = vunpack.c.l.b16 %v1342
        %v1383 = vunpack.c.l.b16 %v1343
        %v1384 = vunpack.c.l.b16 %v1344
        %v1385 = vunpack.c.l.b16 %v1345
        %v1386 = vunpack.c.l.b16 %v1346
        %v1387 = vunpack.c.l.b16 %v1347
        %v1388 = vunpack.c.l.b16 %v1348
        %v1389 = vunpack.c.l.b16 %v1349
        %v1390 = vunpack.c.l.b16 %v1350
        %v1391 = vunpack.c.l.b16 %v1351
        %v1392 = vunpack.c.l.b16 %v1352
        %v1393 = vunpack.c.l.b16 %v1353
        %v1394 = vpack.c.b16 %v1379, %v1378
        %v1395 = vpack.c.b16 %v1381, %v1380
        %v1396 = vpack.c.b16 %v1383, %v1382
        %v1397 = vpack.c.b16 %v1385, %v1384
        %v1398 = vpack.c.b16 %v1387, %v1386
        %v1399 = vpack.c.b16 %v1389, %v1388
        %v1400 = vpack.c.b16 %v1391, %v1390
        %v1401 = vpack.c.b16 %v1393, %v1392
        %1410 = vmatprep.subr.bf16.mxu0 0
        %1411 = vmatpush1.bf16.msra.mxu0 %v1394
        %1412 = vmatprep.subr.bf16.mxu0 0
        %1413 = vmatpush1.bf16.msra.mxu0 %v1395
        %1414 = vmatprep.subr.bf16.mxu0 0
        %1415 = vmatpush1.bf16.msra.mxu0 %v1396
        %1416 = vmatprep.subr.bf16.mxu0 0
        %1417 = vmatpush1.bf16.msra.mxu0 %v1397
        %1418 = vmatprep.subr.bf16.mxu0 0
        %1419 = vmatpush1.bf16.msra.mxu0 %v1398
        %1420 = vmatprep.subr.bf16.mxu0 0
        %1421 = vmatpush1.bf16.msra.mxu0 %v1399
        %1422 = vmatprep.subr.bf16.mxu0 0
        %1423 = vmatpush1.bf16.msra.mxu0 %v1400
        %1424 = vmatprep.subr.bf16.mxu0 0
        %1425 = vmatpush1.bf16.msra.mxu0 %v1401
        %1426 = vmatprep.subr.bf16.mxu0 0
        %1427 = vmatpush1.bf16.msra.mxu0 0
        %1428 = vmatprep.subr.bf16.mxu0 0
        %1429 = vmatpush1.bf16.msra.mxu0 0
        %1430 = vmatprep.subr.bf16.mxu0 0
        %1431 = vmatpush1.bf16.msra.mxu0 0
        %1432 = vmatprep.subr.bf16.mxu0 0
        %1433 = vmatpush1.bf16.msra.mxu0 0
        %1434 = vmatprep.subr.bf16.mxu0 0
        %1435 = vmatpush1.bf16.msra.mxu0 0
        %1436 = vmatprep.subr.bf16.mxu0 0
        %1437 = vmatpush1.bf16.msra.mxu0 0
        %1438 = vmatprep.subr.bf16.mxu0 0
        %1439 = vmatpush1.bf16.msra.mxu0 0
        %1440 = vmatprep.subr.bf16.mxu0 0
        %1441 = vmatpush1.bf16.msra.mxu0 0
        %1442 = vmatprep.mubr.bf16.mxu0 0
        %1443 = vmatmul.mubr.bf16.gmra.mrb[0].mxu0 %v1360
        %v1444 = vpop.f32.mrb[0].mxu0
        %v1445 = vadd.f32 0.0, %v1444
        %v1446 = vpop.f32.mrb[0].mxu0
        %v1447 = vpop.f32.mrb[0].mxu0
        %v1448 = vadd.f32 0.0, %v1447
        %v1449 = vpop.f32.mrb[0].mxu0
        %1450 = vdwg.mxu0
        %v1451 = vadd.f32 %v1335, %v1445
        %v1452 = vadd.f32 %v1336, %v1448
        %s1453 = scalar_lea.vmem [#allocation4], 128
        %v1454 = vld [vmem:[%s1453] sm:$0xf]
        %v1455 = vld [vmem:[%s1453 + $0x4] sm:$0xf]
        %v1456 = vld [vmem:[%s1453 + $0x8] sm:$0xf]
        %v1457 = vld [vmem:[%s1453 + $0xc] sm:$0xf]
        %v1458 = vld [vmem:[%s1453 + $0x10] sm:$0xf]
        %v1459 = vld [vmem:[%s1453 + $0x14] sm:$0xf]
        %v1460 = vld [vmem:[%s1453 + $0x18] sm:$0xf]
        %v1461 = vld [vmem:[%s1453 + $0x1c] sm:$0xf]
        %v1462 = vld [vmem:[%s1453 + $0x20] sm:$0xf]
        %v1463 = vld [vmem:[%s1453 + $0x24] sm:$0xf]
        %v1464 = vld [vmem:[%s1453 + $0x28] sm:$0xf]
        %v1465 = vld [vmem:[%s1453 + $0x2c] sm:$0xf]
        %v1466 = vld [vmem:[%s1453 + $0x30] sm:$0xf]
        %v1467 = vld [vmem:[%s1453 + $0x34] sm:$0xf]
        %v1468 = vld [vmem:[%s1453 + $0x38] sm:$0xf]
        %v1469 = vld [vmem:[%s1453 + $0x3c] sm:$0xf]
        %v1471 = vrot.slane %v1222, 1
        %v1489 = vunpack.c.l.b16 %v1454
        %v1490 = vunpack.c.l.b16 %v1455
        %v1491 = vunpack.c.l.b16 %v1456
        %v1492 = vunpack.c.l.b16 %v1457
        %v1493 = vunpack.c.l.b16 %v1458
        %v1494 = vunpack.c.l.b16 %v1459
        %v1495 = vunpack.c.l.b16 %v1460
        %v1496 = vunpack.c.l.b16 %v1461
        %v1497 = vunpack.c.l.b16 %v1462
        %v1498 = vunpack.c.l.b16 %v1463
        %v1499 = vunpack.c.l.b16 %v1464
        %v1500 = vunpack.c.l.b16 %v1465
        %v1501 = vunpack.c.l.b16 %v1466
        %v1502 = vunpack.c.l.b16 %v1467
        %v1503 = vunpack.c.l.b16 %v1468
        %v1504 = vunpack.c.l.b16 %v1469
        %v1505 = vpack.c.b16 %v1490, %v1489
        %v1506 = vpack.c.b16 %v1492, %v1491
        %v1507 = vpack.c.b16 %v1494, %v1493
        %v1508 = vpack.c.b16 %v1496, %v1495
        %v1509 = vpack.c.b16 %v1498, %v1497
        %v1510 = vpack.c.b16 %v1500, %v1499
        %v1511 = vpack.c.b16 %v1502, %v1501
        %v1512 = vpack.c.b16 %v1504, %v1503
        %1521 = vmatprep.subr.bf16.mxu0 0
        %1522 = vmatpush1.bf16.msra.mxu0 %v1505
        %1523 = vmatprep.subr.bf16.mxu0 0
        %1524 = vmatpush1.bf16.msra.mxu0 %v1506
        %1525 = vmatprep.subr.bf16.mxu0 0
        %1526 = vmatpush1.bf16.msra.mxu0 %v1507
        %1527 = vmatprep.subr.bf16.mxu0 0
        %1528 = vmatpush1.bf16.msra.mxu0 %v1508
        %1529 = vmatprep.subr.bf16.mxu0 0
        %1530 = vmatpush1.bf16.msra.mxu0 %v1509
        %1531 = vmatprep.subr.bf16.mxu0 0
        %1532 = vmatpush1.bf16.msra.mxu0 %v1510
        %1533 = vmatprep.subr.bf16.mxu0 0
        %1534 = vmatpush1.bf16.msra.mxu0 %v1511
        %1535 = vmatprep.subr.bf16.mxu0 0
        %1536 = vmatpush1.bf16.msra.mxu0 %v1512
        %1537 = vmatprep.subr.bf16.mxu0 0
        %1538 = vmatpush1.bf16.msra.mxu0 0
        %1539 = vmatprep.subr.bf16.mxu0 0
        %1540 = vmatpush1.bf16.msra.mxu0 0
        %1541 = vmatprep.subr.bf16.mxu0 0
        %1542 = vmatpush1.bf16.msra.mxu0 0
        %1543 = vmatprep.subr.bf16.mxu0 0
        %1544 = vmatpush1.bf16.msra.mxu0 0
        %1545 = vmatprep.subr.bf16.mxu0 0
        %1546 = vmatpush1.bf16.msra.mxu0 0
        %1547 = vmatprep.subr.bf16.mxu0 0
        %1548 = vmatpush1.bf16.msra.mxu0 0
        %1549 = vmatprep.subr.bf16.mxu0 0
        %1550 = vmatpush1.bf16.msra.mxu0 0
        %1551 = vmatprep.subr.bf16.mxu0 0
        %1552 = vmatpush1.bf16.msra.mxu0 0
        %1553 = vmatprep.mubr.bf16.mxu0 0
        %1554 = vmatmul.mubr.bf16.gmra.mrb[0].mxu0 %v1471
        %v1555 = vpop.f32.mrb[0].mxu0
        %v1556 = vadd.f32 0.0, %v1555
        %v1557 = vpop.f32.mrb[0].mxu0
        %v1558 = vpop.f32.mrb[0].mxu0
        %v1559 = vadd.f32 0.0, %v1558
        %v1560 = vpop.f32.mrb[0].mxu0
        %1561 = vdwg.mxu0
        %v1562 = vadd.f32 %v1451, %v1556
        %v1563 = vadd.f32 %v1452, %v1559
        %v1564 = vsel %vm1078, %v1562, -inf
        %v1565 = vrot.slane %v1564, 4
        %v1566 = vmax.f32 %v1564, %v1565
        %v1567 = vrot.slane %v1566, 2
        %v1568 = vmax.f32 %v1566, %v1567
        %v1569 = vrot.slane %v1568, 1
        %v1570 = vmax.f32 %v1568, %v1569
        %v1571 = vsel %vm1086, %v1562, -inf
        %v1572 = vrot.slane %v1571, 4
        %v1573 = vmax.f32 %v1571, %v1572
        %v1574 = vrot.slane %v1573, 2
        %v1575 = vmax.f32 %v1573, %v1574
        %v1576 = vrot.slane %v1575, 1
        %v1577 = vmax.f32 %v1575, %v1576
        %v1578 = vsel %vm1094, %v1562, -inf
        %v1579 = vsel %vm1096, %v1563, -inf
        %v1580 = vmax.f32 %v1578, %v1579
        %v1581 = vrot.slane %v1580, 4
        %v1582 = vmax.f32 %v1580, %v1581
        %v1583 = vrot.slane %v1582, 2
        %v1584 = vmax.f32 %v1582, %v1583
        %v1585 = vrot.slane %v1584, 1
        %v1586 = vmax.f32 %v1584, %v1585
        %v1587 = vsel %vm1105, %v1563, -inf
        %v1588 = vrot.slane %v1587, 4
        %v1589 = vmax.f32 %v1587, %v1588
        %v1590 = vrot.slane %v1589, 2
        %v1591 = vmax.f32 %v1589, %v1590
        %v1592 = vrot.slane %v1591, 1
        %v1593 = vmax.f32 %v1591, %v1592
        %v1594 = vsel %vm1096, %v1570, %v1577
        %v1595 = vsel %vm1123, %v1594, %v1586
        %v1596 = vsel %vm1078, %v1595, %v1593
        %v1597 = vld [vmem:[%s8] sm:$0x1]
        %v1599 = vlaneseq
        %v1600 = vshrl.u32 %v1599, 7
        %v1601 = vsub.s32 0, %v1600
        %v1602 = vrot.slane %v1597, %v1601
        %v1604 = vmul.f32 %v1596, %v1602
        %v1605 = vld [vmem:[%s9] sm:$0x1]
        %v1607 = vlaneseq
        %v1608 = vshrl.u32 %v1607, 7
        %v1609 = vsub.s32 0, %v1608
        %v1610 = vrot.slane %v1605, %v1609
        %v1612 = vadd.f32 %v1604, %v1610
        %v1613 = vpack.c.bf16 %v1612, %v1612
        %v1614 = vld [vmem:[#allocation6] sm:$0xff]
        %v1615 = vld [vmem:[#allocation6 + $0x8] sm:$0xff]
        %v1616 = vld [vmem:[#allocation6 + $0x10] sm:$0xff]
        %v1617 = vld [vmem:[#allocation6 + $0x18] sm:$0xff]
        %v1618 = vld [vmem:[#allocation6 + $0x20] sm:$0xff]
        %v1619 = vld [vmem:[#allocation6 + $0x28] sm:$0xff]
        %v1620 = vld [vmem:[#allocation6 + $0x30] sm:$0xff]
        %v1621 = vld [vmem:[#allocation6 + $0x38] sm:$0xff]
        %v1622 = vld [vmem:[#allocation6 + $0x40] sm:$0xff]
        %v1623 = vld [vmem:[#allocation6 + $0x48] sm:$0xff]
        %v1624 = vld [vmem:[#allocation6 + $0x50] sm:$0xff]
        %v1625 = vld [vmem:[#allocation6 + $0x58] sm:$0xff]
        %v1626 = vld [vmem:[#allocation6 + $0x60] sm:$0xff]
        %v1627 = vld [vmem:[#allocation6 + $0x68] sm:$0xff]
        %v1628 = vld [vmem:[#allocation6 + $0x70] sm:$0xff]
        %v1629 = vld [vmem:[#allocation6 + $0x78] sm:$0xff]
        %v1630 = vld [vmem:[#allocation6 + $0x80] sm:$0xff]
        %v1631 = vld [vmem:[#allocation6 + $0x88] sm:$0xff]
        %v1632 = vld [vmem:[#allocation6 + $0x90] sm:$0xff]
        %v1633 = vld [vmem:[#allocation6 + $0x98] sm:$0xff]
        %v1634 = vld [vmem:[#allocation6 + $0xa0] sm:$0xff]
        %v1635 = vld [vmem:[#allocation6 + $0xa8] sm:$0xff]
        %v1636 = vld [vmem:[#allocation6 + $0xb0] sm:$0xff]
        %v1637 = vld [vmem:[#allocation6 + $0xb8] sm:$0xff]
        %v1638 = vld [vmem:[#allocation6 + $0xc0] sm:$0xff]
        %v1639 = vld [vmem:[#allocation6 + $0xc8] sm:$0xff]
        %v1640 = vld [vmem:[#allocation6 + $0xd0] sm:$0xff]
        %v1641 = vld [vmem:[#allocation6 + $0xd8] sm:$0xff]
        %v1642 = vld [vmem:[#allocation6 + $0xe0] sm:$0xff]
        %v1643 = vld [vmem:[#allocation6 + $0xe8] sm:$0xff]
        %v1644 = vld [vmem:[#allocation6 + $0xf0] sm:$0xff]
        %v1645 = vld [vmem:[#allocation6 + $0xf8] sm:$0xff]
        %v1646 = vld [vmem:[%s11] sm:$0xf]
        %v1648 = vlaneseq
        %v1649 = vshrl.u32 %v1648, 7
        %v1650 = vsub.s32 0, %v1649
        %v1651 = vrot.slane %v1646, %v1650
        %v1652 = vlaneseq
        %v1653 = vshrl.u32 %v1652, 7
        %v1654 = vsub.s32 1, %v1653
        %v1655 = vrot.slane %v1646, %v1654
        %v1656 = vlaneseq
        %v1657 = vshrl.u32 %v1656, 7
        %v1658 = vsub.s32 2, %v1657
        %v1659 = vrot.slane %v1646, %v1658
        %v1660 = vlaneseq
        %v1661 = vshrl.u32 %v1660, 7
        %v1662 = vsub.s32 3, %v1661
        %v1663 = vrot.slane %v1646, %v1662
        %v1700 = vunpack.c.l.b16 %v1614
        %v1701 = vunpack.c.h.b16 %v1614
        %v1702 = vunpack.c.l.b16 %v1615
        %v1703 = vunpack.c.h.b16 %v1615
        %v1704 = vunpack.c.l.b16 %v1616
        %v1705 = vunpack.c.h.b16 %v1616
        %v1706 = vunpack.c.l.b16 %v1617
        %v1707 = vunpack.c.h.b16 %v1617
        %v1708 = vunpack.c.l.b16 %v1618
        %v1709 = vunpack.c.h.b16 %v1618
        %v1710 = vunpack.c.l.b16 %v1619
        %v1711 = vunpack.c.h.b16 %v1619
        %v1712 = vunpack.c.l.b16 %v1620
        %v1713 = vunpack.c.h.b16 %v1620
        %v1714 = vunpack.c.l.b16 %v1621
        %v1715 = vunpack.c.h.b16 %v1621
        %v1716 = vunpack.c.l.b16 %v1622
        %v1717 = vunpack.c.h.b16 %v1622
        %v1718 = vunpack.c.l.b16 %v1623
        %v1719 = vunpack.c.h.b16 %v1623
        %v1720 = vunpack.c.l.b16 %v1624
        %v1721 = vunpack.c.h.b16 %v1624
        %v1722 = vunpack.c.l.b16 %v1625
        %v1723 = vunpack.c.h.b16 %v1625
        %v1724 = vunpack.c.l.b16 %v1626
        %v1725 = vunpack.c.h.b16 %v1626
        %v1726 = vunpack.c.l.b16 %v1627
        %v1727 = vunpack.c.h.b16 %v1627
        %v1728 = vunpack.c.l.b16 %v1628
        %v1729 = vunpack.c.h.b16 %v1628
        %v1730 = vunpack.c.l.b16 %v1629
        %v1731 = vunpack.c.h.b16 %v1629
        %v1732 = vunpack.c.l.b16 %v1630
        %v1733 = vunpack.c.h.b16 %v1630
        %v1734 = vunpack.c.l.b16 %v1631
        %v1735 = vunpack.c.h.b16 %v1631
        %v1736 = vunpack.c.l.b16 %v1632
        %v1737 = vunpack.c.h.b16 %v1632
        %v1738 = vunpack.c.l.b16 %v1633
        %v1739 = vunpack.c.h.b16 %v1633
        %v1740 = vunpack.c.l.b16 %v1634
        %v1741 = vunpack.c.h.b16 %v1634
        %v1742 = vunpack.c.l.b16 %v1635
        %v1743 = vunpack.c.h.b16 %v1635
        %v1744 = vunpack.c.l.b16 %v1636
        %v1745 = vunpack.c.h.b16 %v1636
        %v1746 = vunpack.c.l.b16 %v1637
        %v1747 = vunpack.c.h.b16 %v1637
        %v1748 = vunpack.c.l.b16 %v1638
        %v1749 = vunpack.c.h.b16 %v1638
        %v1750 = vunpack.c.l.b16 %v1639
        %v1751 = vunpack.c.h.b16 %v1639
        %v1752 = vunpack.c.l.b16 %v1640
        %v1753 = vunpack.c.h.b16 %v1640
        %v1754 = vunpack.c.l.b16 %v1641
        %v1755 = vunpack.c.h.b16 %v1641
        %v1756 = vunpack.c.l.b16 %v1642
        %v1757 = vunpack.c.h.b16 %v1642
        %v1758 = vunpack.c.l.b16 %v1643
        %v1759 = vunpack.c.h.b16 %v1643
        %v1760 = vunpack.c.l.b16 %v1644
        %v1761 = vunpack.c.h.b16 %v1644
        %v1762 = vunpack.c.l.b16 %v1645
        %v1763 = vunpack.c.h.b16 %v1645
        %v1764 = vpack.c.b16 %v1704, %v1700
        %v1765 = vpack.c.b16 %v1705, %v1701
        %v1766 = vpack.c.b16 %v1706, %v1702
        %v1767 = vpack.c.b16 %v1707, %v1703
        %v1768 = vpack.c.b16 %v1712, %v1708
        %v1769 = vpack.c.b16 %v1713, %v1709
        %v1770 = vpack.c.b16 %v1714, %v1710
        %v1771 = vpack.c.b16 %v1715, %v1711
        %v1772 = vpack.c.b16 %v1720, %v1716
        %v1773 = vpack.c.b16 %v1721, %v1717
        %v1774 = vpack.c.b16 %v1722, %v1718
        %v1775 = vpack.c.b16 %v1723, %v1719
        %v1776 = vpack.c.b16 %v1728, %v1724
        %v1777 = vpack.c.b16 %v1729, %v1725
        %v1778 = vpack.c.b16 %v1730, %v1726
        %v1779 = vpack.c.b16 %v1731, %v1727
        %v1780 = vpack.c.b16 %v1736, %v1732
        %v1781 = vpack.c.b16 %v1737, %v1733
        %v1782 = vpack.c.b16 %v1738, %v1734
        %v1783 = vpack.c.b16 %v1739, %v1735
        %v1784 = vpack.c.b16 %v1744, %v1740
        %v1785 = vpack.c.b16 %v1745, %v1741
        %v1786 = vpack.c.b16 %v1746, %v1742
        %v1787 = vpack.c.b16 %v1747, %v1743
        %v1788 = vpack.c.b16 %v1752, %v1748
        %v1789 = vpack.c.b16 %v1753, %v1749
        %v1790 = vpack.c.b16 %v1754, %v1750
        %v1791 = vpack.c.b16 %v1755, %v1751
        %v1792 = vpack.c.b16 %v1760, %v1756
        %v1793 = vpack.c.b16 %v1761, %v1757
        %v1794 = vpack.c.b16 %v1762, %v1758
        %v1795 = vpack.c.b16 %v1763, %v1759
        %1828 = vmatprep.subr.bf16.mxu0 %v1765
        %1829 = vmatpush1.bf16.msra.mxu0 %v1764
        %1830 = vmatprep.subr.bf16.mxu0 %v1769
        %1831 = vmatpush1.bf16.msra.mxu0 %v1768
        %1832 = vmatprep.subr.bf16.mxu0 %v1773
        %1833 = vmatpush1.bf16.msra.mxu0 %v1772
        %1834 = vmatprep.subr.bf16.mxu0 %v1777
        %1835 = vmatpush1.bf16.msra.mxu0 %v1776
        %1836 = vmatprep.subr.bf16.mxu0 %v1781
        %1837 = vmatpush1.bf16.msra.mxu0 %v1780
        %1838 = vmatprep.subr.bf16.mxu0 %v1785
        %1839 = vmatpush1.bf16.msra.mxu0 %v1784
        %1840 = vmatprep.subr.bf16.mxu0 %v1789
        %1841 = vmatpush1.bf16.msra.mxu0 %v1788
        %1842 = vmatprep.subr.bf16.mxu0 %v1793
        %1843 = vmatpush1.bf16.msra.mxu0 %v1792
        %1844 = vmatprep.subr.bf16.mxu0 0
        %1845 = vmatpush1.bf16.msra.mxu0 0
        %1846 = vmatprep.subr.bf16.mxu0 0
        %1847 = vmatpush1.bf16.msra.mxu0 0
        %1848 = vmatprep.subr.bf16.mxu0 0
        %1849 = vmatpush1.bf16.msra.mxu0 0
        %1850 = vmatprep.subr.bf16.mxu0 0
        %1851 = vmatpush1.bf16.msra.mxu0 0
        %1852 = vmatprep.subr.bf16.mxu0 0
        %1853 = vmatpush1.bf16.msra.mxu0 0
        %1854 = vmatprep.subr.bf16.mxu0 0
        %1855 = vmatpush1.bf16.msra.mxu0 0
        %1856 = vmatprep.subr.bf16.mxu0 0
        %1857 = vmatpush1.bf16.msra.mxu0 0
        %1858 = vmatprep.subr.bf16.mxu0 0
        %1859 = vmatpush1.bf16.msra.mxu0 0
        %1860 = vmatprep.mubr.bf16.mxu0 0
        %1861 = vmatmul.mubr.bf16.gmra.mrb[0].mxu0 %v1613
        %v1862 = vpop.f32.mrb[0].mxu0
        %v1863 = vadd.f32 %v1651, %v1862
        %v1864 = vpop.f32.mrb[0].mxu0
        %v1865 = vadd.f32 %v1655, %v1864
        %v1866 = vpop.f32.mrb[0].mxu0
        %v1867 = vpop.f32.mrb[0].mxu0
        %1868 = vdwg.mxu0
        %1869 = vmatprep.subr.bf16.mxu0 %v1767
        %1870 = vmatpush1.bf16.msra.mxu0 %v1766
        %1871 = vmatprep.subr.bf16.mxu0 %v1771
        %1872 = vmatpush1.bf16.msra.mxu0 %v1770
        %1873 = vmatprep.subr.bf16.mxu0 %v1775
        %1874 = vmatpush1.bf16.msra.mxu0 %v1774
        %1875 = vmatprep.subr.bf16.mxu0 %v1779
        %1876 = vmatpush1.bf16.msra.mxu0 %v1778
        %1877 = vmatprep.subr.bf16.mxu0 %v1783
        %1878 = vmatpush1.bf16.msra.mxu0 %v1782
        %1879 = vmatprep.subr.bf16.mxu0 %v1787
        %1880 = vmatpush1.bf16.msra.mxu0 %v1786
        %1881 = vmatprep.subr.bf16.mxu0 %v1791
        %1882 = vmatpush1.bf16.msra.mxu0 %v1790
        %1883 = vmatprep.subr.bf16.mxu0 %v1795
        %1884 = vmatpush1.bf16.msra.mxu0 %v1794
        %1885 = vmatprep.subr.bf16.mxu0 0
        %1886 = vmatpush1.bf16.msra.mxu0 0
        %1887 = vmatprep.subr.bf16.mxu0 0
        %1888 = vmatpush1.bf16.msra.mxu0 0
        %1889 = vmatprep.subr.bf16.mxu0 0
        %1890 = vmatpush1.bf16.msra.mxu0 0
        %1891 = vmatprep.subr.bf16.mxu0 0
        %1892 = vmatpush1.bf16.msra.mxu0 0
        %1893 = vmatprep.subr.bf16.mxu0 0
        %1894 = vmatpush1.bf16.msra.mxu0 0
        %1895 = vmatprep.subr.bf16.mxu0 0
        %1896 = vmatpush1.bf16.msra.mxu0 0
        %1897 = vmatprep.subr.bf16.mxu0 0
        %1898 = vmatpush1.bf16.msra.mxu0 0
        %1899 = vmatprep.subr.bf16.mxu0 0
        %1900 = vmatpush1.bf16.msra.mxu0 0
        %1901 = vmatprep.mubr.bf16.mxu0 0
        %1902 = vmatmul.mubr.bf16.gmra.mrb[0].mxu0 %v1613
        %v1903 = vpop.f32.mrb[0].mxu0
        %v1904 = vadd.f32 %v1659, %v1903
        %v1905 = vpop.f32.mrb[0].mxu0
        %v1906 = vadd.f32 %v1663, %v1905
        %v1907 = vpop.f32.mrb[0].mxu0
        %v1908 = vpop.f32.mrb[0].mxu0
        %1909 = vdwg.mxu0
        %v1914 = vcombine.low %v1863, %v1865
        %v1915 = vcombine.low %v1904, %v1906
        %1918 = vst [vmem:[%s457] sm:$0xff] %v1914
        %1919 = vst [vmem:[%s457 + $0x8] sm:$0xff] %v1915
        %p1920 = scmp.lt.s32.totalorder %s25, 1
        %s1921 = scalar_select %p1920, %s25, 1
        %s1922 = smul.addr %s1921, 4
        %s1923 = smul.addr %s1922, 4
        %s1924 = scalar_lea.vmem %s12, %s1923
        // Predicated region
        $region81: #{forward.2} parent=67 // pred_check
          %p1925 = pneg %p300
        $region82: #{forward.2} parent=67 // pred_check_branch
          %1927 = sbr.rel (%p1925) target = $region84
        $region83: #{forward.2} parent=67 // pred_region
          _
        $region84: #{forward.2} parent=67 // pred_fallthru
          _
      $region68: #{forward.2} parent=5 // pred_fallthru
        _
      %p1928 = scmp.le.s32.totalorder 2, %s20
      // Predicated region
      $region85: #{forward.2} parent=5 // pred_check
        %p1929 = pneg %p1928
      $region86: #{forward.2} parent=5 // pred_check_branch
        %1931 = sbr.rel (%p1929) target = $region88
      $region87: #{forward.2} parent=5 // pred_region
        %s1932 = ssub.s32 %s20, 2
        // Predicated region
        $region89: #{forward.2} parent=87 // pred_check
          %p1933 = pneg %p306
        $region90: #{forward.2} parent=87 // pred_check_branch
          %1935 = sbr.rel (%p1933) target = $region92
        $region91: #{forward.2} parent=87 // pred_region
          %p1936 = scmp.lt.s32.totalorder %s26, 1
          %s1937 = scalar_select %p1936, %s26, 1
          %s1938 = smul.addr %s1937, 4
          %s1939 = smul.addr %s1938, 4
          %s1940 = scalar_lea.vmem %s12, %s1939
        $region92: #{forward.2} parent=87 // pred_fallthru
          _
      $region88: #{forward.2} parent=5 // pred_fallthru
        _
    $region6: #{forward.2} parent=1 // loop_footer
      %s24 = sadd.s32 1, %s20
    $region7: #{forward.2} parent=1 // loop_footer_branch
      %19 = sbr.rel target = $region3
    $region8: #{forward.2} parent=1 // loop_exit
      _
    %1941 = vsyncpa [#allocation3], 1
    %s1942 = scalar_lea.sflag [#allocation3], 1
    %1943 = vsyncpa %s1942, 1
    %1944 = vsyncpa [#allocation5], 1

</llo_original>
